<compile_context>
chip_gen: v7x
topology: tpu7x:2x2x1
jax: 0.10.0
libtpu: 0.0.40
codegen_flags: <defaults>
</compile_context>

<pallas_src>
from functools import partial

import numpy as np
import jax
import jax.numpy as jnp
from jax import lax
from jax.experimental import pallas as pl
from jax.experimental.pallas import tpu as pltpu


def _round_up(x, m):
    return ((x + m - 1) // m) * m


# ----------------------------------------------------------------------------
# Whole-tree Pallas kernel: ONE grid step, in-kernel loop over nodes.
# ----------------------------------------------------------------------------
def _tree_lstm_kernel(is_leaf_ref, xsrc_ref, prev_ref,            # SMEM scalar prefetch
                      xrows_ref, wcat_ref, bias_ref,              # VMEM inputs (resident)
                      root_h_ref, root_c_ref,
                      h_out_ref, c_out_ref,                       # VMEM outputs (resident)
                      *, ip, hp, shared_x):
    num_nodes = h_out_ref.shape[0]

    def body(n, carry):
        leaf = is_leaf_ref[n] == 1       # 1 -> leaf, 0 -> internal
        xsrc = xsrc_ref[n]               # word id (leaf) or last-child node index (internal)
        prev = prev_ref[n]               # node index, -1 -> zero state, -2 -> caller's (h, c)

        # --- previous (h, c): earlier node row, caller's root state, or zeros ----
        use_node = prev >= 0
        use_root = prev == -2
        pidx = jnp.clip(prev, 0, num_nodes - 1)
        ph = h_out_ref[pl.ds(pidx, 1), :]                       # (1, Hp)
        pc = c_out_ref[pl.ds(pidx, 1), :]
        prev_h = jnp.where(use_node, ph, jnp.where(use_root, root_h_ref[...], 0.0))
        prev_c = jnp.where(use_node, pc, jnp.where(use_root, root_c_ref[...], 0.0))

        # --- x contribution: pre-gathered leaf embedding OR last child's hidden --
        cidx = jnp.clip(xsrc, 0, num_nodes - 1)
        child_h = h_out_ref[pl.ds(cidx, 1), :]                  # (1, Hp)
        x_leaf = xrows_ref[pl.ds(n, 1), :]                      # (1, Ip), 0 for internal

        ph_b = prev_h.astype(wcat_ref.dtype)
        if shared_x:
            # H == I: leaf and internal-child share the same fused weight block.
            xv = jnp.where(leaf, x_leaf, child_h).astype(wcat_ref.dtype)
            iofu = (jnp.dot(xv, wcat_ref[0:ip, :], preferred_element_type=jnp.float32)
                    + jnp.dot(ph_b, wcat_ref[ip:, :], preferred_element_type=jnp.float32)
                    + bias_ref[0:1, :])
        else:
            xl = jnp.where(leaf, x_leaf, 0.0).astype(wcat_ref.dtype)
            xc = jnp.where(leaf, 0.0, child_h).astype(wcat_ref.dtype)
            iofu = (jnp.dot(xl, wcat_ref[0:ip, :], preferred_element_type=jnp.float32)
                    + jnp.dot(xc, wcat_ref[ip:ip + hp, :], preferred_element_type=jnp.float32)
                    + jnp.dot(ph_b, wcat_ref[ip + hp:, :], preferred_element_type=jnp.float32)
                    + jnp.where(leaf, bias_ref[0:1, :], bias_ref[1:2, :]))

        i = jax.nn.sigmoid(iofu[:, 0 * hp:1 * hp])
        o = jax.nn.sigmoid(iofu[:, 1 * hp:2 * hp])
        f = jax.nn.sigmoid(iofu[:, 2 * hp:3 * hp])
        u = jnp.tanh(iofu[:, 3 * hp:4 * hp])

        cell = i * u + f * prev_c
        hidden = o * jnp.tanh(cell)

        h_out_ref[pl.ds(n, 1), :] = hidden
        c_out_ref[pl.ds(n, 1), :] = cell
        return carry

    lax.fori_loop(0, num_nodes, body, 0, unroll=(num_nodes <= 16))


@partial(jax.jit, static_argnames=("ip", "hp", "shared_x"))
def _tree_lstm_call(is_leaf, xsrc, previdx, x_rows, wcat, bias, root_h, root_c,
                    *, ip, hp, shared_x):
    num_nodes = is_leaf.shape[0]

    def const_map(i, *_prefetch):
        return (0, 0)

    kernel = partial(_tree_lstm_kernel, ip=ip, hp=hp, shared_x=shared_x)

    # Explicit VMEM budget from the actual resident buffers (x2 for the
    # pipeline's input buffering) plus headroom for compiler scratch.
    def nbytes(a):
        return a.size * a.dtype.itemsize
    resident = (nbytes(x_rows) + nbytes(wcat) + nbytes(bias)
                + nbytes(root_h) + nbytes(root_c)
                + 2 * num_nodes * hp * 4)
    vmem_limit = int(min(64 * 1024 * 1024, 2 * resident + (8 << 20)))

    grid_spec = pltpu.PrefetchScalarGridSpec(
        num_scalar_prefetch=3,
        grid=(1,),
        in_specs=[
            pl.BlockSpec(x_rows.shape, const_map),
            pl.BlockSpec(wcat.shape, const_map),
            pl.BlockSpec(bias.shape, const_map),
            pl.BlockSpec(root_h.shape, const_map),
            pl.BlockSpec(root_c.shape, const_map),
        ],
        out_specs=(
            pl.BlockSpec((num_nodes, hp), const_map),
            pl.BlockSpec((num_nodes, hp), const_map),
        ),
    )
    return pl.pallas_call(
        kernel,
        grid_spec=grid_spec,
        out_shape=(jax.ShapeDtypeStruct((num_nodes, hp), jnp.float32),
                   jax.ShapeDtypeStruct((num_nodes, hp), jnp.float32)),
        compiler_params=pltpu.CompilerParams(
            dimension_semantics=("arbitrary",),
            vmem_limit_bytes=vmem_limit),
    )(is_leaf, xsrc, previdx, x_rows, wcat, bias, root_h, root_c)


# ----------------------------------------------------------------------------
# Tree container + model (Python glue mirroring the PyTorch module).
# ----------------------------------------------------------------------------
class Tree:
    def __init__(self, word=None, children=None):
        self.word = word
        self.children = children if children is not None else []
        self.state = None
        self.zero_state = None

    def getType(self):
        return len(self.children) != 0


class TreeNodePallas:
    def __init__(self, input_size, hidden_size, output_size, vocab_size,
                 word_scale=0.05, key=None):
        self.input_size = input_size
        self.hidden_size = hidden_size
        self.output_size = output_size
        self.vocab_size = vocab_size

        key = jax.random.PRNGKey(0) if key is None else key
        ks = jax.random.split(key, 9)

        def lin(kw, kb, fan_in, fan_out):
            bound = 1.0 / (fan_in ** 0.5)
            w = jax.random.uniform(kw, (fan_in, fan_out), jnp.float32, -bound, bound)
            b = jax.random.uniform(kb, (1, fan_out), jnp.float32, -bound, bound)
            return w, b

        # nn.Embedding equivalent (~U(-word_scale, word_scale))
        self.embeds = jax.random.uniform(
            ks[0], (vocab_size, input_size), jnp.float32, -word_scale, word_scale)

        # nn.Linear equivalents, stored transposed: (in, out)
        self.wx, self.bx = lin(ks[1], ks[2], input_size, hidden_size)          # encode_inputx
        self.wh_in, self.bh_in = lin(ks[3], ks[4], hidden_size, hidden_size)   # encode_inputh
        self.wph, self.bph = lin(ks[5], ks[6], hidden_size, hidden_size)       # encode_prevh
        self.wiofu, self.biofu = lin(ks[7], ks[8], hidden_size, 4 * hidden_size)

        self._build_fused()

    # --- one-time fusion + lane-dense padding of parameters (computed in f32) ---
    def _build_fused(self):
        H, I = self.hidden_size, self.input_size
        Hp = _round_up(H, 128)
        Ip = _round_up(I, 128)
        self.Hp, self.Ip = Hp, Ip
        self.shared_x = (H == I)   # forward() uses encode_inputx for children iff H == I

        def pad_gate_cols(m):
            # (..., 4H) -> (..., 4*Hp): zero-pad each gate block to Hp lanes.
            lead = m.shape[:-1]
            m4 = m.reshape(lead + (4, H))
            m4 = jnp.pad(m4, [(0, 0)] * len(lead) + [(0, 0), (0, Hp - H)])
            return m4.reshape(lead + (4 * Hp,))

        w_leaf_f = pad_gate_cols(self.wx @ self.wiofu)                          # (I, 4Hp)
        w_prev_f = pad_gate_cols(self.wph @ self.wiofu)                         # (H, 4Hp)
        b_leaf_f = pad_gate_cols((self.bx + self.bph) @ self.wiofu + self.biofu)  # (1, 4Hp)

        w_leaf_f = jnp.pad(w_leaf_f, ((0, Ip - I), (0, 0)))
        w_prev_f = jnp.pad(w_prev_f, ((0, Hp - H), (0, 0)))

        if self.shared_x:
            # Leaf and internal x-path share encode_inputx -> one block, one bias row.
            self.wcat = jnp.concatenate([w_leaf_f, w_prev_f], axis=0).astype(jnp.bfloat16)
            self.bias2 = b_leaf_f.astype(jnp.float32)                            # (1, 4Hp)
        else:
            w_child_f = pad_gate_cols(self.wh_in @ self.wiofu)
            b_child_f = pad_gate_cols((self.bh_in + self.bph) @ self.wiofu + self.biofu)
            w_child_f = jnp.pad(w_child_f, ((0, Hp - H), (0, 0)))
            self.wcat = jnp.concatenate([w_leaf_f, w_child_f, w_prev_f],
                                        axis=0).astype(jnp.bfloat16)
            self.bias2 = jnp.concatenate([b_leaf_f, b_child_f], axis=0).astype(jnp.float32)

        # Vocab table stays in HBM-side JAX land; only gathered rows enter the kernel.
        self.emb_p = jnp.pad(self.embeds, ((0, 0), (0, Ip - I))).astype(jnp.bfloat16)

    def init_state(self):
        z = jnp.zeros((1, self.hidden_size), jnp.float32)
        return z, z

    # --- forward: linearize tree on host, run ONE whole-tree kernel --------------
    def forward(self, tree, prev_h, prev_c):
        nodes, meta = [], []

        def visit(node, prev_idx):
            assert len(node.children) != 0 or node.word is not None
            assert not (len(node.children) != 0 and node.word is not None)
            if node.getType():
                node.zero_state = self.init_state()
                p = -1                       # first child sees zero state
                last = None
                for ch in node.children:
                    last = visit(ch, p)
                    p = last                 # next sibling chains off this one
                idx = len(nodes)
                nodes.append(node)
                meta.append((0, last, prev_idx))
            else:
                idx = len(nodes)
                nodes.append(node)
                meta.append((1, int(node.word), prev_idx))
            return idx

        root_idx = visit(tree, -2)           # root consumes the caller's (prev_h, prev_c)

        # Bucket the node count (multiple of 8) -> fewer recompiles, aligned sublanes.
        n_real = len(nodes)
        n_pad = max(8, _round_up(n_real, 8))
        meta = meta + [(1, 0, -1)] * (n_pad - n_real)       # harmless dummy leaves
        meta_np = np.asarray(meta, dtype=np.int32)
        is_leaf = jnp.asarray(meta_np[:, 0])
        xsrc = jnp.asarray(meta_np[:, 1])
        previdx = jnp.asarray(meta_np[:, 2])

        # XLA-side gather of leaf embedding rows (keeps the vocab table out of VMEM).
        word_ids = jnp.where(is_leaf == 1,
                             jnp.clip(xsrc, 0, self.vocab_size - 1), 0)
        x_rows = jnp.where((is_leaf == 1)[:, None],
                           self.emb_p[word_ids], 0).astype(jnp.bfloat16)

        H, Hp = self.hidden_size, self.Hp
        rh = jnp.zeros((1, Hp), jnp.float32).at[:, :H].set(prev_h.astype(jnp.float32))
        rc = jnp.zeros((1, Hp), jnp.float32).at[:, :H].set(prev_c.astype(jnp.float32))

        h_all, c_all = _tree_lstm_call(is_leaf, xsrc, previdx,
                                       x_rows, self.wcat, self.bias2, rh, rc,
                                       ip=self.Ip, hp=self.Hp, shared_x=self.shared_x)

        # Single device->host copy, then cheap host slicing per node.
        h_host = np.asarray(h_all)[:n_real, :H]
        c_host = np.asarray(c_all)[:n_real, :H]
        for i, node in enumerate(nodes):
            node.state = (h_host[i:i + 1, :], c_host[i:i + 1, :])
        return nodes[root_idx].state


# ----------------------------------------------------------------------------
# Pure-JAX reference: the original (un-fused, un-padded, f32) recursion.
# ----------------------------------------------------------------------------
def _ref_forward(model, tree, prev_h, prev_c, states):
    H = model.hidden_size
    if tree.getType():
        ph = jnp.zeros((1, H), jnp.float32)
        pc = jnp.zeros((1, H), jnp.float32)
        for ch in tree.children:
            ph, pc = _ref_forward(model, ch, ph, pc, states)
        prev_ch = states[id(tree.children[-1])][0]
        if model.hidden_size == model.input_size:
            hx = prev_ch @ model.wx + model.bx + prev_h @ model.wph + model.bph
        else:
            hx = prev_ch @ model.wh_in + model.bh_in + prev_h @ model.wph + model.bph
    else:
        x = model.embeds[tree.word][None, :]
        hx = x @ model.wx + model.bx + prev_h @ model.wph + model.bph
    iofu = hx @ model.wiofu + model.biofu
    i = jax.nn.sigmoid(iofu[:, :H])
    o = jax.nn.sigmoid(iofu[:, H:2 * H])
    f = jax.nn.sigmoid(iofu[:, 2 * H:3 * H])
    u = jnp.tanh(iofu[:, 3 * H:])
    cell = i * u + f * prev_c
    hidden = o * jnp.tanh(cell)
    states[id(tree)] = (hidden, cell)
    return hidden, cell


def _walk(t):
    yield t
    for ch in t.children:
        yield from _walk(ch)


if __name__ == "__main__":
    INPUT, HIDDEN, OUTPUT, VOCAB = 32, 32, 8, 50

    model = TreeNodePallas(INPUT, HIDDEN, OUTPUT, VOCAB, key=jax.random.PRNGKey(0))

    # small example tree:  root(  node(w3, w7),  w12 )   -> 5 nodes
    tree = Tree(children=[
        Tree(children=[Tree(word=3), Tree(word=7)]),
        Tree(word=12),
    ])

    h0, c0 = model.init_state()
    hidden, cell = model.forward(tree, h0, c0)
    hidden = jax.block_until_ready(jnp.asarray(hidden))
    cell = jax.block_until_ready(jnp.asarray(cell))
    assert hidden.shape == (1, HIDDEN) and cell.shape == (1, HIDDEN)

    # cross-check every node's state against the pure-JAX (un-fused, f32) reference
    # (bf16 fused weights -> slightly looser tolerance than the previous f32 version)
    ref_states = {}
    rh, rc = _ref_forward(model, tree, h0, c0, ref_states)
    assert jnp.allclose(hidden, rh, atol=2e-2, rtol=2e-2)
    assert jnp.allclose(cell, rc, atol=2e-2, rtol=2e-2)
    for node in _walk(tree):
        hk, ck = node.state
        hr, cr = ref_states[id(node)]
        assert jnp.allclose(hk, hr, atol=2e-2, rtol=2e-2)
        assert jnp.allclose(ck, cr, atol=2e-2, rtol=2e-2)

    print("KERNEL_OK")
</pallas_src>

<mosaic_0001>
module attributes {stable_mosaic.version = 11 : i64} {
  func.func @_tree_lstm_kernel(%arg0: i32, %arg1: memref<8xi32, #tpu.memory_space<smem>>, %arg2: memref<8xi32, #tpu.memory_space<smem>>, %arg3: memref<8xi32, #tpu.memory_space<smem>>, %arg4: memref<8x128xbf16, #tpu.memory_space<vmem>>, %arg5: memref<256x512xbf16, #tpu.memory_space<vmem>>, %arg6: memref<1x512xf32, #tpu.memory_space<vmem>>, %arg7: memref<1x128xf32, #tpu.memory_space<vmem>>, %arg8: memref<1x128xf32, #tpu.memory_space<vmem>>, %arg9: memref<8x128xf32, #tpu.memory_space<vmem>>, %arg10: memref<8x128xf32, #tpu.memory_space<vmem>>) attributes {dimension_semantics = [#tpu.dimension_semantics<arbitrary>], iteration_bounds = array<i64: 1>, scalar_prefetch = 3 : i64, scratch_operands = 0 : i64, tpu.core_type = #tpu.core_type<tc>, window_params = [{pipeline_mode = #tpu.pipeline_mode<synchronous>, transform_indices = @transform_0, window_bounds = array<i64: 8, 128>}, {pipeline_mode = #tpu.pipeline_mode<synchronous>, transform_indices = @transform_1, window_bounds = array<i64: 256, 512>}, {pipeline_mode = #tpu.pipeline_mode<synchronous>, transform_indices = @transform_2, window_bounds = array<i64: 1, 512>}, {pipeline_mode = #tpu.pipeline_mode<synchronous>, transform_indices = @transform_3, window_bounds = array<i64: 1, 128>}, {pipeline_mode = #tpu.pipeline_mode<synchronous>, transform_indices = @transform_4, window_bounds = array<i64: 1, 128>}, {pipeline_mode = #tpu.pipeline_mode<synchronous>, transform_indices = @transform_5, window_bounds = array<i64: 8, 128>}, {pipeline_mode = #tpu.pipeline_mode<synchronous>, transform_indices = @transform_6, window_bounds = array<i64: 8, 128>}]} {
    %c0_i32 = arith.constant 0 : i32
    %0 = arith.index_cast %c0_i32 : i32 to index
    %1 = memref.load %arg1[%0] : memref<8xi32, #tpu.memory_space<smem>>
    %c1_i32 = arith.constant 1 : i32
    %2 = arith.cmpi eq, %1, %c1_i32 : i32
    %3 = arith.index_cast %c0_i32 : i32 to index
    %4 = memref.load %arg2[%3] : memref<8xi32, #tpu.memory_space<smem>>
    %5 = arith.index_cast %c0_i32 : i32 to index
    %6 = memref.load %arg3[%5] : memref<8xi32, #tpu.memory_space<smem>>
    %c0_i32_0 = arith.constant 0 : i32
    %7 = arith.cmpi sge, %6, %c0_i32_0 : i32
    %c-2_i32 = arith.constant -2 : i32
    %8 = arith.cmpi eq, %6, %c-2_i32 : i32
    %c0_i32_1 = arith.constant 0 : i32
    %c7_i32 = arith.constant 7 : i32
    %9 = arith.maxsi %c0_i32_1, %6 : i32
    %10 = arith.minsi %c7_i32, %9 : i32
    %11 = arith.index_cast %10 : i32 to index
    %c0 = arith.constant 0 : index
    %12 = vector.load %arg9[%11, %c0] : memref<8x128xf32, #tpu.memory_space<vmem>>, vector<1x128xf32>
    %13 = arith.index_cast %10 : i32 to index
    %c0_2 = arith.constant 0 : index
    %14 = vector.load %arg10[%13, %c0_2] : memref<8x128xf32, #tpu.memory_space<vmem>>, vector<1x128xf32>
    %c0_3 = arith.constant 0 : index
    %c0_4 = arith.constant 0 : index
    %15 = vector.load %arg7[%c0_3, %c0_4] : memref<1x128xf32, #tpu.memory_space<vmem>>, vector<1x128xf32>
    %cst = arith.constant 0.000000e+00 : f32
    %16 = vector.broadcast %cst : f32 to vector<1x128xf32>
    %17 = arith.select %8, %15, %16 : vector<1x128xf32>
    %18 = arith.select %7, %12, %17 : vector<1x128xf32>
    %c0_5 = arith.constant 0 : index
    %c0_6 = arith.constant 0 : index
    %19 = vector.load %arg8[%c0_5, %c0_6] : memref<1x128xf32, #tpu.memory_space<vmem>>, vector<1x128xf32>
    %cst_7 = arith.constant 0.000000e+00 : f32
    %20 = vector.broadcast %cst_7 : f32 to vector<1x128xf32>
    %21 = arith.select %8, %19, %20 : vector<1x128xf32>
    %22 = arith.select %7, %14, %21 : vector<1x128xf32>
    %c0_i32_8 = arith.constant 0 : i32
    %c7_i32_9 = arith.constant 7 : i32
    %23 = arith.maxsi %c0_i32_8, %4 : i32
    %24 = arith.minsi %c7_i32_9, %23 : i32
    %25 = arith.index_cast %24 : i32 to index
    %c0_10 = arith.constant 0 : index
    %26 = vector.load %arg9[%25, %c0_10] : memref<8x128xf32, #tpu.memory_space<vmem>>, vector<1x128xf32>
    %27 = arith.index_cast %c0_i32 : i32 to index
    %c0_11 = arith.constant 0 : index
    %28 = vector.load %arg4[%27, %c0_11] : memref<8x128xbf16, #tpu.memory_space<vmem>>, vector<1x128xbf16>
    %29 = arith.truncf %18 : vector<1x128xf32> to vector<1x128xbf16>
    %30 = arith.extf %28 : vector<1x128xbf16> to vector<1x128xf32>
    %31 = arith.select %2, %30, %26 : vector<1x128xf32>
    %32 = arith.truncf %31 : vector<1x128xf32> to vector<1x128xbf16>
    %c0_12 = arith.constant 0 : index
    %c0_13 = arith.constant 0 : index
    %33 = vector.load %arg5[%c0_12, %c0_13] : memref<256x512xbf16, #tpu.memory_space<vmem>>, vector<128x512xbf16>
    %cst_14 = arith.constant dense<0.000000e+00> : vector<1x512xf32>
    %34 = tpu.matmul %32, %33, %cst_14 {dimension_numbers = #tpu.dot_dimension_numbers<[1], [0], [0], [1], [0, 0, 1, 1], [], []>} : vector<1x128xbf16>, vector<128x512xbf16>, vector<1x512xf32> -> vector<1x512xf32>
    %c128 = arith.constant 128 : index
    %c0_15 = arith.constant 0 : index
    %35 = vector.load %arg5[%c128, %c0_15] : memref<256x512xbf16, #tpu.memory_space<vmem>>, vector<128x512xbf16>
    %cst_16 = arith.constant dense<0.000000e+00> : vector<1x512xf32>
    %36 = tpu.matmul %29, %35, %cst_16 {dimension_numbers = #tpu.dot_dimension_numbers<[1], [0], [0], [1], [0, 0, 1, 1], [], []>} : vector<1x128xbf16>, vector<128x512xbf16>, vector<1x512xf32> -> vector<1x512xf32>
    %37 = arith.addf %34, %36 : vector<1x512xf32>
    %c0_17 = arith.constant 0 : index
    %c0_18 = arith.constant 0 : index
    %38 = vector.load %arg6[%c0_17, %c0_18] : memref<1x512xf32, #tpu.memory_space<vmem>>, vector<1x512xf32>
    %39 = arith.addf %37, %38 : vector<1x512xf32>
    %40 = vector.extract_strided_slice %39 {offsets = [0, 0], sizes = [1, 128], strides = [1, 1]} : vector<1x512xf32> to vector<1x128xf32>
    %41 = arith.negf %40 : vector<1x128xf32>
    %42 = math.exp %41 : vector<1x128xf32>
    %cst_19 = arith.constant 1.000000e+00 : f32
    %43 = vector.broadcast %cst_19 : f32 to vector<1x128xf32>
    %44 = arith.addf %43, %42 : vector<1x128xf32>
    %45 = arith.divf %43, %44 : vector<1x128xf32>
    %46 = vector.extract_strided_slice %39 {offsets = [0, 128], sizes = [1, 128], strides = [1, 1]} : vector<1x512xf32> to vector<1x128xf32>
    %47 = arith.negf %46 : vector<1x128xf32>
    %48 = math.exp %47 : vector<1x128xf32>
    %cst_20 = arith.constant 1.000000e+00 : f32
    %49 = vector.broadcast %cst_20 : f32 to vector<1x128xf32>
    %50 = arith.addf %49, %48 : vector<1x128xf32>
    %51 = arith.divf %49, %50 : vector<1x128xf32>
    %52 = vector.extract_strided_slice %39 {offsets = [0, 256], sizes = [1, 128], strides = [1, 1]} : vector<1x512xf32> to vector<1x128xf32>
    %53 = arith.negf %52 : vector<1x128xf32>
    %54 = math.exp %53 : vector<1x128xf32>
    %cst_21 = arith.constant 1.000000e+00 : f32
    %55 = vector.broadcast %cst_21 : f32 to vector<1x128xf32>
    %56 = arith.addf %55, %54 : vector<1x128xf32>
    %57 = arith.divf %55, %56 : vector<1x128xf32>
    %58 = vector.extract_strided_slice %39 {offsets = [0, 384], sizes = [1, 128], strides = [1, 1]} : vector<1x512xf32> to vector<1x128xf32>
    %59 = math.tanh %58 : vector<1x128xf32>
    %60 = arith.mulf %45, %59 : vector<1x128xf32>
    %61 = arith.mulf %57, %22 : vector<1x128xf32>
    %62 = arith.addf %60, %61 : vector<1x128xf32>
    %63 = math.tanh %62 : vector<1x128xf32>
    %64 = arith.mulf %51, %63 : vector<1x128xf32>
    %65 = arith.index_cast %c0_i32 : i32 to index
    %c0_22 = arith.constant 0 : index
    %66 = vector.load %arg9[%65, %c0_22] : memref<8x128xf32, #tpu.memory_space<vmem>>, vector<1x128xf32>
    tpu.vector_store %arg9[%65, %c0_22], %64 {strides = array<i32>} : memref<8x128xf32, #tpu.memory_space<vmem>>, vector<1x128xf32>,
    %67 = arith.index_cast %c0_i32 : i32 to index
    %c0_23 = arith.constant 0 : index
    %68 = vector.load %arg10[%67, %c0_23] : memref<8x128xf32, #tpu.memory_space<vmem>>, vector<1x128xf32>
    tpu.vector_store %arg10[%67, %c0_23], %62 {strides = array<i32>} : memref<8x128xf32, #tpu.memory_space<vmem>>, vector<1x128xf32>,
    %c1_i32_24 = arith.constant 1 : i32
    %69 = arith.index_cast %c1_i32_24 : i32 to index
    %70 = memref.load %arg1[%69] : memref<8xi32, #tpu.memory_space<smem>>
    %c1_i32_25 = arith.constant 1 : i32
    %71 = arith.cmpi eq, %70, %c1_i32_25 : i32
    %72 = arith.index_cast %c1_i32_24 : i32 to index
    %73 = memref.load %arg2[%72] : memref<8xi32, #tpu.memory_space<smem>>
    %74 = arith.index_cast %c1_i32_24 : i32 to index
    %75 = memref.load %arg3[%74] : memref<8xi32, #tpu.memory_space<smem>>
    %c0_i32_26 = arith.constant 0 : i32
    %76 = arith.cmpi sge, %75, %c0_i32_26 : i32
    %c-2_i32_27 = arith.constant -2 : i32
    %77 = arith.cmpi eq, %75, %c-2_i32_27 : i32
    %c0_i32_28 = arith.constant 0 : i32
    %c7_i32_29 = arith.constant 7 : i32
    %78 = arith.maxsi %c0_i32_28, %75 : i32
    %79 = arith.minsi %c7_i32_29, %78 : i32
    %80 = arith.index_cast %79 : i32 to index
    %c0_30 = arith.constant 0 : index
    %81 = vector.load %arg9[%80, %c0_30] : memref<8x128xf32, #tpu.memory_space<vmem>>, vector<1x128xf32>
    %82 = arith.index_cast %79 : i32 to index
    %c0_31 = arith.constant 0 : index
    %83 = vector.load %arg10[%82, %c0_31] : memref<8x128xf32, #tpu.memory_space<vmem>>, vector<1x128xf32>
    %c0_32 = arith.constant 0 : index
    %c0_33 = arith.constant 0 : index
    %84 = vector.load %arg7[%c0_32, %c0_33] : memref<1x128xf32, #tpu.memory_space<vmem>>, vector<1x128xf32>
    %cst_34 = arith.constant 0.000000e+00 : f32
    %85 = vector.broadcast %cst_34 : f32 to vector<1x128xf32>
    %86 = arith.select %77, %84, %85 : vector<1x128xf32>
    %87 = arith.select %76, %81, %86 : vector<1x128xf32>
    %c0_35 = arith.constant 0 : index
    %c0_36 = arith.constant 0 : index
    %88 = vector.load %arg8[%c0_35, %c0_36] : memref<1x128xf32, #tpu.memory_space<vmem>>, vector<1x128xf32>
    %cst_37 = arith.constant 0.000000e+00 : f32
    %89 = vector.broadcast %cst_37 : f32 to vector<1x128xf32>
    %90 = arith.select %77, %88, %89 : vector<1x128xf32>
    %91 = arith.select %76, %83, %90 : vector<1x128xf32>
    %c0_i32_38 = arith.constant 0 : i32
    %c7_i32_39 = arith.constant 7 : i32
    %92 = arith.maxsi %c0_i32_38, %73 : i32
    %93 = arith.minsi %c7_i32_39, %92 : i32
    %94 = arith.index_cast %93 : i32 to index
    %c0_40 = arith.constant 0 : index
    %95 = vector.load %arg9[%94, %c0_40] : memref<8x128xf32, #tpu.memory_space<vmem>>, vector<1x128xf32>
    %96 = arith.index_cast %c1_i32_24 : i32 to index
    %c0_41 = arith.constant 0 : index
    %97 = vector.load %arg4[%96, %c0_41] : memref<8x128xbf16, #tpu.memory_space<vmem>>, vector<1x128xbf16>
    %98 = arith.truncf %87 : vector<1x128xf32> to vector<1x128xbf16>
    %99 = arith.extf %97 : vector<1x128xbf16> to vector<1x128xf32>
    %100 = arith.select %71, %99, %95 : vector<1x128xf32>
    %101 = arith.truncf %100 : vector<1x128xf32> to vector<1x128xbf16>
    %c0_42 = arith.constant 0 : index
    %c0_43 = arith.constant 0 : index
    %102 = vector.load %arg5[%c0_42, %c0_43] : memref<256x512xbf16, #tpu.memory_space<vmem>>, vector<128x512xbf16>
    %cst_44 = arith.constant dense<0.000000e+00> : vector<1x512xf32>
    %103 = tpu.matmul %101, %102, %cst_44 {dimension_numbers = #tpu.dot_dimension_numbers<[1], [0], [0], [1], [0, 0, 1, 1], [], []>} : vector<1x128xbf16>, vector<128x512xbf16>, vector<1x512xf32> -> vector<1x512xf32>
    %c128_45 = arith.constant 128 : index
    %c0_46 = arith.constant 0 : index
    %104 = vector.load %arg5[%c128_45, %c0_46] : memref<256x512xbf16, #tpu.memory_space<vmem>>, vector<128x512xbf16>
    %cst_47 = arith.constant dense<0.000000e+00> : vector<1x512xf32>
    %105 = tpu.matmul %98, %104, %cst_47 {dimension_numbers = #tpu.dot_dimension_numbers<[1], [0], [0], [1], [0, 0, 1, 1], [], []>} : vector<1x128xbf16>, vector<128x512xbf16>, vector<1x512xf32> -> vector<1x512xf32>
    %106 = arith.addf %103, %105 : vector<1x512xf32>
    %c0_48 = arith.constant 0 : index
    %c0_49 = arith.constant 0 : index
    %107 = vector.load %arg6[%c0_48, %c0_49] : memref<1x512xf32, #tpu.memory_space<vmem>>, vector<1x512xf32>
    %108 = arith.addf %106, %107 : vector<1x512xf32>
    %109 = vector.extract_strided_slice %108 {offsets = [0, 0], sizes = [1, 128], strides = [1, 1]} : vector<1x512xf32> to vector<1x128xf32>
    %110 = arith.negf %109 : vector<1x128xf32>
    %111 = math.exp %110 : vector<1x128xf32>
    %cst_50 = arith.constant 1.000000e+00 : f32
    %112 = vector.broadcast %cst_50 : f32 to vector<1x128xf32>
    %113 = arith.addf %112, %111 : vector<1x128xf32>
    %114 = arith.divf %112, %113 : vector<1x128xf32>
    %115 = vector.extract_strided_slice %108 {offsets = [0, 128], sizes = [1, 128], strides = [1, 1]} : vector<1x512xf32> to vector<1x128xf32>
    %116 = arith.negf %115 : vector<1x128xf32>
    %117 = math.exp %116 : vector<1x128xf32>
    %cst_51 = arith.constant 1.000000e+00 : f32
    %118 = vector.broadcast %cst_51 : f32 to vector<1x128xf32>
    %119 = arith.addf %118, %117 : vector<1x128xf32>
    %120 = arith.divf %118, %119 : vector<1x128xf32>
    %121 = vector.extract_strided_slice %108 {offsets = [0, 256], sizes = [1, 128], strides = [1, 1]} : vector<1x512xf32> to vector<1x128xf32>
    %122 = arith.negf %121 : vector<1x128xf32>
    %123 = math.exp %122 : vector<1x128xf32>
    %cst_52 = arith.constant 1.000000e+00 : f32
    %124 = vector.broadcast %cst_52 : f32 to vector<1x128xf32>
    %125 = arith.addf %124, %123 : vector<1x128xf32>
    %126 = arith.divf %124, %125 : vector<1x128xf32>
    %127 = vector.extract_strided_slice %108 {offsets = [0, 384], sizes = [1, 128], strides = [1, 1]} : vector<1x512xf32> to vector<1x128xf32>
    %128 = math.tanh %127 : vector<1x128xf32>
    %129 = arith.mulf %114, %128 : vector<1x128xf32>
    %130 = arith.mulf %126, %91 : vector<1x128xf32>
    %131 = arith.addf %129, %130 : vector<1x128xf32>
    %132 = math.tanh %131 : vector<1x128xf32>
    %133 = arith.mulf %120, %132 : vector<1x128xf32>
    %134 = arith.index_cast %c1_i32_24 : i32 to index
    %c0_53 = arith.constant 0 : index
    %135 = vector.load %arg9[%134, %c0_53] : memref<8x128xf32, #tpu.memory_space<vmem>>, vector<1x128xf32>
    tpu.vector_store %arg9[%134, %c0_53], %133 {strides = array<i32>} : memref<8x128xf32, #tpu.memory_space<vmem>>, vector<1x128xf32>,
    %136 = arith.index_cast %c1_i32_24 : i32 to index
    %c0_54 = arith.constant 0 : index
    %137 = vector.load %arg10[%136, %c0_54] : memref<8x128xf32, #tpu.memory_space<vmem>>, vector<1x128xf32>
    tpu.vector_store %arg10[%136, %c0_54], %131 {strides = array<i32>} : memref<8x128xf32, #tpu.memory_space<vmem>>, vector<1x128xf32>,
    %c2_i32 = arith.constant 2 : i32
    %138 = arith.index_cast %c2_i32 : i32 to index
    %139 = memref.load %arg1[%138] : memref<8xi32, #tpu.memory_space<smem>>
    %c1_i32_55 = arith.constant 1 : i32
    %140 = arith.cmpi eq, %139, %c1_i32_55 : i32
    %141 = arith.index_cast %c2_i32 : i32 to index
    %142 = memref.load %arg2[%141] : memref<8xi32, #tpu.memory_space<smem>>
    %143 = arith.index_cast %c2_i32 : i32 to index
    %144 = memref.load %arg3[%143] : memref<8xi32, #tpu.memory_space<smem>>
    %c0_i32_56 = arith.constant 0 : i32
    %145 = arith.cmpi sge, %144, %c0_i32_56 : i32
    %c-2_i32_57 = arith.constant -2 : i32
    %146 = arith.cmpi eq, %144, %c-2_i32_57 : i32
    %c0_i32_58 = arith.constant 0 : i32
    %c7_i32_59 = arith.constant 7 : i32
    %147 = arith.maxsi %c0_i32_58, %144 : i32
    %148 = arith.minsi %c7_i32_59, %147 : i32
    %149 = arith.index_cast %148 : i32 to index
    %c0_60 = arith.constant 0 : index
    %150 = vector.load %arg9[%149, %c0_60] : memref<8x128xf32, #tpu.memory_space<vmem>>, vector<1x128xf32>
    %151 = arith.index_cast %148 : i32 to index
    %c0_61 = arith.constant 0 : index
    %152 = vector.load %arg10[%151, %c0_61] : memref<8x128xf32, #tpu.memory_space<vmem>>, vector<1x128xf32>
    %c0_62 = arith.constant 0 : index
    %c0_63 = arith.constant 0 : index
    %153 = vector.load %arg7[%c0_62, %c0_63] : memref<1x128xf32, #tpu.memory_space<vmem>>, vector<1x128xf32>
    %cst_64 = arith.constant 0.000000e+00 : f32
    %154 = vector.broadcast %cst_64 : f32 to vector<1x128xf32>
    %155 = arith.select %146, %153, %154 : vector<1x128xf32>
    %156 = arith.select %145, %150, %155 : vector<1x128xf32>
    %c0_65 = arith.constant 0 : index
    %c0_66 = arith.constant 0 : index
    %157 = vector.load %arg8[%c0_65, %c0_66] : memref<1x128xf32, #tpu.memory_space<vmem>>, vector<1x128xf32>
    %cst_67 = arith.constant 0.000000e+00 : f32
    %158 = vector.broadcast %cst_67 : f32 to vector<1x128xf32>
    %159 = arith.select %146, %157, %158 : vector<1x128xf32>
    %160 = arith.select %145, %152, %159 : vector<1x128xf32>
    %c0_i32_68 = arith.constant 0 : i32
    %c7_i32_69 = arith.constant 7 : i32
    %161 = arith.maxsi %c0_i32_68, %142 : i32
    %162 = arith.minsi %c7_i32_69, %161 : i32
    %163 = arith.index_cast %162 : i32 to index
    %c0_70 = arith.constant 0 : index
    %164 = vector.load %arg9[%163, %c0_70] : memref<8x128xf32, #tpu.memory_space<vmem>>, vector<1x128xf32>
    %165 = arith.index_cast %c2_i32 : i32 to index
    %c0_71 = arith.constant 0 : index
    %166 = vector.load %arg4[%165, %c0_71] : memref<8x128xbf16, #tpu.memory_space<vmem>>, vector<1x128xbf16>
    %167 = arith.truncf %156 : vector<1x128xf32> to vector<1x128xbf16>
    %168 = arith.extf %166 : vector<1x128xbf16> to vector<1x128xf32>
    %169 = arith.select %140, %168, %164 : vector<1x128xf32>
    %170 = arith.truncf %169 : vector<1x128xf32> to vector<1x128xbf16>
    %c0_72 = arith.constant 0 : index
    %c0_73 = arith.constant 0 : index
    %171 = vector.load %arg5[%c0_72, %c0_73] : memref<256x512xbf16, #tpu.memory_space<vmem>>, vector<128x512xbf16>
    %cst_74 = arith.constant dense<0.000000e+00> : vector<1x512xf32>
    %172 = tpu.matmul %170, %171, %cst_74 {dimension_numbers = #tpu.dot_dimension_numbers<[1], [0], [0], [1], [0, 0, 1, 1], [], []>} : vector<1x128xbf16>, vector<128x512xbf16>, vector<1x512xf32> -> vector<1x512xf32>
    %c128_75 = arith.constant 128 : index
    %c0_76 = arith.constant 0 : index
    %173 = vector.load %arg5[%c128_75, %c0_76] : memref<256x512xbf16, #tpu.memory_space<vmem>>, vector<128x512xbf16>
    %cst_77 = arith.constant dense<0.000000e+00> : vector<1x512xf32>
    %174 = tpu.matmul %167, %173, %cst_77 {dimension_numbers = #tpu.dot_dimension_numbers<[1], [0], [0], [1], [0, 0, 1, 1], [], []>} : vector<1x128xbf16>, vector<128x512xbf16>, vector<1x512xf32> -> vector<1x512xf32>
    %175 = arith.addf %172, %174 : vector<1x512xf32>
    %c0_78 = arith.constant 0 : index
    %c0_79 = arith.constant 0 : index
    %176 = vector.load %arg6[%c0_78, %c0_79] : memref<1x512xf32, #tpu.memory_space<vmem>>, vector<1x512xf32>
    %177 = arith.addf %175, %176 : vector<1x512xf32>
    %178 = vector.extract_strided_slice %177 {offsets = [0, 0], sizes = [1, 128], strides = [1, 1]} : vector<1x512xf32> to vector<1x128xf32>
    %179 = arith.negf %178 : vector<1x128xf32>
    %180 = math.exp %179 : vector<1x128xf32>
    %cst_80 = arith.constant 1.000000e+00 : f32
    %181 = vector.broadcast %cst_80 : f32 to vector<1x128xf32>
    %182 = arith.addf %181, %180 : vector<1x128xf32>
    %183 = arith.divf %181, %182 : vector<1x128xf32>
    %184 = vector.extract_strided_slice %177 {offsets = [0, 128], sizes = [1, 128], strides = [1, 1]} : vector<1x512xf32> to vector<1x128xf32>
    %185 = arith.negf %184 : vector<1x128xf32>
    %186 = math.exp %185 : vector<1x128xf32>
    %cst_81 = arith.constant 1.000000e+00 : f32
    %187 = vector.broadcast %cst_81 : f32 to vector<1x128xf32>
    %188 = arith.addf %187, %186 : vector<1x128xf32>
    %189 = arith.divf %187, %188 : vector<1x128xf32>
    %190 = vector.extract_strided_slice %177 {offsets = [0, 256], sizes = [1, 128], strides = [1, 1]} : vector<1x512xf32> to vector<1x128xf32>
    %191 = arith.negf %190 : vector<1x128xf32>
    %192 = math.exp %191 : vector<1x128xf32>
    %cst_82 = arith.constant 1.000000e+00 : f32
    %193 = vector.broadcast %cst_82 : f32 to vector<1x128xf32>
    %194 = arith.addf %193, %192 : vector<1x128xf32>
    %195 = arith.divf %193, %194 : vector<1x128xf32>
    %196 = vector.extract_strided_slice %177 {offsets = [0, 384], sizes = [1, 128], strides = [1, 1]} : vector<1x512xf32> to vector<1x128xf32>
    %197 = math.tanh %196 : vector<1x128xf32>
    %198 = arith.mulf %183, %197 : vector<1x128xf32>
    %199 = arith.mulf %195, %160 : vector<1x128xf32>
    %200 = arith.addf %198, %199 : vector<1x128xf32>
    %201 = math.tanh %200 : vector<1x128xf32>
    %202 = arith.mulf %189, %201 : vector<1x128xf32>
    %203 = arith.index_cast %c2_i32 : i32 to index
    %c0_83 = arith.constant 0 : index
    %204 = vector.load %arg9[%203, %c0_83] : memref<8x128xf32, #tpu.memory_space<vmem>>, vector<1x128xf32>
    tpu.vector_store %arg9[%203, %c0_83], %202 {strides = array<i32>} : memref<8x128xf32, #tpu.memory_space<vmem>>, vector<1x128xf32>,
    %205 = arith.index_cast %c2_i32 : i32 to index
    %c0_84 = arith.constant 0 : index
    %206 = vector.load %arg10[%205, %c0_84] : memref<8x128xf32, #tpu.memory_space<vmem>>, vector<1x128xf32>
    tpu.vector_store %arg10[%205, %c0_84], %200 {strides = array<i32>} : memref<8x128xf32, #tpu.memory_space<vmem>>, vector<1x128xf32>,
    %c3_i32 = arith.constant 3 : i32
    %207 = arith.index_cast %c3_i32 : i32 to index
    %208 = memref.load %arg1[%207] : memref<8xi32, #tpu.memory_space<smem>>
    %c1_i32_85 = arith.constant 1 : i32
    %209 = arith.cmpi eq, %208, %c1_i32_85 : i32
    %210 = arith.index_cast %c3_i32 : i32 to index
    %211 = memref.load %arg2[%210] : memref<8xi32, #tpu.memory_space<smem>>
    %212 = arith.index_cast %c3_i32 : i32 to index
    %213 = memref.load %arg3[%212] : memref<8xi32, #tpu.memory_space<smem>>
    %c0_i32_86 = arith.constant 0 : i32
    %214 = arith.cmpi sge, %213, %c0_i32_86 : i32
    %c-2_i32_87 = arith.constant -2 : i32
    %215 = arith.cmpi eq, %213, %c-2_i32_87 : i32
    %c0_i32_88 = arith.constant 0 : i32
    %c7_i32_89 = arith.constant 7 : i32
    %216 = arith.maxsi %c0_i32_88, %213 : i32
    %217 = arith.minsi %c7_i32_89, %216 : i32
    %218 = arith.index_cast %217 : i32 to index
    %c0_90 = arith.constant 0 : index
    %219 = vector.load %arg9[%218, %c0_90] : memref<8x128xf32, #tpu.memory_space<vmem>>, vector<1x128xf32>
    %220 = arith.index_cast %217 : i32 to index
    %c0_91 = arith.constant 0 : index
    %221 = vector.load %arg10[%220, %c0_91] : memref<8x128xf32, #tpu.memory_space<vmem>>, vector<1x128xf32>
    %c0_92 = arith.constant 0 : index
    %c0_93 = arith.constant 0 : index
    %222 = vector.load %arg7[%c0_92, %c0_93] : memref<1x128xf32, #tpu.memory_space<vmem>>, vector<1x128xf32>
    %cst_94 = arith.constant 0.000000e+00 : f32
    %223 = vector.broadcast %cst_94 : f32 to vector<1x128xf32>
    %224 = arith.select %215, %222, %223 : vector<1x128xf32>
    %225 = arith.select %214, %219, %224 : vector<1x128xf32>
    %c0_95 = arith.constant 0 : index
    %c0_96 = arith.constant 0 : index
    %226 = vector.load %arg8[%c0_95, %c0_96] : memref<1x128xf32, #tpu.memory_space<vmem>>, vector<1x128xf32>
    %cst_97 = arith.constant 0.000000e+00 : f32
    %227 = vector.broadcast %cst_97 : f32 to vector<1x128xf32>
    %228 = arith.select %215, %226, %227 : vector<1x128xf32>
    %229 = arith.select %214, %221, %228 : vector<1x128xf32>
    %c0_i32_98 = arith.constant 0 : i32
    %c7_i32_99 = arith.constant 7 : i32
    %230 = arith.maxsi %c0_i32_98, %211 : i32
    %231 = arith.minsi %c7_i32_99, %230 : i32
    %232 = arith.index_cast %231 : i32 to index
    %c0_100 = arith.constant 0 : index
    %233 = vector.load %arg9[%232, %c0_100] : memref<8x128xf32, #tpu.memory_space<vmem>>, vector<1x128xf32>
    %234 = arith.index_cast %c3_i32 : i32 to index
    %c0_101 = arith.constant 0 : index
    %235 = vector.load %arg4[%234, %c0_101] : memref<8x128xbf16, #tpu.memory_space<vmem>>, vector<1x128xbf16>
    %236 = arith.truncf %225 : vector<1x128xf32> to vector<1x128xbf16>
    %237 = arith.extf %235 : vector<1x128xbf16> to vector<1x128xf32>
    %238 = arith.select %209, %237, %233 : vector<1x128xf32>
    %239 = arith.truncf %238 : vector<1x128xf32> to vector<1x128xbf16>
    %c0_102 = arith.constant 0 : index
    %c0_103 = arith.constant 0 : index
    %240 = vector.load %arg5[%c0_102, %c0_103] : memref<256x512xbf16, #tpu.memory_space<vmem>>, vector<128x512xbf16>
    %cst_104 = arith.constant dense<0.000000e+00> : vector<1x512xf32>
    %241 = tpu.matmul %239, %240, %cst_104 {dimension_numbers = #tpu.dot_dimension_numbers<[1], [0], [0], [1], [0, 0, 1, 1], [], []>} : vector<1x128xbf16>, vector<128x512xbf16>, vector<1x512xf32> -> vector<1x512xf32>
    %c128_105 = arith.constant 128 : index
    %c0_106 = arith.constant 0 : index
    %242 = vector.load %arg5[%c128_105, %c0_106] : memref<256x512xbf16, #tpu.memory_space<vmem>>, vector<128x512xbf16>
    %cst_107 = arith.constant dense<0.000000e+00> : vector<1x512xf32>
    %243 = tpu.matmul %236, %242, %cst_107 {dimension_numbers = #tpu.dot_dimension_numbers<[1], [0], [0], [1], [0, 0, 1, 1], [], []>} : vector<1x128xbf16>, vector<128x512xbf16>, vector<1x512xf32> -> vector<1x512xf32>
    %244 = arith.addf %241, %243 : vector<1x512xf32>
    %c0_108 = arith.constant 0 : index
    %c0_109 = arith.constant 0 : index
    %245 = vector.load %arg6[%c0_108, %c0_109] : memref<1x512xf32, #tpu.memory_space<vmem>>, vector<1x512xf32>
    %246 = arith.addf %244, %245 : vector<1x512xf32>
    %247 = vector.extract_strided_slice %246 {offsets = [0, 0], sizes = [1, 128], strides = [1, 1]} : vector<1x512xf32> to vector<1x128xf32>
    %248 = arith.negf %247 : vector<1x128xf32>
    %249 = math.exp %248 : vector<1x128xf32>
    %cst_110 = arith.constant 1.000000e+00 : f32
    %250 = vector.broadcast %cst_110 : f32 to vector<1x128xf32>
    %251 = arith.addf %250, %249 : vector<1x128xf32>
    %252 = arith.divf %250, %251 : vector<1x128xf32>
    %253 = vector.extract_strided_slice %246 {offsets = [0, 128], sizes = [1, 128], strides = [1, 1]} : vector<1x512xf32> to vector<1x128xf32>
    %254 = arith.negf %253 : vector<1x128xf32>
    %255 = math.exp %254 : vector<1x128xf32>
    %cst_111 = arith.constant 1.000000e+00 : f32
    %256 = vector.broadcast %cst_111 : f32 to vector<1x128xf32>
    %257 = arith.addf %256, %255 : vector<1x128xf32>
    %258 = arith.divf %256, %257 : vector<1x128xf32>
    %259 = vector.extract_strided_slice %246 {offsets = [0, 256], sizes = [1, 128], strides = [1, 1]} : vector<1x512xf32> to vector<1x128xf32>
    %260 = arith.negf %259 : vector<1x128xf32>
    %261 = math.exp %260 : vector<1x128xf32>
    %cst_112 = arith.constant 1.000000e+00 : f32
    %262 = vector.broadcast %cst_112 : f32 to vector<1x128xf32>
    %263 = arith.addf %262, %261 : vector<1x128xf32>
    %264 = arith.divf %262, %263 : vector<1x128xf32>
    %265 = vector.extract_strided_slice %246 {offsets = [0, 384], sizes = [1, 128], strides = [1, 1]} : vector<1x512xf32> to vector<1x128xf32>
    %266 = math.tanh %265 : vector<1x128xf32>
    %267 = arith.mulf %252, %266 : vector<1x128xf32>
    %268 = arith.mulf %264, %229 : vector<1x128xf32>
    %269 = arith.addf %267, %268 : vector<1x128xf32>
    %270 = math.tanh %269 : vector<1x128xf32>
    %271 = arith.mulf %258, %270 : vector<1x128xf32>
    %272 = arith.index_cast %c3_i32 : i32 to index
    %c0_113 = arith.constant 0 : index
    %273 = vector.load %arg9[%272, %c0_113] : memref<8x128xf32, #tpu.memory_space<vmem>>, vector<1x128xf32>
    tpu.vector_store %arg9[%272, %c0_113], %271 {strides = array<i32>} : memref<8x128xf32, #tpu.memory_space<vmem>>, vector<1x128xf32>,
    %274 = arith.index_cast %c3_i32 : i32 to index
    %c0_114 = arith.constant 0 : index
    %275 = vector.load %arg10[%274, %c0_114] : memref<8x128xf32, #tpu.memory_space<vmem>>, vector<1x128xf32>
    tpu.vector_store %arg10[%274, %c0_114], %269 {strides = array<i32>} : memref<8x128xf32, #tpu.memory_space<vmem>>, vector<1x128xf32>,
    %c4_i32 = arith.constant 4 : i32
    %276 = arith.index_cast %c4_i32 : i32 to index
    %277 = memref.load %arg1[%276] : memref<8xi32, #tpu.memory_space<smem>>
    %c1_i32_115 = arith.constant 1 : i32
    %278 = arith.cmpi eq, %277, %c1_i32_115 : i32
    %279 = arith.index_cast %c4_i32 : i32 to index
    %280 = memref.load %arg2[%279] : memref<8xi32, #tpu.memory_space<smem>>
    %281 = arith.index_cast %c4_i32 : i32 to index
    %282 = memref.load %arg3[%281] : memref<8xi32, #tpu.memory_space<smem>>
    %c0_i32_116 = arith.constant 0 : i32
    %283 = arith.cmpi sge, %282, %c0_i32_116 : i32
    %c-2_i32_117 = arith.constant -2 : i32
    %284 = arith.cmpi eq, %282, %c-2_i32_117 : i32
    %c0_i32_118 = arith.constant 0 : i32
    %c7_i32_119 = arith.constant 7 : i32
    %285 = arith.maxsi %c0_i32_118, %282 : i32
    %286 = arith.minsi %c7_i32_119, %285 : i32
    %287 = arith.index_cast %286 : i32 to index
    %c0_120 = arith.constant 0 : index
    %288 = vector.load %arg9[%287, %c0_120] : memref<8x128xf32, #tpu.memory_space<vmem>>, vector<1x128xf32>
    %289 = arith.index_cast %286 : i32 to index
    %c0_121 = arith.constant 0 : index
    %290 = vector.load %arg10[%289, %c0_121] : memref<8x128xf32, #tpu.memory_space<vmem>>, vector<1x128xf32>
    %c0_122 = arith.constant 0 : index
    %c0_123 = arith.constant 0 : index
    %291 = vector.load %arg7[%c0_122, %c0_123] : memref<1x128xf32, #tpu.memory_space<vmem>>, vector<1x128xf32>
    %cst_124 = arith.constant 0.000000e+00 : f32
    %292 = vector.broadcast %cst_124 : f32 to vector<1x128xf32>
    %293 = arith.select %284, %291, %292 : vector<1x128xf32>
    %294 = arith.select %283, %288, %293 : vector<1x128xf32>
    %c0_125 = arith.constant 0 : index
    %c0_126 = arith.constant 0 : index
    %295 = vector.load %arg8[%c0_125, %c0_126] : memref<1x128xf32, #tpu.memory_space<vmem>>, vector<1x128xf32>
    %cst_127 = arith.constant 0.000000e+00 : f32
    %296 = vector.broadcast %cst_127 : f32 to vector<1x128xf32>
    %297 = arith.select %284, %295, %296 : vector<1x128xf32>
    %298 = arith.select %283, %290, %297 : vector<1x128xf32>
    %c0_i32_128 = arith.constant 0 : i32
    %c7_i32_129 = arith.constant 7 : i32
    %299 = arith.maxsi %c0_i32_128, %280 : i32
    %300 = arith.minsi %c7_i32_129, %299 : i32
    %301 = arith.index_cast %300 : i32 to index
    %c0_130 = arith.constant 0 : index
    %302 = vector.load %arg9[%301, %c0_130] : memref<8x128xf32, #tpu.memory_space<vmem>>, vector<1x128xf32>
    %303 = arith.index_cast %c4_i32 : i32 to index
    %c0_131 = arith.constant 0 : index
    %304 = vector.load %arg4[%303, %c0_131] : memref<8x128xbf16, #tpu.memory_space<vmem>>, vector<1x128xbf16>
    %305 = arith.truncf %294 : vector<1x128xf32> to vector<1x128xbf16>
    %306 = arith.extf %304 : vector<1x128xbf16> to vector<1x128xf32>
    %307 = arith.select %278, %306, %302 : vector<1x128xf32>
    %308 = arith.truncf %307 : vector<1x128xf32> to vector<1x128xbf16>
    %c0_132 = arith.constant 0 : index
    %c0_133 = arith.constant 0 : index
    %309 = vector.load %arg5[%c0_132, %c0_133] : memref<256x512xbf16, #tpu.memory_space<vmem>>, vector<128x512xbf16>
    %cst_134 = arith.constant dense<0.000000e+00> : vector<1x512xf32>
    %310 = tpu.matmul %308, %309, %cst_134 {dimension_numbers = #tpu.dot_dimension_numbers<[1], [0], [0], [1], [0, 0, 1, 1], [], []>} : vector<1x128xbf16>, vector<128x512xbf16>, vector<1x512xf32> -> vector<1x512xf32>
    %c128_135 = arith.constant 128 : index
    %c0_136 = arith.constant 0 : index
    %311 = vector.load %arg5[%c128_135, %c0_136] : memref<256x512xbf16, #tpu.memory_space<vmem>>, vector<128x512xbf16>
    %cst_137 = arith.constant dense<0.000000e+00> : vector<1x512xf32>
    %312 = tpu.matmul %305, %311, %cst_137 {dimension_numbers = #tpu.dot_dimension_numbers<[1], [0], [0], [1], [0, 0, 1, 1], [], []>} : vector<1x128xbf16>, vector<128x512xbf16>, vector<1x512xf32> -> vector<1x512xf32>
    %313 = arith.addf %310, %312 : vector<1x512xf32>
    %c0_138 = arith.constant 0 : index
    %c0_139 = arith.constant 0 : index
    %314 = vector.load %arg6[%c0_138, %c0_139] : memref<1x512xf32, #tpu.memory_space<vmem>>, vector<1x512xf32>
    %315 = arith.addf %313, %314 : vector<1x512xf32>
    %316 = vector.extract_strided_slice %315 {offsets = [0, 0], sizes = [1, 128], strides = [1, 1]} : vector<1x512xf32> to vector<1x128xf32>
    %317 = arith.negf %316 : vector<1x128xf32>
    %318 = math.exp %317 : vector<1x128xf32>
    %cst_140 = arith.constant 1.000000e+00 : f32
    %319 = vector.broadcast %cst_140 : f32 to vector<1x128xf32>
    %320 = arith.addf %319, %318 : vector<1x128xf32>
    %321 = arith.divf %319, %320 : vector<1x128xf32>
    %322 = vector.extract_strided_slice %315 {offsets = [0, 128], sizes = [1, 128], strides = [1, 1]} : vector<1x512xf32> to vector<1x128xf32>
    %323 = arith.negf %322 : vector<1x128xf32>
    %324 = math.exp %323 : vector<1x128xf32>
    %cst_141 = arith.constant 1.000000e+00 : f32
    %325 = vector.broadcast %cst_141 : f32 to vector<1x128xf32>
    %326 = arith.addf %325, %324 : vector<1x128xf32>
    %327 = arith.divf %325, %326 : vector<1x128xf32>
    %328 = vector.extract_strided_slice %315 {offsets = [0, 256], sizes = [1, 128], strides = [1, 1]} : vector<1x512xf32> to vector<1x128xf32>
    %329 = arith.negf %328 : vector<1x128xf32>
    %330 = math.exp %329 : vector<1x128xf32>
    %cst_142 = arith.constant 1.000000e+00 : f32
    %331 = vector.broadcast %cst_142 : f32 to vector<1x128xf32>
    %332 = arith.addf %331, %330 : vector<1x128xf32>
    %333 = arith.divf %331, %332 : vector<1x128xf32>
    %334 = vector.extract_strided_slice %315 {offsets = [0, 384], sizes = [1, 128], strides = [1, 1]} : vector<1x512xf32> to vector<1x128xf32>
    %335 = math.tanh %334 : vector<1x128xf32>
    %336 = arith.mulf %321, %335 : vector<1x128xf32>
    %337 = arith.mulf %333, %298 : vector<1x128xf32>
    %338 = arith.addf %336, %337 : vector<1x128xf32>
    %339 = math.tanh %338 : vector<1x128xf32>
    %340 = arith.mulf %327, %339 : vector<1x128xf32>
    %341 = arith.index_cast %c4_i32 : i32 to index
    %c0_143 = arith.constant 0 : index
    %342 = vector.load %arg9[%341, %c0_143] : memref<8x128xf32, #tpu.memory_space<vmem>>, vector<1x128xf32>
    tpu.vector_store %arg9[%341, %c0_143], %340 {strides = array<i32>} : memref<8x128xf32, #tpu.memory_space<vmem>>, vector<1x128xf32>,
    %343 = arith.index_cast %c4_i32 : i32 to index
    %c0_144 = arith.constant 0 : index
    %344 = vector.load %arg10[%343, %c0_144] : memref<8x128xf32, #tpu.memory_space<vmem>>, vector<1x128xf32>
    tpu.vector_store %arg10[%343, %c0_144], %338 {strides = array<i32>} : memref<8x128xf32, #tpu.memory_space<vmem>>, vector<1x128xf32>,
    %c5_i32 = arith.constant 5 : i32
    %345 = arith.index_cast %c5_i32 : i32 to index
    %346 = memref.load %arg1[%345] : memref<8xi32, #tpu.memory_space<smem>>
    %c1_i32_145 = arith.constant 1 : i32
    %347 = arith.cmpi eq, %346, %c1_i32_145 : i32
    %348 = arith.index_cast %c5_i32 : i32 to index
    %349 = memref.load %arg2[%348] : memref<8xi32, #tpu.memory_space<smem>>
    %350 = arith.index_cast %c5_i32 : i32 to index
    %351 = memref.load %arg3[%350] : memref<8xi32, #tpu.memory_space<smem>>
    %c0_i32_146 = arith.constant 0 : i32
    %352 = arith.cmpi sge, %351, %c0_i32_146 : i32
    %c-2_i32_147 = arith.constant -2 : i32
    %353 = arith.cmpi eq, %351, %c-2_i32_147 : i32
    %c0_i32_148 = arith.constant 0 : i32
    %c7_i32_149 = arith.constant 7 : i32
    %354 = arith.maxsi %c0_i32_148, %351 : i32
    %355 = arith.minsi %c7_i32_149, %354 : i32
    %356 = arith.index_cast %355 : i32 to index
    %c0_150 = arith.constant 0 : index
    %357 = vector.load %arg9[%356, %c0_150] : memref<8x128xf32, #tpu.memory_space<vmem>>, vector<1x128xf32>
    %358 = arith.index_cast %355 : i32 to index
    %c0_151 = arith.constant 0 : index
    %359 = vector.load %arg10[%358, %c0_151] : memref<8x128xf32, #tpu.memory_space<vmem>>, vector<1x128xf32>
    %c0_152 = arith.constant 0 : index
    %c0_153 = arith.constant 0 : index
    %360 = vector.load %arg7[%c0_152, %c0_153] : memref<1x128xf32, #tpu.memory_space<vmem>>, vector<1x128xf32>
    %cst_154 = arith.constant 0.000000e+00 : f32
    %361 = vector.broadcast %cst_154 : f32 to vector<1x128xf32>
    %362 = arith.select %353, %360, %361 : vector<1x128xf32>
    %363 = arith.select %352, %357, %362 : vector<1x128xf32>
    %c0_155 = arith.constant 0 : index
    %c0_156 = arith.constant 0 : index
    %364 = vector.load %arg8[%c0_155, %c0_156] : memref<1x128xf32, #tpu.memory_space<vmem>>, vector<1x128xf32>
    %cst_157 = arith.constant 0.000000e+00 : f32
    %365 = vector.broadcast %cst_157 : f32 to vector<1x128xf32>
    %366 = arith.select %353, %364, %365 : vector<1x128xf32>
    %367 = arith.select %352, %359, %366 : vector<1x128xf32>
    %c0_i32_158 = arith.constant 0 : i32
    %c7_i32_159 = arith.constant 7 : i32
    %368 = arith.maxsi %c0_i32_158, %349 : i32
    %369 = arith.minsi %c7_i32_159, %368 : i32
    %370 = arith.index_cast %369 : i32 to index
    %c0_160 = arith.constant 0 : index
    %371 = vector.load %arg9[%370, %c0_160] : memref<8x128xf32, #tpu.memory_space<vmem>>, vector<1x128xf32>
    %372 = arith.index_cast %c5_i32 : i32 to index
    %c0_161 = arith.constant 0 : index
    %373 = vector.load %arg4[%372, %c0_161] : memref<8x128xbf16, #tpu.memory_space<vmem>>, vector<1x128xbf16>
    %374 = arith.truncf %363 : vector<1x128xf32> to vector<1x128xbf16>
    %375 = arith.extf %373 : vector<1x128xbf16> to vector<1x128xf32>
    %376 = arith.select %347, %375, %371 : vector<1x128xf32>
    %377 = arith.truncf %376 : vector<1x128xf32> to vector<1x128xbf16>
    %c0_162 = arith.constant 0 : index
    %c0_163 = arith.constant 0 : index
    %378 = vector.load %arg5[%c0_162, %c0_163] : memref<256x512xbf16, #tpu.memory_space<vmem>>, vector<128x512xbf16>
    %cst_164 = arith.constant dense<0.000000e+00> : vector<1x512xf32>
    %379 = tpu.matmul %377, %378, %cst_164 {dimension_numbers = #tpu.dot_dimension_numbers<[1], [0], [0], [1], [0, 0, 1, 1], [], []>} : vector<1x128xbf16>, vector<128x512xbf16>, vector<1x512xf32> -> vector<1x512xf32>
    %c128_165 = arith.constant 128 : index
    %c0_166 = arith.constant 0 : index
    %380 = vector.load %arg5[%c128_165, %c0_166] : memref<256x512xbf16, #tpu.memory_space<vmem>>, vector<128x512xbf16>
    %cst_167 = arith.constant dense<0.000000e+00> : vector<1x512xf32>
    %381 = tpu.matmul %374, %380, %cst_167 {dimension_numbers = #tpu.dot_dimension_numbers<[1], [0], [0], [1], [0, 0, 1, 1], [], []>} : vector<1x128xbf16>, vector<128x512xbf16>, vector<1x512xf32> -> vector<1x512xf32>
    %382 = arith.addf %379, %381 : vector<1x512xf32>
    %c0_168 = arith.constant 0 : index
    %c0_169 = arith.constant 0 : index
    %383 = vector.load %arg6[%c0_168, %c0_169] : memref<1x512xf32, #tpu.memory_space<vmem>>, vector<1x512xf32>
    %384 = arith.addf %382, %383 : vector<1x512xf32>
    %385 = vector.extract_strided_slice %384 {offsets = [0, 0], sizes = [1, 128], strides = [1, 1]} : vector<1x512xf32> to vector<1x128xf32>
    %386 = arith.negf %385 : vector<1x128xf32>
    %387 = math.exp %386 : vector<1x128xf32>
    %cst_170 = arith.constant 1.000000e+00 : f32
    %388 = vector.broadcast %cst_170 : f32 to vector<1x128xf32>
    %389 = arith.addf %388, %387 : vector<1x128xf32>
    %390 = arith.divf %388, %389 : vector<1x128xf32>
    %391 = vector.extract_strided_slice %384 {offsets = [0, 128], sizes = [1, 128], strides = [1, 1]} : vector<1x512xf32> to vector<1x128xf32>
    %392 = arith.negf %391 : vector<1x128xf32>
    %393 = math.exp %392 : vector<1x128xf32>
    %cst_171 = arith.constant 1.000000e+00 : f32
    %394 = vector.broadcast %cst_171 : f32 to vector<1x128xf32>
    %395 = arith.addf %394, %393 : vector<1x128xf32>
    %396 = arith.divf %394, %395 : vector<1x128xf32>
    %397 = vector.extract_strided_slice %384 {offsets = [0, 256], sizes = [1, 128], strides = [1, 1]} : vector<1x512xf32> to vector<1x128xf32>
    %398 = arith.negf %397 : vector<1x128xf32>
    %399 = math.exp %398 : vector<1x128xf32>
    %cst_172 = arith.constant 1.000000e+00 : f32
    %400 = vector.broadcast %cst_172 : f32 to vector<1x128xf32>
    %401 = arith.addf %400, %399 : vector<1x128xf32>
    %402 = arith.divf %400, %401 : vector<1x128xf32>
    %403 = vector.extract_strided_slice %384 {offsets = [0, 384], sizes = [1, 128], strides = [1, 1]} : vector<1x512xf32> to vector<1x128xf32>
    %404 = math.tanh %403 : vector<1x128xf32>
    %405 = arith.mulf %390, %404 : vector<1x128xf32>
    %406 = arith.mulf %402, %367 : vector<1x128xf32>
    %407 = arith.addf %405, %406 : vector<1x128xf32>
    %408 = math.tanh %407 : vector<1x128xf32>
    %409 = arith.mulf %396, %408 : vector<1x128xf32>
    %410 = arith.index_cast %c5_i32 : i32 to index
    %c0_173 = arith.constant 0 : index
    %411 = vector.load %arg9[%410, %c0_173] : memref<8x128xf32, #tpu.memory_space<vmem>>, vector<1x128xf32>
    tpu.vector_store %arg9[%410, %c0_173], %409 {strides = array<i32>} : memref<8x128xf32, #tpu.memory_space<vmem>>, vector<1x128xf32>,
    %412 = arith.index_cast %c5_i32 : i32 to index
    %c0_174 = arith.constant 0 : index
    %413 = vector.load %arg10[%412, %c0_174] : memref<8x128xf32, #tpu.memory_space<vmem>>, vector<1x128xf32>
    tpu.vector_store %arg10[%412, %c0_174], %407 {strides = array<i32>} : memref<8x128xf32, #tpu.memory_space<vmem>>, vector<1x128xf32>,
    %c6_i32 = arith.constant 6 : i32
    %414 = arith.index_cast %c6_i32 : i32 to index
    %415 = memref.load %arg1[%414] : memref<8xi32, #tpu.memory_space<smem>>
    %c1_i32_175 = arith.constant 1 : i32
    %416 = arith.cmpi eq, %415, %c1_i32_175 : i32
    %417 = arith.index_cast %c6_i32 : i32 to index
    %418 = memref.load %arg2[%417] : memref<8xi32, #tpu.memory_space<smem>>
    %419 = arith.index_cast %c6_i32 : i32 to index
    %420 = memref.load %arg3[%419] : memref<8xi32, #tpu.memory_space<smem>>
    %c0_i32_176 = arith.constant 0 : i32
    %421 = arith.cmpi sge, %420, %c0_i32_176 : i32
    %c-2_i32_177 = arith.constant -2 : i32
    %422 = arith.cmpi eq, %420, %c-2_i32_177 : i32
    %c0_i32_178 = arith.constant 0 : i32
    %c7_i32_179 = arith.constant 7 : i32
    %423 = arith.maxsi %c0_i32_178, %420 : i32
    %424 = arith.minsi %c7_i32_179, %423 : i32
    %425 = arith.index_cast %424 : i32 to index
    %c0_180 = arith.constant 0 : index
    %426 = vector.load %arg9[%425, %c0_180] : memref<8x128xf32, #tpu.memory_space<vmem>>, vector<1x128xf32>
    %427 = arith.index_cast %424 : i32 to index
    %c0_181 = arith.constant 0 : index
    %428 = vector.load %arg10[%427, %c0_181] : memref<8x128xf32, #tpu.memory_space<vmem>>, vector<1x128xf32>
    %c0_182 = arith.constant 0 : index
    %c0_183 = arith.constant 0 : index
    %429 = vector.load %arg7[%c0_182, %c0_183] : memref<1x128xf32, #tpu.memory_space<vmem>>, vector<1x128xf32>
    %cst_184 = arith.constant 0.000000e+00 : f32
    %430 = vector.broadcast %cst_184 : f32 to vector<1x128xf32>
    %431 = arith.select %422, %429, %430 : vector<1x128xf32>
    %432 = arith.select %421, %426, %431 : vector<1x128xf32>
    %c0_185 = arith.constant 0 : index
    %c0_186 = arith.constant 0 : index
    %433 = vector.load %arg8[%c0_185, %c0_186] : memref<1x128xf32, #tpu.memory_space<vmem>>, vector<1x128xf32>
    %cst_187 = arith.constant 0.000000e+00 : f32
    %434 = vector.broadcast %cst_187 : f32 to vector<1x128xf32>
    %435 = arith.select %422, %433, %434 : vector<1x128xf32>
    %436 = arith.select %421, %428, %435 : vector<1x128xf32>
    %c0_i32_188 = arith.constant 0 : i32
    %c7_i32_189 = arith.constant 7 : i32
    %437 = arith.maxsi %c0_i32_188, %418 : i32
    %438 = arith.minsi %c7_i32_189, %437 : i32
    %439 = arith.index_cast %438 : i32 to index
    %c0_190 = arith.constant 0 : index
    %440 = vector.load %arg9[%439, %c0_190] : memref<8x128xf32, #tpu.memory_space<vmem>>, vector<1x128xf32>
    %441 = arith.index_cast %c6_i32 : i32 to index
    %c0_191 = arith.constant 0 : index
    %442 = vector.load %arg4[%441, %c0_191] : memref<8x128xbf16, #tpu.memory_space<vmem>>, vector<1x128xbf16>
    %443 = arith.truncf %432 : vector<1x128xf32> to vector<1x128xbf16>
    %444 = arith.extf %442 : vector<1x128xbf16> to vector<1x128xf32>
    %445 = arith.select %416, %444, %440 : vector<1x128xf32>
    %446 = arith.truncf %445 : vector<1x128xf32> to vector<1x128xbf16>
    %c0_192 = arith.constant 0 : index
    %c0_193 = arith.constant 0 : index
    %447 = vector.load %arg5[%c0_192, %c0_193] : memref<256x512xbf16, #tpu.memory_space<vmem>>, vector<128x512xbf16>
    %cst_194 = arith.constant dense<0.000000e+00> : vector<1x512xf32>
    %448 = tpu.matmul %446, %447, %cst_194 {dimension_numbers = #tpu.dot_dimension_numbers<[1], [0], [0], [1], [0, 0, 1, 1], [], []>} : vector<1x128xbf16>, vector<128x512xbf16>, vector<1x512xf32> -> vector<1x512xf32>
    %c128_195 = arith.constant 128 : index
    %c0_196 = arith.constant 0 : index
    %449 = vector.load %arg5[%c128_195, %c0_196] : memref<256x512xbf16, #tpu.memory_space<vmem>>, vector<128x512xbf16>
    %cst_197 = arith.constant dense<0.000000e+00> : vector<1x512xf32>
    %450 = tpu.matmul %443, %449, %cst_197 {dimension_numbers = #tpu.dot_dimension_numbers<[1], [0], [0], [1], [0, 0, 1, 1], [], []>} : vector<1x128xbf16>, vector<128x512xbf16>, vector<1x512xf32> -> vector<1x512xf32>
    %451 = arith.addf %448, %450 : vector<1x512xf32>
    %c0_198 = arith.constant 0 : index
    %c0_199 = arith.constant 0 : index
    %452 = vector.load %arg6[%c0_198, %c0_199] : memref<1x512xf32, #tpu.memory_space<vmem>>, vector<1x512xf32>
    %453 = arith.addf %451, %452 : vector<1x512xf32>
    %454 = vector.extract_strided_slice %453 {offsets = [0, 0], sizes = [1, 128], strides = [1, 1]} : vector<1x512xf32> to vector<1x128xf32>
    %455 = arith.negf %454 : vector<1x128xf32>
    %456 = math.exp %455 : vector<1x128xf32>
    %cst_200 = arith.constant 1.000000e+00 : f32
    %457 = vector.broadcast %cst_200 : f32 to vector<1x128xf32>
    %458 = arith.addf %457, %456 : vector<1x128xf32>
    %459 = arith.divf %457, %458 : vector<1x128xf32>
    %460 = vector.extract_strided_slice %453 {offsets = [0, 128], sizes = [1, 128], strides = [1, 1]} : vector<1x512xf32> to vector<1x128xf32>
    %461 = arith.negf %460 : vector<1x128xf32>
    %462 = math.exp %461 : vector<1x128xf32>
    %cst_201 = arith.constant 1.000000e+00 : f32
    %463 = vector.broadcast %cst_201 : f32 to vector<1x128xf32>
    %464 = arith.addf %463, %462 : vector<1x128xf32>
    %465 = arith.divf %463, %464 : vector<1x128xf32>
    %466 = vector.extract_strided_slice %453 {offsets = [0, 256], sizes = [1, 128], strides = [1, 1]} : vector<1x512xf32> to vector<1x128xf32>
    %467 = arith.negf %466 : vector<1x128xf32>
    %468 = math.exp %467 : vector<1x128xf32>
    %cst_202 = arith.constant 1.000000e+00 : f32
    %469 = vector.broadcast %cst_202 : f32 to vector<1x128xf32>
    %470 = arith.addf %469, %468 : vector<1x128xf32>
    %471 = arith.divf %469, %470 : vector<1x128xf32>
    %472 = vector.extract_strided_slice %453 {offsets = [0, 384], sizes = [1, 128], strides = [1, 1]} : vector<1x512xf32> to vector<1x128xf32>
    %473 = math.tanh %472 : vector<1x128xf32>
    %474 = arith.mulf %459, %473 : vector<1x128xf32>
    %475 = arith.mulf %471, %436 : vector<1x128xf32>
    %476 = arith.addf %474, %475 : vector<1x128xf32>
    %477 = math.tanh %476 : vector<1x128xf32>
    %478 = arith.mulf %465, %477 : vector<1x128xf32>
    %479 = arith.index_cast %c6_i32 : i32 to index
    %c0_203 = arith.constant 0 : index
    %480 = vector.load %arg9[%479, %c0_203] : memref<8x128xf32, #tpu.memory_space<vmem>>, vector<1x128xf32>
    tpu.vector_store %arg9[%479, %c0_203], %478 {strides = array<i32>} : memref<8x128xf32, #tpu.memory_space<vmem>>, vector<1x128xf32>,
    %481 = arith.index_cast %c6_i32 : i32 to index
    %c0_204 = arith.constant 0 : index
    %482 = vector.load %arg10[%481, %c0_204] : memref<8x128xf32, #tpu.memory_space<vmem>>, vector<1x128xf32>
    tpu.vector_store %arg10[%481, %c0_204], %476 {strides = array<i32>} : memref<8x128xf32, #tpu.memory_space<vmem>>, vector<1x128xf32>,
    %c7_i32_205 = arith.constant 7 : i32
    %483 = arith.index_cast %c7_i32_205 : i32 to index
    %484 = memref.load %arg1[%483] : memref<8xi32, #tpu.memory_space<smem>>
    %c1_i32_206 = arith.constant 1 : i32
    %485 = arith.cmpi eq, %484, %c1_i32_206 : i32
    %486 = arith.index_cast %c7_i32_205 : i32 to index
    %487 = memref.load %arg2[%486] : memref<8xi32, #tpu.memory_space<smem>>
    %488 = arith.index_cast %c7_i32_205 : i32 to index
    %489 = memref.load %arg3[%488] : memref<8xi32, #tpu.memory_space<smem>>
    %c0_i32_207 = arith.constant 0 : i32
    %490 = arith.cmpi sge, %489, %c0_i32_207 : i32
    %c-2_i32_208 = arith.constant -2 : i32
    %491 = arith.cmpi eq, %489, %c-2_i32_208 : i32
    %c0_i32_209 = arith.constant 0 : i32
    %c7_i32_210 = arith.constant 7 : i32
    %492 = arith.maxsi %c0_i32_209, %489 : i32
    %493 = arith.minsi %c7_i32_210, %492 : i32
    %494 = arith.index_cast %493 : i32 to index
    %c0_211 = arith.constant 0 : index
    %495 = vector.load %arg9[%494, %c0_211] : memref<8x128xf32, #tpu.memory_space<vmem>>, vector<1x128xf32>
    %496 = arith.index_cast %493 : i32 to index
    %c0_212 = arith.constant 0 : index
    %497 = vector.load %arg10[%496, %c0_212] : memref<8x128xf32, #tpu.memory_space<vmem>>, vector<1x128xf32>
    %c0_213 = arith.constant 0 : index
    %c0_214 = arith.constant 0 : index
    %498 = vector.load %arg7[%c0_213, %c0_214] : memref<1x128xf32, #tpu.memory_space<vmem>>, vector<1x128xf32>
    %cst_215 = arith.constant 0.000000e+00 : f32
    %499 = vector.broadcast %cst_215 : f32 to vector<1x128xf32>
    %500 = arith.select %491, %498, %499 : vector<1x128xf32>
    %501 = arith.select %490, %495, %500 : vector<1x128xf32>
    %c0_216 = arith.constant 0 : index
    %c0_217 = arith.constant 0 : index
    %502 = vector.load %arg8[%c0_216, %c0_217] : memref<1x128xf32, #tpu.memory_space<vmem>>, vector<1x128xf32>
    %cst_218 = arith.constant 0.000000e+00 : f32
    %503 = vector.broadcast %cst_218 : f32 to vector<1x128xf32>
    %504 = arith.select %491, %502, %503 : vector<1x128xf32>
    %505 = arith.select %490, %497, %504 : vector<1x128xf32>
    %c0_i32_219 = arith.constant 0 : i32
    %c7_i32_220 = arith.constant 7 : i32
    %506 = arith.maxsi %c0_i32_219, %487 : i32
    %507 = arith.minsi %c7_i32_220, %506 : i32
    %508 = arith.index_cast %507 : i32 to index
    %c0_221 = arith.constant 0 : index
    %509 = vector.load %arg9[%508, %c0_221] : memref<8x128xf32, #tpu.memory_space<vmem>>, vector<1x128xf32>
    %510 = arith.index_cast %c7_i32_205 : i32 to index
    %c0_222 = arith.constant 0 : index
    %511 = vector.load %arg4[%510, %c0_222] : memref<8x128xbf16, #tpu.memory_space<vmem>>, vector<1x128xbf16>
    %512 = arith.truncf %501 : vector<1x128xf32> to vector<1x128xbf16>
    %513 = arith.extf %511 : vector<1x128xbf16> to vector<1x128xf32>
    %514 = arith.select %485, %513, %509 : vector<1x128xf32>
    %515 = arith.truncf %514 : vector<1x128xf32> to vector<1x128xbf16>
    %c0_223 = arith.constant 0 : index
    %c0_224 = arith.constant 0 : index
    %516 = vector.load %arg5[%c0_223, %c0_224] : memref<256x512xbf16, #tpu.memory_space<vmem>>, vector<128x512xbf16>
    %cst_225 = arith.constant dense<0.000000e+00> : vector<1x512xf32>
    %517 = tpu.matmul %515, %516, %cst_225 {dimension_numbers = #tpu.dot_dimension_numbers<[1], [0], [0], [1], [0, 0, 1, 1], [], []>} : vector<1x128xbf16>, vector<128x512xbf16>, vector<1x512xf32> -> vector<1x512xf32>
    %c128_226 = arith.constant 128 : index
    %c0_227 = arith.constant 0 : index
    %518 = vector.load %arg5[%c128_226, %c0_227] : memref<256x512xbf16, #tpu.memory_space<vmem>>, vector<128x512xbf16>
    %cst_228 = arith.constant dense<0.000000e+00> : vector<1x512xf32>
    %519 = tpu.matmul %512, %518, %cst_228 {dimension_numbers = #tpu.dot_dimension_numbers<[1], [0], [0], [1], [0, 0, 1, 1], [], []>} : vector<1x128xbf16>, vector<128x512xbf16>, vector<1x512xf32> -> vector<1x512xf32>
    %520 = arith.addf %517, %519 : vector<1x512xf32>
    %c0_229 = arith.constant 0 : index
    %c0_230 = arith.constant 0 : index
    %521 = vector.load %arg6[%c0_229, %c0_230] : memref<1x512xf32, #tpu.memory_space<vmem>>, vector<1x512xf32>
    %522 = arith.addf %520, %521 : vector<1x512xf32>
    %523 = vector.extract_strided_slice %522 {offsets = [0, 0], sizes = [1, 128], strides = [1, 1]} : vector<1x512xf32> to vector<1x128xf32>
    %524 = arith.negf %523 : vector<1x128xf32>
    %525 = math.exp %524 : vector<1x128xf32>
    %cst_231 = arith.constant 1.000000e+00 : f32
    %526 = vector.broadcast %cst_231 : f32 to vector<1x128xf32>
    %527 = arith.addf %526, %525 : vector<1x128xf32>
    %528 = arith.divf %526, %527 : vector<1x128xf32>
    %529 = vector.extract_strided_slice %522 {offsets = [0, 128], sizes = [1, 128], strides = [1, 1]} : vector<1x512xf32> to vector<1x128xf32>
    %530 = arith.negf %529 : vector<1x128xf32>
    %531 = math.exp %530 : vector<1x128xf32>
    %cst_232 = arith.constant 1.000000e+00 : f32
    %532 = vector.broadcast %cst_232 : f32 to vector<1x128xf32>
    %533 = arith.addf %532, %531 : vector<1x128xf32>
    %534 = arith.divf %532, %533 : vector<1x128xf32>
    %535 = vector.extract_strided_slice %522 {offsets = [0, 256], sizes = [1, 128], strides = [1, 1]} : vector<1x512xf32> to vector<1x128xf32>
    %536 = arith.negf %535 : vector<1x128xf32>
    %537 = math.exp %536 : vector<1x128xf32>
    %cst_233 = arith.constant 1.000000e+00 : f32
    %538 = vector.broadcast %cst_233 : f32 to vector<1x128xf32>
    %539 = arith.addf %538, %537 : vector<1x128xf32>
    %540 = arith.divf %538, %539 : vector<1x128xf32>
    %541 = vector.extract_strided_slice %522 {offsets = [0, 384], sizes = [1, 128], strides = [1, 1]} : vector<1x512xf32> to vector<1x128xf32>
    %542 = math.tanh %541 : vector<1x128xf32>
    %543 = arith.mulf %528, %542 : vector<1x128xf32>
    %544 = arith.mulf %540, %505 : vector<1x128xf32>
    %545 = arith.addf %543, %544 : vector<1x128xf32>
    %546 = math.tanh %545 : vector<1x128xf32>
    %547 = arith.mulf %534, %546 : vector<1x128xf32>
    %548 = arith.index_cast %c7_i32_205 : i32 to index
    %c0_234 = arith.constant 0 : index
    %549 = vector.load %arg9[%548, %c0_234] : memref<8x128xf32, #tpu.memory_space<vmem>>, vector<1x128xf32>
    tpu.vector_store %arg9[%548, %c0_234], %547 {strides = array<i32>} : memref<8x128xf32, #tpu.memory_space<vmem>>, vector<1x128xf32>,
    %550 = arith.index_cast %c7_i32_205 : i32 to index
    %c0_235 = arith.constant 0 : index
    %551 = vector.load %arg10[%550, %c0_235] : memref<8x128xf32, #tpu.memory_space<vmem>>, vector<1x128xf32>
    tpu.vector_store %arg10[%550, %c0_235], %545 {strides = array<i32>} : memref<8x128xf32, #tpu.memory_space<vmem>>, vector<1x128xf32>,
    %c8_i32 = arith.constant 8 : i32
    return
  }
  func.func @transform_0(%arg0: i32, %arg1: memref<8xi32, #tpu.memory_space<smem>>, %arg2: memref<8xi32, #tpu.memory_space<smem>>, %arg3: memref<8xi32, #tpu.memory_space<smem>>) -> (i32, i32) {
    %c0_i32 = arith.constant 0 : i32
    %c0_i32_0 = arith.constant 0 : i32
    %c0_i32_1 = arith.constant 0 : i32
    return %c0_i32, %c0_i32_0 : i32, i32
  }
  func.func @transform_1(%arg0: i32, %arg1: memref<8xi32, #tpu.memory_space<smem>>, %arg2: memref<8xi32, #tpu.memory_space<smem>>, %arg3: memref<8xi32, #tpu.memory_space<smem>>) -> (i32, i32) {
    %c0_i32 = arith.constant 0 : i32
    %c0_i32_0 = arith.constant 0 : i32
    %c0_i32_1 = arith.constant 0 : i32
    return %c0_i32, %c0_i32_0 : i32, i32
  }
  func.func @transform_2(%arg0: i32, %arg1: memref<8xi32, #tpu.memory_space<smem>>, %arg2: memref<8xi32, #tpu.memory_space<smem>>, %arg3: memref<8xi32, #tpu.memory_space<smem>>) -> (i32, i32) {
    %c0_i32 = arith.constant 0 : i32
    %c0_i32_0 = arith.constant 0 : i32
    %c0_i32_1 = arith.constant 0 : i32
    return %c0_i32, %c0_i32_0 : i32, i32
  }
  func.func @transform_3(%arg0: i32, %arg1: memref<8xi32, #tpu.memory_space<smem>>, %arg2: memref<8xi32, #tpu.memory_space<smem>>, %arg3: memref<8xi32, #tpu.memory_space<smem>>) -> (i32, i32) {
    %c0_i32 = arith.constant 0 : i32
    %c0_i32_0 = arith.constant 0 : i32
    %c0_i32_1 = arith.constant 0 : i32
    return %c0_i32, %c0_i32_0 : i32, i32
  }
  func.func @transform_4(%arg0: i32, %arg1: memref<8xi32, #tpu.memory_space<smem>>, %arg2: memref<8xi32, #tpu.memory_space<smem>>, %arg3: memref<8xi32, #tpu.memory_space<smem>>) -> (i32, i32) {
    %c0_i32 = arith.constant 0 : i32
    %c0_i32_0 = arith.constant 0 : i32
    %c0_i32_1 = arith.constant 0 : i32
    return %c0_i32, %c0_i32_0 : i32, i32
  }
  func.func @transform_5(%arg0: i32, %arg1: memref<8xi32, #tpu.memory_space<smem>>, %arg2: memref<8xi32, #tpu.memory_space<smem>>, %arg3: memref<8xi32, #tpu.memory_space<smem>>) -> (i32, i32) {
    %c0_i32 = arith.constant 0 : i32
    %c0_i32_0 = arith.constant 0 : i32
    %c0_i32_1 = arith.constant 0 : i32
    return %c0_i32, %c0_i32_0 : i32, i32
  }
  func.func @transform_6(%arg0: i32, %arg1: memref<8xi32, #tpu.memory_space<smem>>, %arg2: memref<8xi32, #tpu.memory_space<smem>>, %arg3: memref<8xi32, #tpu.memory_space<smem>>) -> (i32, i32) {
    %c0_i32 = arith.constant 0 : i32
    %c0_i32_0 = arith.constant 0 : i32
    %c0_i32_1 = arith.constant 0 : i32
    return %c0_i32, %c0_i32_0 : i32, i32
  }
}

</mosaic_0001>

<llo_original>
// kernel: _tree_lstm_call.1
$region0: #{_tree_lstm_call.1}
  #allocation0 [shape = 'u32[]', space=smem, size = 0x4, offset = 0x4, fixed_abs, tag = 'smem constant byte address 0x4 - core index']
  #allocation1 [shape = 'u32[144,128]{1,0:T(1,128)}', space=vmem, size = 0x12000, scoped, tag = 'internal scratch']
  #allocation2 [shape = 's32[1]{0}', space=sflag, size = 0x4, scoped, tag = 'scoped memory for _tree_lstm_call.1']
  #allocation3 [shape = 'u8[512]{0}', space=smem, size = 0x200, scoped, tag = 'prefetched SMEM operand 0']
  #allocation4 [shape = 'u8[512]{0}', space=smem, size = 0x200, scoped, tag = 'prefetched SMEM operand 1']
  #allocation5 [shape = 'u8[512]{0}', space=smem, size = 0x200, scoped, tag = 'prefetched SMEM operand 2']
  %s0 = inlined_call_operand.hbm [shape: s32[8], index: 0, kind: input, shape index: {}]
  %s1 = inlined_call_operand.vmem [shape: s32[8], index: 1, kind: input, shape index: {}]
  %s2 = inlined_call_operand.vmem [shape: s32[8], index: 2, kind: input, shape index: {}]
  %s3 = inlined_call_operand.vmem [shape: bf16[8,128], index: 3, kind: input, shape index: {}]
  %s4 = inlined_call_operand.hbm [shape: bf16[256,512], index: 4, kind: input, shape index: {}]
  %s5 = inlined_call_operand.vmem [shape: f32[1,512], index: 5, kind: input, shape index: {}]
  %s6 = inlined_call_operand.vmem [shape: f32[1,128], index: 6, kind: input, shape index: {}]
  %s7 = inlined_call_operand.vmem [shape: f32[1,128], index: 7, kind: input, shape index: {}]
  %s8 = inlined_call_operand.hbm [shape: f32[8,128], index: 8, kind: output, shape index: {0}]
  %s9 = inlined_call_operand.hbm [shape: f32[8,128], index: 9, kind: output, shape index: {1}]
  %10 = xla_tuple %s8, %s9
  %s11 = sld [smem:[#allocation0]]
  $region42: #{_tree_lstm_call.1} parent=0
    _
  %s13 = ssub.s32 1, %s11
  %s14 = scalar_select 0, %s13, %s11
  %16 = dma.hbm_to_smem %s0, 16, [#allocation3], [#allocation2]
  %s17 = sshll.u32 %s1, 4
  %s18 = int_to_ptr.vmem [resolvable:$true] %s17
  %20 = dma.vmem_to_smem %s18, 16, [#allocation4], [#allocation2]
  %s21 = sshll.u32 %s2, 4
  %s22 = int_to_ptr.vmem [resolvable:$true] %s21
  %24 = dma.vmem_to_smem %s22, 16, [#allocation5], [#allocation2]
  %25 = dma.done [#allocation2], 48
  %26 = sfence
  $region1: #{_tree_lstm_call.1} parent=0
    #allocation6 [shape = 'u8[262144]{0}', space=vmem, size = 0x40000, scoped, tag = 'input window, operand 4, single buffered']
    #allocation7 [shape = 's32[1]{0}', space=sflag, size = 0x4, scoped, tag = 'scoped memory for _tree_lstm_call.1']
    #allocation8 [shape = 's32[1]{0}', space=sflag, size = 0x4, scoped, tag = 'scoped memory for _tree_lstm_call.1']
    #allocation9 [shape = 'u8[4096]{0}', space=vmem, size = 0x1000, scoped, tag = 'output window, operand 0, single buffered']
    #allocation10 [shape = 'u8[4096]{0}', space=vmem, size = 0x1000, scoped, tag = 'output window, operand 1, single buffered']
    #allocation11 [shape = 's32[1]{0}', space=sflag, size = 0x4, scoped, tag = 'scoped memory for _tree_lstm_call.1']
    %27 = vsyncpa [#allocation7], 0
    %28 = vsyncpa [#allocation8], 0
    %29 = vsyncpa [#allocation11], 0
    // Predicated region
    $region2: #{_tree_lstm_call.1} parent=1 // pred_check
      _
    $region3: #{_tree_lstm_call.1} parent=1 // pred_check_branch
      %31 = sbr.rel (0) target = $region5
    $region4: #{_tree_lstm_call.1} parent=1 // pred_region
      _
    $region5: #{_tree_lstm_call.1} parent=1 // pred_fallthru
      _
    // Predicated region
    $region6: #{_tree_lstm_call.1} parent=1 // pred_check
      _
    $region7: #{_tree_lstm_call.1} parent=1 // pred_check_branch
      %33 = sbr.rel (0) target = $region9
    $region8: #{_tree_lstm_call.1} parent=1 // pred_region
      %s35 = ssub.s32 8192, 8192
      %36 = vsyncadd [#allocation7], %s35
      %s37 = sshll.u32 [#allocation6], 4
      %s38 = int_to_ptr.vmem [resolvable:$true] %s37
      %43 = dma.hbm_to_vmem [thread:$0]  %s4, 8192, %s38, [#allocation7], 256, 256, 16
    $region9: #{_tree_lstm_call.1} parent=1 // pred_fallthru
      _
    // Predicated region
    $region10: #{_tree_lstm_call.1} parent=1 // pred_check
      _
    $region11: #{_tree_lstm_call.1} parent=1 // pred_check_branch
      %45 = sbr.rel (0) target = $region13
    $region12: #{_tree_lstm_call.1} parent=1 // pred_region
      _
    $region13: #{_tree_lstm_call.1} parent=1 // pred_fallthru
      _
    // Predicated region
    $region14: #{_tree_lstm_call.1} parent=1 // pred_check
      _
    $region15: #{_tree_lstm_call.1} parent=1 // pred_check_branch
      %47 = sbr.rel (0) target = $region17
    $region16: #{_tree_lstm_call.1} parent=1 // pred_region
      _
    $region17: #{_tree_lstm_call.1} parent=1 // pred_fallthru
      _
    // Predicated region
    $region18: #{_tree_lstm_call.1} parent=1 // pred_check
      _
    $region19: #{_tree_lstm_call.1} parent=1 // pred_check_branch
      %49 = sbr.rel (0) target = $region21
    $region20: #{_tree_lstm_call.1} parent=1 // pred_region
      _
    $region21: #{_tree_lstm_call.1} parent=1 // pred_fallthru
      _
    // Predicated region
    $region22: #{_tree_lstm_call.1} parent=1 // pred_check
      _
    $region23: #{_tree_lstm_call.1} parent=1 // pred_check_branch
      %51 = sbr.rel (0) target = $region25
    $region24: #{_tree_lstm_call.1} parent=1 // pred_region
      %52 = dma.done [#allocation7], 8192
    $region25: #{_tree_lstm_call.1} parent=1 // pred_fallthru
      _
    %s54 = sld [smem:[#allocation3]]
    %p55 = scmp.eq.s32.totalorder %s54, 1
    %s56 = sld [smem:[#allocation4]]
    %s57 = sld [smem:[#allocation5]]
    %p58 = scmp.ge.s32.totalorder %s57, 0
    %p59 = scmp.eq.s32.totalorder %s57, 4294967294
    %p60 = scmp.gt.s32.totalorder %s57, 0
    %s61 = scalar_select %p60, %s57, 0
    %p62 = scmp.lt.s32.totalorder %s61, 7
    %s63 = scalar_select %p62, %s61, 7
    %s64 = scalar_lea.vmem [#allocation9], %s63
    %v65 = vld [vmem:[%s64] sm:$0x1]
    %s66 = scalar_lea.vmem [#allocation10], %s63
    %v67 = vld [vmem:[%s66] sm:$0x1]
    %v68 = vld [vmem:[%s6] sm:$0x1]
    %s69 = scalar_select %p59, 1, 0
    %v70 = vstv %s69
    %vm71 = vcmp.eq.s32.totalorder %v70, 1
    %v72 = vsel %vm71, %v68, 0.0
    %s73 = scalar_select %p58, 1, 0
    %v74 = vstv %s73
    %vm75 = vcmp.eq.s32.totalorder %v74, 1
    %v76 = vsel %vm75, %v65, %v72
    %v77 = vld [vmem:[%s7] sm:$0x1]
    %v78 = vsel %vm71, %v77, 0.0
    %v79 = vsel %vm75, %v67, %v78
    %p80 = scmp.gt.s32.totalorder %s56, 0
    %s81 = scalar_select %p80, %s56, 0
    %p82 = scmp.lt.s32.totalorder %s81, 7
    %s83 = scalar_select %p82, %s81, 7
    %s84 = scalar_lea.vmem [#allocation9], %s83
    %v85 = vld [vmem:[%s84] sm:$0x1]
    %v86 = vld [vmem:[%s3] sm:$0x1]
    %v87 = vpack.c.bf16 %v76, %v76
    %v88 = vunpack.c.l.bf16 %v86
    %s89 = scalar_select %p55, 1, 0
    %v90 = vstv %s89
    %vm91 = vcmp.eq.s32.totalorder %v90, 1
    %v92 = vsel %vm91, %v88, %v85
    %v93 = vpack.c.bf16 %v92, %v92
    %v94 = vld [vmem:[#allocation6] sm:$0xff]
    %v95 = vld [vmem:[#allocation6 + $0x8] sm:$0xff]
    %v96 = vld [vmem:[#allocation6 + $0x10] sm:$0xff]
    %v97 = vld [vmem:[#allocation6 + $0x18] sm:$0xff]
    %v98 = vld [vmem:[#allocation6 + $0x20] sm:$0xff]
    %v99 = vld [vmem:[#allocation6 + $0x28] sm:$0xff]
    %v100 = vld [vmem:[#allocation6 + $0x30] sm:$0xff]
    %v101 = vld [vmem:[#allocation6 + $0x38] sm:$0xff]
    %v102 = vld [vmem:[#allocation6 + $0x40] sm:$0xff]
    %v103 = vld [vmem:[#allocation6 + $0x48] sm:$0xff]
    %v104 = vld [vmem:[#allocation6 + $0x50] sm:$0xff]
    %v105 = vld [vmem:[#allocation6 + $0x58] sm:$0xff]
    %v106 = vld [vmem:[#allocation6 + $0x60] sm:$0xff]
    %v107 = vld [vmem:[#allocation6 + $0x68] sm:$0xff]
    %v108 = vld [vmem:[#allocation6 + $0x70] sm:$0xff]
    %v109 = vld [vmem:[#allocation6 + $0x78] sm:$0xff]
    %v110 = vld [vmem:[#allocation6 + $0x80] sm:$0xff]
    %v111 = vld [vmem:[#allocation6 + $0x88] sm:$0xff]
    %v112 = vld [vmem:[#allocation6 + $0x90] sm:$0xff]
    %v113 = vld [vmem:[#allocation6 + $0x98] sm:$0xff]
    %v114 = vld [vmem:[#allocation6 + $0xa0] sm:$0xff]
    %v115 = vld [vmem:[#allocation6 + $0xa8] sm:$0xff]
    %v116 = vld [vmem:[#allocation6 + $0xb0] sm:$0xff]
    %v117 = vld [vmem:[#allocation6 + $0xb8] sm:$0xff]
    %v118 = vld [vmem:[#allocation6 + $0xc0] sm:$0xff]
    %v119 = vld [vmem:[#allocation6 + $0xc8] sm:$0xff]
    %v120 = vld [vmem:[#allocation6 + $0xd0] sm:$0xff]
    %v121 = vld [vmem:[#allocation6 + $0xd8] sm:$0xff]
    %v122 = vld [vmem:[#allocation6 + $0xe0] sm:$0xff]
    %v123 = vld [vmem:[#allocation6 + $0xe8] sm:$0xff]
    %v124 = vld [vmem:[#allocation6 + $0xf0] sm:$0xff]
    %v125 = vld [vmem:[#allocation6 + $0xf8] sm:$0xff]
    %v126 = vld [vmem:[#allocation6 + $0x100] sm:$0xff]
    %v127 = vld [vmem:[#allocation6 + $0x108] sm:$0xff]
    %v128 = vld [vmem:[#allocation6 + $0x110] sm:$0xff]
    %v129 = vld [vmem:[#allocation6 + $0x118] sm:$0xff]
    %v130 = vld [vmem:[#allocation6 + $0x120] sm:$0xff]
    %v131 = vld [vmem:[#allocation6 + $0x128] sm:$0xff]
    %v132 = vld [vmem:[#allocation6 + $0x130] sm:$0xff]
    %v133 = vld [vmem:[#allocation6 + $0x138] sm:$0xff]
    %v134 = vld [vmem:[#allocation6 + $0x140] sm:$0xff]
    %v135 = vld [vmem:[#allocation6 + $0x148] sm:$0xff]
    %v136 = vld [vmem:[#allocation6 + $0x150] sm:$0xff]
    %v137 = vld [vmem:[#allocation6 + $0x158] sm:$0xff]
    %v138 = vld [vmem:[#allocation6 + $0x160] sm:$0xff]
    %v139 = vld [vmem:[#allocation6 + $0x168] sm:$0xff]
    %v140 = vld [vmem:[#allocation6 + $0x170] sm:$0xff]
    %v141 = vld [vmem:[#allocation6 + $0x178] sm:$0xff]
    %v142 = vld [vmem:[#allocation6 + $0x180] sm:$0xff]
    %v143 = vld [vmem:[#allocation6 + $0x188] sm:$0xff]
    %v144 = vld [vmem:[#allocation6 + $0x190] sm:$0xff]
    %v145 = vld [vmem:[#allocation6 + $0x198] sm:$0xff]
    %v146 = vld [vmem:[#allocation6 + $0x1a0] sm:$0xff]
    %v147 = vld [vmem:[#allocation6 + $0x1a8] sm:$0xff]
    %v148 = vld [vmem:[#allocation6 + $0x1b0] sm:$0xff]
    %v149 = vld [vmem:[#allocation6 + $0x1b8] sm:$0xff]
    %v150 = vld [vmem:[#allocation6 + $0x1c0] sm:$0xff]
    %v151 = vld [vmem:[#allocation6 + $0x1c8] sm:$0xff]
    %v152 = vld [vmem:[#allocation6 + $0x1d0] sm:$0xff]
    %v153 = vld [vmem:[#allocation6 + $0x1d8] sm:$0xff]
    %v154 = vld [vmem:[#allocation6 + $0x1e0] sm:$0xff]
    %v155 = vld [vmem:[#allocation6 + $0x1e8] sm:$0xff]
    %v156 = vld [vmem:[#allocation6 + $0x1f0] sm:$0xff]
    %v157 = vld [vmem:[#allocation6 + $0x1f8] sm:$0xff]
    %v190 = vunpack.c.l.b16 %v126
    %v191 = vunpack.c.h.b16 %v126
    %v192 = vunpack.c.l.b16 %v127
    %v193 = vunpack.c.h.b16 %v127
    %v194 = vunpack.c.l.b16 %v128
    %v195 = vunpack.c.h.b16 %v128
    %v196 = vunpack.c.l.b16 %v129
    %v197 = vunpack.c.h.b16 %v129
    %v198 = vunpack.c.l.b16 %v130
    %v199 = vunpack.c.h.b16 %v130
    %v200 = vunpack.c.l.b16 %v131
    %v201 = vunpack.c.h.b16 %v131
    %v202 = vunpack.c.l.b16 %v132
    %v203 = vunpack.c.h.b16 %v132
    %v204 = vunpack.c.l.b16 %v133
    %v205 = vunpack.c.h.b16 %v133
    %v206 = vunpack.c.l.b16 %v134
    %v207 = vunpack.c.h.b16 %v134
    %v208 = vunpack.c.l.b16 %v135
    %v209 = vunpack.c.h.b16 %v135
    %v210 = vunpack.c.l.b16 %v136
    %v211 = vunpack.c.h.b16 %v136
    %v212 = vunpack.c.l.b16 %v137
    %v213 = vunpack.c.h.b16 %v137
    %v214 = vunpack.c.l.b16 %v138
    %v215 = vunpack.c.h.b16 %v138
    %v216 = vunpack.c.l.b16 %v139
    %v217 = vunpack.c.h.b16 %v139
    %v218 = vunpack.c.l.b16 %v140
    %v219 = vunpack.c.h.b16 %v140
    %v220 = vunpack.c.l.b16 %v141
    %v221 = vunpack.c.h.b16 %v141
    %v222 = vunpack.c.l.b16 %v142
    %v223 = vunpack.c.h.b16 %v142
    %v224 = vunpack.c.l.b16 %v143
    %v225 = vunpack.c.h.b16 %v143
    %v226 = vunpack.c.l.b16 %v144
    %v227 = vunpack.c.h.b16 %v144
    %v228 = vunpack.c.l.b16 %v145
    %v229 = vunpack.c.h.b16 %v145
    %v230 = vunpack.c.l.b16 %v146
    %v231 = vunpack.c.h.b16 %v146
    %v232 = vunpack.c.l.b16 %v147
    %v233 = vunpack.c.h.b16 %v147
    %v234 = vunpack.c.l.b16 %v148
    %v235 = vunpack.c.h.b16 %v148
    %v236 = vunpack.c.l.b16 %v149
    %v237 = vunpack.c.h.b16 %v149
    %v238 = vunpack.c.l.b16 %v150
    %v239 = vunpack.c.h.b16 %v150
    %v240 = vunpack.c.l.b16 %v151
    %v241 = vunpack.c.h.b16 %v151
    %v242 = vunpack.c.l.b16 %v152
    %v243 = vunpack.c.h.b16 %v152
    %v244 = vunpack.c.l.b16 %v153
    %v245 = vunpack.c.h.b16 %v153
    %v246 = vunpack.c.l.b16 %v154
    %v247 = vunpack.c.h.b16 %v154
    %v248 = vunpack.c.l.b16 %v155
    %v249 = vunpack.c.h.b16 %v155
    %v250 = vunpack.c.l.b16 %v156
    %v251 = vunpack.c.h.b16 %v156
    %v252 = vunpack.c.l.b16 %v157
    %v253 = vunpack.c.h.b16 %v157
    %v254 = vpack.c.b16 %v194, %v190
    %v255 = vpack.c.b16 %v195, %v191
    %v256 = vpack.c.b16 %v196, %v192
    %v257 = vpack.c.b16 %v197, %v193
    %v258 = vpack.c.b16 %v202, %v198
    %v259 = vpack.c.b16 %v203, %v199
    %v260 = vpack.c.b16 %v204, %v200
    %v261 = vpack.c.b16 %v205, %v201
    %v262 = vpack.c.b16 %v210, %v206
    %v263 = vpack.c.b16 %v211, %v207
    %v264 = vpack.c.b16 %v212, %v208
    %v265 = vpack.c.b16 %v213, %v209
    %v266 = vpack.c.b16 %v218, %v214
    %v267 = vpack.c.b16 %v219, %v215
    %v268 = vpack.c.b16 %v220, %v216
    %v269 = vpack.c.b16 %v221, %v217
    %v270 = vpack.c.b16 %v226, %v222
    %v271 = vpack.c.b16 %v227, %v223
    %v272 = vpack.c.b16 %v228, %v224
    %v273 = vpack.c.b16 %v229, %v225
    %v274 = vpack.c.b16 %v234, %v230
    %v275 = vpack.c.b16 %v235, %v231
    %v276 = vpack.c.b16 %v236, %v232
    %v277 = vpack.c.b16 %v237, %v233
    %v278 = vpack.c.b16 %v242, %v238
    %v279 = vpack.c.b16 %v243, %v239
    %v280 = vpack.c.b16 %v244, %v240
    %v281 = vpack.c.b16 %v245, %v241
    %v282 = vpack.c.b16 %v250, %v246
    %v283 = vpack.c.b16 %v251, %v247
    %v284 = vpack.c.b16 %v252, %v248
    %v285 = vpack.c.b16 %v253, %v249
    %318 = vmatprep.subr.bf16.mxu0 %v255
    %319 = vmatpush1.bf16.msra.mxu0 %v254
    %320 = vmatprep.subr.bf16.mxu0 %v259
    %321 = vmatpush1.bf16.msra.mxu0 %v258
    %322 = vmatprep.subr.bf16.mxu0 %v263
    %323 = vmatpush1.bf16.msra.mxu0 %v262
    %324 = vmatprep.subr.bf16.mxu0 %v267
    %325 = vmatpush1.bf16.msra.mxu0 %v266
    %326 = vmatprep.subr.bf16.mxu0 %v271
    %327 = vmatpush1.bf16.msra.mxu0 %v270
    %328 = vmatprep.subr.bf16.mxu0 %v275
    %329 = vmatpush1.bf16.msra.mxu0 %v274
    %330 = vmatprep.subr.bf16.mxu0 %v279
    %331 = vmatpush1.bf16.msra.mxu0 %v278
    %332 = vmatprep.subr.bf16.mxu0 %v283
    %333 = vmatpush1.bf16.msra.mxu0 %v282
    %334 = vmatprep.subr.bf16.mxu0 0
    %335 = vmatpush1.bf16.msra.mxu0 0
    %336 = vmatprep.subr.bf16.mxu0 0
    %337 = vmatpush1.bf16.msra.mxu0 0
    %338 = vmatprep.subr.bf16.mxu0 0
    %339 = vmatpush1.bf16.msra.mxu0 0
    %340 = vmatprep.subr.bf16.mxu0 0
    %341 = vmatpush1.bf16.msra.mxu0 0
    %342 = vmatprep.subr.bf16.mxu0 0
    %343 = vmatpush1.bf16.msra.mxu0 0
    %344 = vmatprep.subr.bf16.mxu0 0
    %345 = vmatpush1.bf16.msra.mxu0 0
    %346 = vmatprep.subr.bf16.mxu0 0
    %347 = vmatpush1.bf16.msra.mxu0 0
    %348 = vmatprep.subr.bf16.mxu0 0
    %349 = vmatpush1.bf16.msra.mxu0 0
    %350 = vmatprep.mubr.bf16.mxu0 0
    %351 = vmatmul.mubr.bf16.gmra.mrb[0].mxu0 %v87
    %v352 = vpop.f32.mrb[0].mxu0
    %v353 = vadd.f32 0.0, %v352
    %v354 = vpop.f32.mrb[0].mxu0
    %v355 = vadd.f32 0.0, %v354
    %v356 = vpop.f32.mrb[0].mxu0
    %v357 = vpop.f32.mrb[0].mxu0
    %358 = vdwg.mxu0
    %359 = vmatprep.subr.bf16.mxu0 %v257
    %360 = vmatpush1.bf16.msra.mxu0 %v256
    %361 = vmatprep.subr.bf16.mxu0 %v261
    %362 = vmatpush1.bf16.msra.mxu0 %v260
    %363 = vmatprep.subr.bf16.mxu0 %v265
    %364 = vmatpush1.bf16.msra.mxu0 %v264
    %365 = vmatprep.subr.bf16.mxu0 %v269
    %366 = vmatpush1.bf16.msra.mxu0 %v268
    %367 = vmatprep.subr.bf16.mxu0 %v273
    %368 = vmatpush1.bf16.msra.mxu0 %v272
    %369 = vmatprep.subr.bf16.mxu0 %v277
    %370 = vmatpush1.bf16.msra.mxu0 %v276
    %371 = vmatprep.subr.bf16.mxu0 %v281
    %372 = vmatpush1.bf16.msra.mxu0 %v280
    %373 = vmatprep.subr.bf16.mxu0 %v285
    %374 = vmatpush1.bf16.msra.mxu0 %v284
    %375 = vmatprep.subr.bf16.mxu0 0
    %376 = vmatpush1.bf16.msra.mxu0 0
    %377 = vmatprep.subr.bf16.mxu0 0
    %378 = vmatpush1.bf16.msra.mxu0 0
    %379 = vmatprep.subr.bf16.mxu0 0
    %380 = vmatpush1.bf16.msra.mxu0 0
    %381 = vmatprep.subr.bf16.mxu0 0
    %382 = vmatpush1.bf16.msra.mxu0 0
    %383 = vmatprep.subr.bf16.mxu0 0
    %384 = vmatpush1.bf16.msra.mxu0 0
    %385 = vmatprep.subr.bf16.mxu0 0
    %386 = vmatpush1.bf16.msra.mxu0 0
    %387 = vmatprep.subr.bf16.mxu0 0
    %388 = vmatpush1.bf16.msra.mxu0 0
    %389 = vmatprep.subr.bf16.mxu0 0
    %390 = vmatpush1.bf16.msra.mxu0 0
    %391 = vmatprep.mubr.bf16.mxu0 0
    %392 = vmatmul.mubr.bf16.gmra.mrb[0].mxu0 %v87
    %v393 = vpop.f32.mrb[0].mxu0
    %v394 = vadd.f32 0.0, %v393
    %v395 = vpop.f32.mrb[0].mxu0
    %v396 = vadd.f32 0.0, %v395
    %v397 = vpop.f32.mrb[0].mxu0
    %v398 = vpop.f32.mrb[0].mxu0
    %399 = vdwg.mxu0
    %v432 = vunpack.c.l.b16 %v94
    %v433 = vunpack.c.h.b16 %v94
    %v434 = vunpack.c.l.b16 %v95
    %v435 = vunpack.c.h.b16 %v95
    %v436 = vunpack.c.l.b16 %v96
    %v437 = vunpack.c.h.b16 %v96
    %v438 = vunpack.c.l.b16 %v97
    %v439 = vunpack.c.h.b16 %v97
    %v440 = vunpack.c.l.b16 %v98
    %v441 = vunpack.c.h.b16 %v98
    %v442 = vunpack.c.l.b16 %v99
    %v443 = vunpack.c.h.b16 %v99
    %v444 = vunpack.c.l.b16 %v100
    %v445 = vunpack.c.h.b16 %v100
    %v446 = vunpack.c.l.b16 %v101
    %v447 = vunpack.c.h.b16 %v101
    %v448 = vunpack.c.l.b16 %v102
    %v449 = vunpack.c.h.b16 %v102
    %v450 = vunpack.c.l.b16 %v103
    %v451 = vunpack.c.h.b16 %v103
    %v452 = vunpack.c.l.b16 %v104
    %v453 = vunpack.c.h.b16 %v104
    %v454 = vunpack.c.l.b16 %v105
    %v455 = vunpack.c.h.b16 %v105
    %v456 = vunpack.c.l.b16 %v106
    %v457 = vunpack.c.h.b16 %v106
    %v458 = vunpack.c.l.b16 %v107
    %v459 = vunpack.c.h.b16 %v107
    %v460 = vunpack.c.l.b16 %v108
    %v461 = vunpack.c.h.b16 %v108
    %v462 = vunpack.c.l.b16 %v109
    %v463 = vunpack.c.h.b16 %v109
    %v464 = vunpack.c.l.b16 %v110
    %v465 = vunpack.c.h.b16 %v110
    %v466 = vunpack.c.l.b16 %v111
    %v467 = vunpack.c.h.b16 %v111
    %v468 = vunpack.c.l.b16 %v112
    %v469 = vunpack.c.h.b16 %v112
    %v470 = vunpack.c.l.b16 %v113
    %v471 = vunpack.c.h.b16 %v113
    %v472 = vunpack.c.l.b16 %v114
    %v473 = vunpack.c.h.b16 %v114
    %v474 = vunpack.c.l.b16 %v115
    %v475 = vunpack.c.h.b16 %v115
    %v476 = vunpack.c.l.b16 %v116
    %v477 = vunpack.c.h.b16 %v116
    %v478 = vunpack.c.l.b16 %v117
    %v479 = vunpack.c.h.b16 %v117
    %v480 = vunpack.c.l.b16 %v118
    %v481 = vunpack.c.h.b16 %v118
    %v482 = vunpack.c.l.b16 %v119
    %v483 = vunpack.c.h.b16 %v119
    %v484 = vunpack.c.l.b16 %v120
    %v485 = vunpack.c.h.b16 %v120
    %v486 = vunpack.c.l.b16 %v121
    %v487 = vunpack.c.h.b16 %v121
    %v488 = vunpack.c.l.b16 %v122
    %v489 = vunpack.c.h.b16 %v122
    %v490 = vunpack.c.l.b16 %v123
    %v491 = vunpack.c.h.b16 %v123
    %v492 = vunpack.c.l.b16 %v124
    %v493 = vunpack.c.h.b16 %v124
    %v494 = vunpack.c.l.b16 %v125
    %v495 = vunpack.c.h.b16 %v125
    %v496 = vpack.c.b16 %v436, %v432
    %v497 = vpack.c.b16 %v437, %v433
    %v498 = vpack.c.b16 %v438, %v434
    %v499 = vpack.c.b16 %v439, %v435
    %v500 = vpack.c.b16 %v444, %v440
    %v501 = vpack.c.b16 %v445, %v441
    %v502 = vpack.c.b16 %v446, %v442
    %v503 = vpack.c.b16 %v447, %v443
    %v504 = vpack.c.b16 %v452, %v448
    %v505 = vpack.c.b16 %v453, %v449
    %v506 = vpack.c.b16 %v454, %v450
    %v507 = vpack.c.b16 %v455, %v451
    %v508 = vpack.c.b16 %v460, %v456
    %v509 = vpack.c.b16 %v461, %v457
    %v510 = vpack.c.b16 %v462, %v458
    %v511 = vpack.c.b16 %v463, %v459
    %v512 = vpack.c.b16 %v468, %v464
    %v513 = vpack.c.b16 %v469, %v465
    %v514 = vpack.c.b16 %v470, %v466
    %v515 = vpack.c.b16 %v471, %v467
    %v516 = vpack.c.b16 %v476, %v472
    %v517 = vpack.c.b16 %v477, %v473
    %v518 = vpack.c.b16 %v478, %v474
    %v519 = vpack.c.b16 %v479, %v475
    %v520 = vpack.c.b16 %v484, %v480
    %v521 = vpack.c.b16 %v485, %v481
    %v522 = vpack.c.b16 %v486, %v482
    %v523 = vpack.c.b16 %v487, %v483
    %v524 = vpack.c.b16 %v492, %v488
    %v525 = vpack.c.b16 %v493, %v489
    %v526 = vpack.c.b16 %v494, %v490
    %v527 = vpack.c.b16 %v495, %v491
    %560 = vmatprep.subr.bf16.mxu0 %v497
    %561 = vmatpush1.bf16.msra.mxu0 %v496
    %562 = vmatprep.subr.bf16.mxu0 %v501
    %563 = vmatpush1.bf16.msra.mxu0 %v500
    %564 = vmatprep.subr.bf16.mxu0 %v505
    %565 = vmatpush1.bf16.msra.mxu0 %v504
    %566 = vmatprep.subr.bf16.mxu0 %v509
    %567 = vmatpush1.bf16.msra.mxu0 %v508
    %568 = vmatprep.subr.bf16.mxu0 %v513
    %569 = vmatpush1.bf16.msra.mxu0 %v512
    %570 = vmatprep.subr.bf16.mxu0 %v517
    %571 = vmatpush1.bf16.msra.mxu0 %v516
    %572 = vmatprep.subr.bf16.mxu0 %v521
    %573 = vmatpush1.bf16.msra.mxu0 %v520
    %574 = vmatprep.subr.bf16.mxu0 %v525
    %575 = vmatpush1.bf16.msra.mxu0 %v524
    %576 = vmatprep.subr.bf16.mxu0 0
    %577 = vmatpush1.bf16.msra.mxu0 0
    %578 = vmatprep.subr.bf16.mxu0 0
    %579 = vmatpush1.bf16.msra.mxu0 0
    %580 = vmatprep.subr.bf16.mxu0 0
    %581 = vmatpush1.bf16.msra.mxu0 0
    %582 = vmatprep.subr.bf16.mxu0 0
    %583 = vmatpush1.bf16.msra.mxu0 0
    %584 = vmatprep.subr.bf16.mxu0 0
    %585 = vmatpush1.bf16.msra.mxu0 0
    %586 = vmatprep.subr.bf16.mxu0 0
    %587 = vmatpush1.bf16.msra.mxu0 0
    %588 = vmatprep.subr.bf16.mxu0 0
    %589 = vmatpush1.bf16.msra.mxu0 0
    %590 = vmatprep.subr.bf16.mxu0 0
    %591 = vmatpush1.bf16.msra.mxu0 0
    %592 = vmatprep.mubr.bf16.mxu0 0
    %593 = vmatmul.mubr.bf16.gmra.mrb[0].mxu0 %v93
    %v594 = vpop.f32.mrb[0].mxu0
    %v595 = vadd.f32 %v353, %v594
    %v596 = vpop.f32.mrb[0].mxu0
    %v597 = vadd.f32 %v355, %v596
    %v598 = vpop.f32.mrb[0].mxu0
    %v599 = vpop.f32.mrb[0].mxu0
    %600 = vdwg.mxu0
    %601 = vmatprep.subr.bf16.mxu0 %v499
    %602 = vmatpush1.bf16.msra.mxu0 %v498
    %603 = vmatprep.subr.bf16.mxu0 %v503
    %604 = vmatpush1.bf16.msra.mxu0 %v502
    %605 = vmatprep.subr.bf16.mxu0 %v507
    %606 = vmatpush1.bf16.msra.mxu0 %v506
    %607 = vmatprep.subr.bf16.mxu0 %v511
    %608 = vmatpush1.bf16.msra.mxu0 %v510
    %609 = vmatprep.subr.bf16.mxu0 %v515
    %610 = vmatpush1.bf16.msra.mxu0 %v514
    %611 = vmatprep.subr.bf16.mxu0 %v519
    %612 = vmatpush1.bf16.msra.mxu0 %v518
    %613 = vmatprep.subr.bf16.mxu0 %v523
    %614 = vmatpush1.bf16.msra.mxu0 %v522
    %615 = vmatprep.subr.bf16.mxu0 %v527
    %616 = vmatpush1.bf16.msra.mxu0 %v526
    %617 = vmatprep.subr.bf16.mxu0 0
    %618 = vmatpush1.bf16.msra.mxu0 0
    %619 = vmatprep.subr.bf16.mxu0 0
    %620 = vmatpush1.bf16.msra.mxu0 0
    %621 = vmatprep.subr.bf16.mxu0 0
    %622 = vmatpush1.bf16.msra.mxu0 0
    %623 = vmatprep.subr.bf16.mxu0 0
    %624 = vmatpush1.bf16.msra.mxu0 0
    %625 = vmatprep.subr.bf16.mxu0 0
    %626 = vmatpush1.bf16.msra.mxu0 0
    %627 = vmatprep.subr.bf16.mxu0 0
    %628 = vmatpush1.bf16.msra.mxu0 0
    %629 = vmatprep.subr.bf16.mxu0 0
    %630 = vmatpush1.bf16.msra.mxu0 0
    %631 = vmatprep.subr.bf16.mxu0 0
    %632 = vmatpush1.bf16.msra.mxu0 0
    %633 = vmatprep.mubr.bf16.mxu0 0
    %634 = vmatmul.mubr.bf16.gmra.mrb[0].mxu0 %v93
    %v635 = vpop.f32.mrb[0].mxu0
    %v636 = vadd.f32 %v394, %v635
    %v637 = vpop.f32.mrb[0].mxu0
    %v638 = vadd.f32 %v396, %v637
    %v639 = vpop.f32.mrb[0].mxu0
    %v640 = vpop.f32.mrb[0].mxu0
    %641 = vdwg.mxu0
    %v642 = vld [vmem:[%s5] sm:$0xf]
    %v644 = vlaneseq
    %v645 = vshrl.u32 %v644, 7
    %v646 = vsub.s32 0, %v645
    %v647 = vrot.slane %v642, %v646
    %v648 = vlaneseq
    %v649 = vshrl.u32 %v648, 7
    %v650 = vsub.s32 1, %v649
    %v651 = vrot.slane %v642, %v650
    %v652 = vlaneseq
    %v653 = vshrl.u32 %v652, 7
    %v654 = vsub.s32 2, %v653
    %v655 = vrot.slane %v642, %v654
    %v656 = vlaneseq
    %v657 = vshrl.u32 %v656, 7
    %v658 = vsub.s32 3, %v657
    %v659 = vrot.slane %v642, %v658
    %v664 = vadd.f32 %v595, %v647
    %v665 = vadd.f32 %v597, %v651
    %v666 = vadd.f32 %v636, %v655
    %v667 = vadd.f32 %v638, %v659
    %v668 = vxor.u32 %v664, 2147483648
    %v669 = vmul.f32 %v668, 1.442695
    %v670 = vpow.pop %v669
    %v671 = vadd.f32 %v670, 1.0
    %v672 = vrcp.pop %v671
    %v673 = vmul.f32 1.0, %v672
    %v674 = vxor.u32 %v665, 2147483648
    %v675 = vmul.f32 %v674, 1.442695
    %v676 = vpow.pop %v675
    %v677 = vadd.f32 %v676, 1.0
    %v678 = vrcp.pop %v677
    %v679 = vmul.f32 1.0, %v678
    %v680 = vxor.u32 %v666, 2147483648
    %v681 = vmul.f32 %v680, 1.442695
    %v682 = vpow.pop %v681
    %v683 = vadd.f32 %v682, 1.0
    %v684 = vrcp.pop %v683
    %v685 = vmul.f32 1.0, %v684
    %v686 = vtanh.pop %v667
    %v687 = vmul.f32 %v673, %v686
    %v688 = vmul.f32 %v685, %v79
    %v689 = vadd.f32 %v687, %v688
    %v690 = vtanh.pop %v689
    %v691 = vmul.f32 %v679, %v690
    %692 = vst [vmem:[#allocation9] sm:$0x1] %v691
    %693 = vst [vmem:[#allocation10] sm:$0x1] %v689
    %s694 = sld [smem:[#allocation3 + $0x1]]
    %p695 = scmp.eq.s32.totalorder %s694, 1
    %s696 = sld [smem:[#allocation4 + $0x1]]
    %s697 = sld [smem:[#allocation5 + $0x1]]
    %p698 = scmp.ge.s32.totalorder %s697, 0
    %p699 = scmp.eq.s32.totalorder %s697, 4294967294
    %p700 = scmp.gt.s32.totalorder %s697, 0
    %s701 = scalar_select %p700, %s697, 0
    %p702 = scmp.lt.s32.totalorder %s701, 7
    %s703 = scalar_select %p702, %s701, 7
    %s704 = scalar_lea.vmem [#allocation9], %s703
    %v705 = vld [vmem:[%s704] sm:$0x1]
    %s706 = scalar_lea.vmem [#allocation10], %s703
    %v707 = vld [vmem:[%s706] sm:$0x1]
    %v708 = vld [vmem:[%s6] sm:$0x1]
    %s709 = scalar_select %p699, 1, 0
    %v710 = vstv %s709
    %vm711 = vcmp.eq.s32.totalorder %v710, 1
    %v712 = vsel %vm711, %v708, 0.0
    %s713 = scalar_select %p698, 1, 0
    %v714 = vstv %s713
    %vm715 = vcmp.eq.s32.totalorder %v714, 1
    %v716 = vsel %vm715, %v705, %v712
    %v717 = vld [vmem:[%s7] sm:$0x1]
    %v718 = vsel %vm711, %v717, 0.0
    %v719 = vsel %vm715, %v707, %v718
    %p720 = scmp.gt.s32.totalorder %s696, 0
    %s721 = scalar_select %p720, %s696, 0
    %p722 = scmp.lt.s32.totalorder %s721, 7
    %s723 = scalar_select %p722, %s721, 7
    %s724 = scalar_lea.vmem [#allocation9], %s723
    %v725 = vld [vmem:[%s724] sm:$0x1]
    %v726 = vld [vmem:[%s3] sm:$0x1]
    %v727 = vpack.c.bf16 %v716, %v716
    %v728 = vunpack.c.l.bf16 %v726
    %s729 = scalar_select %p695, 1, 0
    %v730 = vstv %s729
    %vm731 = vcmp.eq.s32.totalorder %v730, 1
    %v733 = vrot.slane %v725, 7
    %v735 = vsel %vm731, %v728, %v733
    %v736 = vpack.c.bf16 %v735, %v735
    %v737 = vld [vmem:[#allocation6] sm:$0xff]
    %v738 = vld [vmem:[#allocation6 + $0x8] sm:$0xff]
    %v739 = vld [vmem:[#allocation6 + $0x10] sm:$0xff]
    %v740 = vld [vmem:[#allocation6 + $0x18] sm:$0xff]
    %v741 = vld [vmem:[#allocation6 + $0x20] sm:$0xff]
    %v742 = vld [vmem:[#allocation6 + $0x28] sm:$0xff]
    %v743 = vld [vmem:[#allocation6 + $0x30] sm:$0xff]
    %v744 = vld [vmem:[#allocation6 + $0x38] sm:$0xff]
    %v745 = vld [vmem:[#allocation6 + $0x40] sm:$0xff]
    %v746 = vld [vmem:[#allocation6 + $0x48] sm:$0xff]
    %v747 = vld [vmem:[#allocation6 + $0x50] sm:$0xff]
    %v748 = vld [vmem:[#allocation6 + $0x58] sm:$0xff]
    %v749 = vld [vmem:[#allocation6 + $0x60] sm:$0xff]
    %v750 = vld [vmem:[#allocation6 + $0x68] sm:$0xff]
    %v751 = vld [vmem:[#allocation6 + $0x70] sm:$0xff]
    %v752 = vld [vmem:[#allocation6 + $0x78] sm:$0xff]
    %v753 = vld [vmem:[#allocation6 + $0x80] sm:$0xff]
    %v754 = vld [vmem:[#allocation6 + $0x88] sm:$0xff]
    %v755 = vld [vmem:[#allocation6 + $0x90] sm:$0xff]
    %v756 = vld [vmem:[#allocation6 + $0x98] sm:$0xff]
    %v757 = vld [vmem:[#allocation6 + $0xa0] sm:$0xff]
    %v758 = vld [vmem:[#allocation6 + $0xa8] sm:$0xff]
    %v759 = vld [vmem:[#allocation6 + $0xb0] sm:$0xff]
    %v760 = vld [vmem:[#allocation6 + $0xb8] sm:$0xff]
    %v761 = vld [vmem:[#allocation6 + $0xc0] sm:$0xff]
    %v762 = vld [vmem:[#allocation6 + $0xc8] sm:$0xff]
    %v763 = vld [vmem:[#allocation6 + $0xd0] sm:$0xff]
    %v764 = vld [vmem:[#allocation6 + $0xd8] sm:$0xff]
    %v765 = vld [vmem:[#allocation6 + $0xe0] sm:$0xff]
    %v766 = vld [vmem:[#allocation6 + $0xe8] sm:$0xff]
    %v767 = vld [vmem:[#allocation6 + $0xf0] sm:$0xff]
    %v768 = vld [vmem:[#allocation6 + $0xf8] sm:$0xff]
    %v769 = vld [vmem:[#allocation6 + $0x100] sm:$0xff]
    %v770 = vld [vmem:[#allocation6 + $0x108] sm:$0xff]
    %v771 = vld [vmem:[#allocation6 + $0x110] sm:$0xff]
    %v772 = vld [vmem:[#allocation6 + $0x118] sm:$0xff]
    %v773 = vld [vmem:[#allocation6 + $0x120] sm:$0xff]
    %v774 = vld [vmem:[#allocation6 + $0x128] sm:$0xff]
    %v775 = vld [vmem:[#allocation6 + $0x130] sm:$0xff]
    %v776 = vld [vmem:[#allocation6 + $0x138] sm:$0xff]
    %v777 = vld [vmem:[#allocation6 + $0x140] sm:$0xff]
    %v778 = vld [vmem:[#allocation6 + $0x148] sm:$0xff]
    %v779 = vld [vmem:[#allocation6 + $0x150] sm:$0xff]
    %v780 = vld [vmem:[#allocation6 + $0x158] sm:$0xff]
    %v781 = vld [vmem:[#allocation6 + $0x160] sm:$0xff]
    %v782 = vld [vmem:[#allocation6 + $0x168] sm:$0xff]
    %v783 = vld [vmem:[#allocation6 + $0x170] sm:$0xff]
    %v784 = vld [vmem:[#allocation6 + $0x178] sm:$0xff]
    %v785 = vld [vmem:[#allocation6 + $0x180] sm:$0xff]
    %v786 = vld [vmem:[#allocation6 + $0x188] sm:$0xff]
    %v787 = vld [vmem:[#allocation6 + $0x190] sm:$0xff]
    %v788 = vld [vmem:[#allocation6 + $0x198] sm:$0xff]
    %v789 = vld [vmem:[#allocation6 + $0x1a0] sm:$0xff]
    %v790 = vld [vmem:[#allocation6 + $0x1a8] sm:$0xff]
    %v791 = vld [vmem:[#allocation6 + $0x1b0] sm:$0xff]
    %v792 = vld [vmem:[#allocation6 + $0x1b8] sm:$0xff]
    %v793 = vld [vmem:[#allocation6 + $0x1c0] sm:$0xff]
    %v794 = vld [vmem:[#allocation6 + $0x1c8] sm:$0xff]
    %v795 = vld [vmem:[#allocation6 + $0x1d0] sm:$0xff]
    %v796 = vld [vmem:[#allocation6 + $0x1d8] sm:$0xff]
    %v797 = vld [vmem:[#allocation6 + $0x1e0] sm:$0xff]
    %v798 = vld [vmem:[#allocation6 + $0x1e8] sm:$0xff]
    %v799 = vld [vmem:[#allocation6 + $0x1f0] sm:$0xff]
    %v800 = vld [vmem:[#allocation6 + $0x1f8] sm:$0xff]
    %v833 = vunpack.c.l.b16 %v769
    %v834 = vunpack.c.h.b16 %v769
    %v835 = vunpack.c.l.b16 %v770
    %v836 = vunpack.c.h.b16 %v770
    %v837 = vunpack.c.l.b16 %v771
    %v838 = vunpack.c.h.b16 %v771
    %v839 = vunpack.c.l.b16 %v772
    %v840 = vunpack.c.h.b16 %v772
    %v841 = vunpack.c.l.b16 %v773
    %v842 = vunpack.c.h.b16 %v773
    %v843 = vunpack.c.l.b16 %v774
    %v844 = vunpack.c.h.b16 %v774
    %v845 = vunpack.c.l.b16 %v775
    %v846 = vunpack.c.h.b16 %v775
    %v847 = vunpack.c.l.b16 %v776
    %v848 = vunpack.c.h.b16 %v776
    %v849 = vunpack.c.l.b16 %v777
    %v850 = vunpack.c.h.b16 %v777
    %v851 = vunpack.c.l.b16 %v778
    %v852 = vunpack.c.h.b16 %v778
    %v853 = vunpack.c.l.b16 %v779
    %v854 = vunpack.c.h.b16 %v779
    %v855 = vunpack.c.l.b16 %v780
    %v856 = vunpack.c.h.b16 %v780
    %v857 = vunpack.c.l.b16 %v781
    %v858 = vunpack.c.h.b16 %v781
    %v859 = vunpack.c.l.b16 %v782
    %v860 = vunpack.c.h.b16 %v782
    %v861 = vunpack.c.l.b16 %v783
    %v862 = vunpack.c.h.b16 %v783
    %v863 = vunpack.c.l.b16 %v784
    %v864 = vunpack.c.h.b16 %v784
    %v865 = vunpack.c.l.b16 %v785
    %v866 = vunpack.c.h.b16 %v785
    %v867 = vunpack.c.l.b16 %v786
    %v868 = vunpack.c.h.b16 %v786
    %v869 = vunpack.c.l.b16 %v787
    %v870 = vunpack.c.h.b16 %v787
    %v871 = vunpack.c.l.b16 %v788
    %v872 = vunpack.c.h.b16 %v788
    %v873 = vunpack.c.l.b16 %v789
    %v874 = vunpack.c.h.b16 %v789
    %v875 = vunpack.c.l.b16 %v790
    %v876 = vunpack.c.h.b16 %v790
    %v877 = vunpack.c.l.b16 %v791
    %v878 = vunpack.c.h.b16 %v791
    %v879 = vunpack.c.l.b16 %v792
    %v880 = vunpack.c.h.b16 %v792
    %v881 = vunpack.c.l.b16 %v793
    %v882 = vunpack.c.h.b16 %v793
    %v883 = vunpack.c.l.b16 %v794
    %v884 = vunpack.c.h.b16 %v794
    %v885 = vunpack.c.l.b16 %v795
    %v886 = vunpack.c.h.b16 %v795
    %v887 = vunpack.c.l.b16 %v796
    %v888 = vunpack.c.h.b16 %v796
    %v889 = vunpack.c.l.b16 %v797
    %v890 = vunpack.c.h.b16 %v797
    %v891 = vunpack.c.l.b16 %v798
    %v892 = vunpack.c.h.b16 %v798
    %v893 = vunpack.c.l.b16 %v799
    %v894 = vunpack.c.h.b16 %v799
    %v895 = vunpack.c.l.b16 %v800
    %v896 = vunpack.c.h.b16 %v800
    %v897 = vpack.c.b16 %v837, %v833
    %v898 = vpack.c.b16 %v838, %v834
    %v899 = vpack.c.b16 %v839, %v835
    %v900 = vpack.c.b16 %v840, %v836
    %v901 = vpack.c.b16 %v845, %v841
    %v902 = vpack.c.b16 %v846, %v842
    %v903 = vpack.c.b16 %v847, %v843
    %v904 = vpack.c.b16 %v848, %v844
    %v905 = vpack.c.b16 %v853, %v849
    %v906 = vpack.c.b16 %v854, %v850
    %v907 = vpack.c.b16 %v855, %v851
    %v908 = vpack.c.b16 %v856, %v852
    %v909 = vpack.c.b16 %v861, %v857
    %v910 = vpack.c.b16 %v862, %v858
    %v911 = vpack.c.b16 %v863, %v859
    %v912 = vpack.c.b16 %v864, %v860
    %v913 = vpack.c.b16 %v869, %v865
    %v914 = vpack.c.b16 %v870, %v866
    %v915 = vpack.c.b16 %v871, %v867
    %v916 = vpack.c.b16 %v872, %v868
    %v917 = vpack.c.b16 %v877, %v873
    %v918 = vpack.c.b16 %v878, %v874
    %v919 = vpack.c.b16 %v879, %v875
    %v920 = vpack.c.b16 %v880, %v876
    %v921 = vpack.c.b16 %v885, %v881
    %v922 = vpack.c.b16 %v886, %v882
    %v923 = vpack.c.b16 %v887, %v883
    %v924 = vpack.c.b16 %v888, %v884
    %v925 = vpack.c.b16 %v893, %v889
    %v926 = vpack.c.b16 %v894, %v890
    %v927 = vpack.c.b16 %v895, %v891
    %v928 = vpack.c.b16 %v896, %v892
    %961 = vmatprep.subr.bf16.mxu0 %v898
    %962 = vmatpush1.bf16.msra.mxu0 %v897
    %963 = vmatprep.subr.bf16.mxu0 %v902
    %964 = vmatpush1.bf16.msra.mxu0 %v901
    %965 = vmatprep.subr.bf16.mxu0 %v906
    %966 = vmatpush1.bf16.msra.mxu0 %v905
    %967 = vmatprep.subr.bf16.mxu0 %v910
    %968 = vmatpush1.bf16.msra.mxu0 %v909
    %969 = vmatprep.subr.bf16.mxu0 %v914
    %970 = vmatpush1.bf16.msra.mxu0 %v913
    %971 = vmatprep.subr.bf16.mxu0 %v918
    %972 = vmatpush1.bf16.msra.mxu0 %v917
    %973 = vmatprep.subr.bf16.mxu0 %v922
    %974 = vmatpush1.bf16.msra.mxu0 %v921
    %975 = vmatprep.subr.bf16.mxu0 %v926
    %976 = vmatpush1.bf16.msra.mxu0 %v925
    %977 = vmatprep.subr.bf16.mxu0 0
    %978 = vmatpush1.bf16.msra.mxu0 0
    %979 = vmatprep.subr.bf16.mxu0 0
    %980 = vmatpush1.bf16.msra.mxu0 0
    %981 = vmatprep.subr.bf16.mxu0 0
    %982 = vmatpush1.bf16.msra.mxu0 0
    %983 = vmatprep.subr.bf16.mxu0 0
    %984 = vmatpush1.bf16.msra.mxu0 0
    %985 = vmatprep.subr.bf16.mxu0 0
    %986 = vmatpush1.bf16.msra.mxu0 0
    %987 = vmatprep.subr.bf16.mxu0 0
    %988 = vmatpush1.bf16.msra.mxu0 0
    %989 = vmatprep.subr.bf16.mxu0 0
    %990 = vmatpush1.bf16.msra.mxu0 0
    %991 = vmatprep.subr.bf16.mxu0 0
    %992 = vmatpush1.bf16.msra.mxu0 0
    %993 = vmatprep.mubr.bf16.mxu0 0
    %994 = vmatmul.mubr.bf16.gmra.mrb[0].mxu0 %v727
    %v995 = vpop.f32.mrb[0].mxu0
    %v996 = vadd.f32 0.0, %v995
    %v997 = vpop.f32.mrb[0].mxu0
    %v998 = vadd.f32 0.0, %v997
    %v999 = vpop.f32.mrb[0].mxu0
    %v1000 = vpop.f32.mrb[0].mxu0
    %1001 = vdwg.mxu0
    %1002 = vmatprep.subr.bf16.mxu0 %v900
    %1003 = vmatpush1.bf16.msra.mxu0 %v899
    %1004 = vmatprep.subr.bf16.mxu0 %v904
    %1005 = vmatpush1.bf16.msra.mxu0 %v903
    %1006 = vmatprep.subr.bf16.mxu0 %v908
    %1007 = vmatpush1.bf16.msra.mxu0 %v907
    %1008 = vmatprep.subr.bf16.mxu0 %v912
    %1009 = vmatpush1.bf16.msra.mxu0 %v911
    %1010 = vmatprep.subr.bf16.mxu0 %v916
    %1011 = vmatpush1.bf16.msra.mxu0 %v915
    %1012 = vmatprep.subr.bf16.mxu0 %v920
    %1013 = vmatpush1.bf16.msra.mxu0 %v919
    %1014 = vmatprep.subr.bf16.mxu0 %v924
    %1015 = vmatpush1.bf16.msra.mxu0 %v923
    %1016 = vmatprep.subr.bf16.mxu0 %v928
    %1017 = vmatpush1.bf16.msra.mxu0 %v927
    %1018 = vmatprep.subr.bf16.mxu0 0
    %1019 = vmatpush1.bf16.msra.mxu0 0
    %1020 = vmatprep.subr.bf16.mxu0 0
    %1021 = vmatpush1.bf16.msra.mxu0 0
    %1022 = vmatprep.subr.bf16.mxu0 0
    %1023 = vmatpush1.bf16.msra.mxu0 0
    %1024 = vmatprep.subr.bf16.mxu0 0
    %1025 = vmatpush1.bf16.msra.mxu0 0
    %1026 = vmatprep.subr.bf16.mxu0 0
    %1027 = vmatpush1.bf16.msra.mxu0 0
    %1028 = vmatprep.subr.bf16.mxu0 0
    %1029 = vmatpush1.bf16.msra.mxu0 0
    %1030 = vmatprep.subr.bf16.mxu0 0
    %1031 = vmatpush1.bf16.msra.mxu0 0
    %1032 = vmatprep.subr.bf16.mxu0 0
    %1033 = vmatpush1.bf16.msra.mxu0 0
    %1034 = vmatprep.mubr.bf16.mxu0 0
    %1035 = vmatmul.mubr.bf16.gmra.mrb[0].mxu0 %v727
    %v1036 = vpop.f32.mrb[0].mxu0
    %v1037 = vadd.f32 0.0, %v1036
    %v1038 = vpop.f32.mrb[0].mxu0
    %v1039 = vadd.f32 0.0, %v1038
    %v1040 = vpop.f32.mrb[0].mxu0
    %v1041 = vpop.f32.mrb[0].mxu0
    %1042 = vdwg.mxu0
    %v1044 = vshrl.u32 %v736, 16
    %v1079 = vunpack.c.l.b16 %v737
    %v1080 = vunpack.c.h.b16 %v737
    %v1081 = vunpack.c.l.b16 %v738
    %v1082 = vunpack.c.h.b16 %v738
    %v1083 = vunpack.c.l.b16 %v739
    %v1084 = vunpack.c.h.b16 %v739
    %v1085 = vunpack.c.l.b16 %v740
    %v1086 = vunpack.c.h.b16 %v740
    %v1087 = vunpack.c.l.b16 %v741
    %v1088 = vunpack.c.h.b16 %v741
    %v1089 = vunpack.c.l.b16 %v742
    %v1090 = vunpack.c.h.b16 %v742
    %v1091 = vunpack.c.l.b16 %v743
    %v1092 = vunpack.c.h.b16 %v743
    %v1093 = vunpack.c.l.b16 %v744
    %v1094 = vunpack.c.h.b16 %v744
    %v1095 = vunpack.c.l.b16 %v745
    %v1096 = vunpack.c.h.b16 %v745
    %v1097 = vunpack.c.l.b16 %v746
    %v1098 = vunpack.c.h.b16 %v746
    %v1099 = vunpack.c.l.b16 %v747
    %v1100 = vunpack.c.h.b16 %v747
    %v1101 = vunpack.c.l.b16 %v748
    %v1102 = vunpack.c.h.b16 %v748
    %v1103 = vunpack.c.l.b16 %v749
    %v1104 = vunpack.c.h.b16 %v749
    %v1105 = vunpack.c.l.b16 %v750
    %v1106 = vunpack.c.h.b16 %v750
    %v1107 = vunpack.c.l.b16 %v751
    %v1108 = vunpack.c.h.b16 %v751
    %v1109 = vunpack.c.l.b16 %v752
    %v1110 = vunpack.c.h.b16 %v752
    %v1111 = vunpack.c.l.b16 %v753
    %v1112 = vunpack.c.h.b16 %v753
    %v1113 = vunpack.c.l.b16 %v754
    %v1114 = vunpack.c.h.b16 %v754
    %v1115 = vunpack.c.l.b16 %v755
    %v1116 = vunpack.c.h.b16 %v755
    %v1117 = vunpack.c.l.b16 %v756
    %v1118 = vunpack.c.h.b16 %v756
    %v1119 = vunpack.c.l.b16 %v757
    %v1120 = vunpack.c.h.b16 %v757
    %v1121 = vunpack.c.l.b16 %v758
    %v1122 = vunpack.c.h.b16 %v758
    %v1123 = vunpack.c.l.b16 %v759
    %v1124 = vunpack.c.h.b16 %v759
    %v1125 = vunpack.c.l.b16 %v760
    %v1126 = vunpack.c.h.b16 %v760
    %v1127 = vunpack.c.l.b16 %v761
    %v1128 = vunpack.c.h.b16 %v761
    %v1129 = vunpack.c.l.b16 %v762
    %v1130 = vunpack.c.h.b16 %v762
    %v1131 = vunpack.c.l.b16 %v763
    %v1132 = vunpack.c.h.b16 %v763
    %v1133 = vunpack.c.l.b16 %v764
    %v1134 = vunpack.c.h.b16 %v764
    %v1135 = vunpack.c.l.b16 %v765
    %v1136 = vunpack.c.h.b16 %v765
    %v1137 = vunpack.c.l.b16 %v766
    %v1138 = vunpack.c.h.b16 %v766
    %v1139 = vunpack.c.l.b16 %v767
    %v1140 = vunpack.c.h.b16 %v767
    %v1141 = vunpack.c.l.b16 %v768
    %v1142 = vunpack.c.h.b16 %v768
    %v1143 = vpack.c.b16 %v1083, %v1079
    %v1144 = vpack.c.b16 %v1084, %v1080
    %v1145 = vpack.c.b16 %v1085, %v1081
    %v1146 = vpack.c.b16 %v1086, %v1082
    %v1147 = vpack.c.b16 %v1091, %v1087
    %v1148 = vpack.c.b16 %v1092, %v1088
    %v1149 = vpack.c.b16 %v1093, %v1089
    %v1150 = vpack.c.b16 %v1094, %v1090
    %v1151 = vpack.c.b16 %v1099, %v1095
    %v1152 = vpack.c.b16 %v1100, %v1096
    %v1153 = vpack.c.b16 %v1101, %v1097
    %v1154 = vpack.c.b16 %v1102, %v1098
    %v1155 = vpack.c.b16 %v1107, %v1103
    %v1156 = vpack.c.b16 %v1108, %v1104
    %v1157 = vpack.c.b16 %v1109, %v1105
    %v1158 = vpack.c.b16 %v1110, %v1106
    %v1159 = vpack.c.b16 %v1115, %v1111
    %v1160 = vpack.c.b16 %v1116, %v1112
    %v1161 = vpack.c.b16 %v1117, %v1113
    %v1162 = vpack.c.b16 %v1118, %v1114
    %v1163 = vpack.c.b16 %v1123, %v1119
    %v1164 = vpack.c.b16 %v1124, %v1120
    %v1165 = vpack.c.b16 %v1125, %v1121
    %v1166 = vpack.c.b16 %v1126, %v1122
    %v1167 = vpack.c.b16 %v1131, %v1127
    %v1168 = vpack.c.b16 %v1132, %v1128
    %v1169 = vpack.c.b16 %v1133, %v1129
    %v1170 = vpack.c.b16 %v1134, %v1130
    %v1171 = vpack.c.b16 %v1139, %v1135
    %v1172 = vpack.c.b16 %v1140, %v1136
    %v1173 = vpack.c.b16 %v1141, %v1137
    %v1174 = vpack.c.b16 %v1142, %v1138
    %1207 = vmatprep.subr.bf16.mxu0 %v1144
    %1208 = vmatpush1.bf16.msra.mxu0 %v1143
    %1209 = vmatprep.subr.bf16.mxu0 %v1148
    %1210 = vmatpush1.bf16.msra.mxu0 %v1147
    %1211 = vmatprep.subr.bf16.mxu0 %v1152
    %1212 = vmatpush1.bf16.msra.mxu0 %v1151
    %1213 = vmatprep.subr.bf16.mxu0 %v1156
    %1214 = vmatpush1.bf16.msra.mxu0 %v1155
    %1215 = vmatprep.subr.bf16.mxu0 %v1160
    %1216 = vmatpush1.bf16.msra.mxu0 %v1159
    %1217 = vmatprep.subr.bf16.mxu0 %v1164
    %1218 = vmatpush1.bf16.msra.mxu0 %v1163
    %1219 = vmatprep.subr.bf16.mxu0 %v1168
    %1220 = vmatpush1.bf16.msra.mxu0 %v1167
    %1221 = vmatprep.subr.bf16.mxu0 %v1172
    %1222 = vmatpush1.bf16.msra.mxu0 %v1171
    %1223 = vmatprep.subr.bf16.mxu0 0
    %1224 = vmatpush1.bf16.msra.mxu0 0
    %1225 = vmatprep.subr.bf16.mxu0 0
    %1226 = vmatpush1.bf16.msra.mxu0 0
    %1227 = vmatprep.subr.bf16.mxu0 0
    %1228 = vmatpush1.bf16.msra.mxu0 0
    %1229 = vmatprep.subr.bf16.mxu0 0
    %1230 = vmatpush1.bf16.msra.mxu0 0
    %1231 = vmatprep.subr.bf16.mxu0 0
    %1232 = vmatpush1.bf16.msra.mxu0 0
    %1233 = vmatprep.subr.bf16.mxu0 0
    %1234 = vmatpush1.bf16.msra.mxu0 0
    %1235 = vmatprep.subr.bf16.mxu0 0
    %1236 = vmatpush1.bf16.msra.mxu0 0
    %1237 = vmatprep.subr.bf16.mxu0 0
    %1238 = vmatpush1.bf16.msra.mxu0 0
    %1239 = vmatprep.mubr.bf16.mxu0 0
    %1240 = vmatmul.mubr.bf16.gmra.mrb[0].mxu0 %v1044
    %v1241 = vpop.f32.mrb[0].mxu0
    %v1242 = vadd.f32 %v996, %v1241
    %v1243 = vpop.f32.mrb[0].mxu0
    %v1244 = vadd.f32 %v998, %v1243
    %v1245 = vpop.f32.mrb[0].mxu0
    %v1246 = vpop.f32.mrb[0].mxu0
    %1247 = vdwg.mxu0
    %1248 = vmatprep.subr.bf16.mxu0 %v1146
    %1249 = vmatpush1.bf16.msra.mxu0 %v1145
    %1250 = vmatprep.subr.bf16.mxu0 %v1150
    %1251 = vmatpush1.bf16.msra.mxu0 %v1149
    %1252 = vmatprep.subr.bf16.mxu0 %v1154
    %1253 = vmatpush1.bf16.msra.mxu0 %v1153
    %1254 = vmatprep.subr.bf16.mxu0 %v1158
    %1255 = vmatpush1.bf16.msra.mxu0 %v1157
    %1256 = vmatprep.subr.bf16.mxu0 %v1162
    %1257 = vmatpush1.bf16.msra.mxu0 %v1161
    %1258 = vmatprep.subr.bf16.mxu0 %v1166
    %1259 = vmatpush1.bf16.msra.mxu0 %v1165
    %1260 = vmatprep.subr.bf16.mxu0 %v1170
    %1261 = vmatpush1.bf16.msra.mxu0 %v1169
    %1262 = vmatprep.subr.bf16.mxu0 %v1174
    %1263 = vmatpush1.bf16.msra.mxu0 %v1173
    %1264 = vmatprep.subr.bf16.mxu0 0
    %1265 = vmatpush1.bf16.msra.mxu0 0
    %1266 = vmatprep.subr.bf16.mxu0 0
    %1267 = vmatpush1.bf16.msra.mxu0 0
    %1268 = vmatprep.subr.bf16.mxu0 0
    %1269 = vmatpush1.bf16.msra.mxu0 0
    %1270 = vmatprep.subr.bf16.mxu0 0
    %1271 = vmatpush1.bf16.msra.mxu0 0
    %1272 = vmatprep.subr.bf16.mxu0 0
    %1273 = vmatpush1.bf16.msra.mxu0 0
    %1274 = vmatprep.subr.bf16.mxu0 0
    %1275 = vmatpush1.bf16.msra.mxu0 0
    %1276 = vmatprep.subr.bf16.mxu0 0
    %1277 = vmatpush1.bf16.msra.mxu0 0
    %1278 = vmatprep.subr.bf16.mxu0 0
    %1279 = vmatpush1.bf16.msra.mxu0 0
    %1280 = vmatprep.mubr.bf16.mxu0 0
    %1281 = vmatmul.mubr.bf16.gmra.mrb[0].mxu0 %v1044
    %v1282 = vpop.f32.mrb[0].mxu0
    %v1283 = vadd.f32 %v1037, %v1282
    %v1284 = vpop.f32.mrb[0].mxu0
    %v1285 = vadd.f32 %v1039, %v1284
    %v1286 = vpop.f32.mrb[0].mxu0
    %v1287 = vpop.f32.mrb[0].mxu0
    %1288 = vdwg.mxu0
    %v1289 = vld [vmem:[%s5] sm:$0xf]
    %v1291 = vlaneseq
    %v1292 = vshrl.u32 %v1291, 7
    %v1293 = vsub.s32 0, %v1292
    %v1294 = vrot.slane %v1289, %v1293
    %v1295 = vlaneseq
    %v1296 = vshrl.u32 %v1295, 7
    %v1297 = vsub.s32 1, %v1296
    %v1298 = vrot.slane %v1289, %v1297
    %v1299 = vlaneseq
    %v1300 = vshrl.u32 %v1299, 7
    %v1301 = vsub.s32 2, %v1300
    %v1302 = vrot.slane %v1289, %v1301
    %v1303 = vlaneseq
    %v1304 = vshrl.u32 %v1303, 7
    %v1305 = vsub.s32 3, %v1304
    %v1306 = vrot.slane %v1289, %v1305
    %v1311 = vadd.f32 %v1242, %v1294
    %v1312 = vadd.f32 %v1244, %v1298
    %v1313 = vadd.f32 %v1283, %v1302
    %v1314 = vadd.f32 %v1285, %v1306
    %v1315 = vxor.u32 %v1311, 2147483648
    %v1316 = vmul.f32 %v1315, 1.442695
    %v1317 = vpow.pop %v1316
    %v1318 = vadd.f32 %v1317, 1.0
    %v1319 = vrcp.pop %v1318
    %v1320 = vmul.f32 1.0, %v1319
    %v1321 = vxor.u32 %v1312, 2147483648
    %v1322 = vmul.f32 %v1321, 1.442695
    %v1323 = vpow.pop %v1322
    %v1324 = vadd.f32 %v1323, 1.0
    %v1325 = vrcp.pop %v1324
    %v1326 = vmul.f32 1.0, %v1325
    %v1327 = vxor.u32 %v1313, 2147483648
    %v1328 = vmul.f32 %v1327, 1.442695
    %v1329 = vpow.pop %v1328
    %v1330 = vadd.f32 %v1329, 1.0
    %v1331 = vrcp.pop %v1330
    %v1332 = vmul.f32 1.0, %v1331
    %v1333 = vtanh.pop %v1314
    %v1334 = vmul.f32 %v1320, %v1333
    %v1335 = vmul.f32 %v1332, %v719
    %v1336 = vadd.f32 %v1334, %v1335
    %v1337 = vtanh.pop %v1336
    %v1338 = vmul.f32 %v1326, %v1337
    %1339 = vst [vmem:[#allocation9 + $0x1] sm:$0x1] %v1338
    %1340 = vst [vmem:[#allocation10 + $0x1] sm:$0x1] %v1336
    %s1341 = sld [smem:[#allocation3 + $0x2]]
    %p1342 = scmp.eq.s32.totalorder %s1341, 1
    %s1343 = sld [smem:[#allocation4 + $0x2]]
    %s1344 = sld [smem:[#allocation5 + $0x2]]
    %p1345 = scmp.ge.s32.totalorder %s1344, 0
    %p1346 = scmp.eq.s32.totalorder %s1344, 4294967294
    %p1347 = scmp.gt.s32.totalorder %s1344, 0
    %s1348 = scalar_select %p1347, %s1344, 0
    %p1349 = scmp.lt.s32.totalorder %s1348, 7
    %s1350 = scalar_select %p1349, %s1348, 7
    %s1351 = scalar_lea.vmem [#allocation9], %s1350
    %v1352 = vld [vmem:[%s1351] sm:$0x1]
    %s1353 = scalar_lea.vmem [#allocation10], %s1350
    %v1354 = vld [vmem:[%s1353] sm:$0x1]
    %v1355 = vld [vmem:[%s6] sm:$0x1]
    %s1356 = scalar_select %p1346, 1, 0
    %v1357 = vstv %s1356
    %vm1358 = vcmp.eq.s32.totalorder %v1357, 1
    %v1359 = vsel %vm1358, %v1355, 0.0
    %s1360 = scalar_select %p1345, 1, 0
    %v1361 = vstv %s1360
    %vm1362 = vcmp.eq.s32.totalorder %v1361, 1
    %v1363 = vsel %vm1362, %v1352, %v1359
    %v1364 = vld [vmem:[%s7] sm:$0x1]
    %v1365 = vsel %vm1358, %v1364, 0.0
    %v1366 = vsel %vm1362, %v1354, %v1365
    %p1367 = scmp.gt.s32.totalorder %s1343, 0
    %s1368 = scalar_select %p1367, %s1343, 0
    %p1369 = scmp.lt.s32.totalorder %s1368, 7
    %s1370 = scalar_select %p1369, %s1368, 7
    %s1371 = scalar_lea.vmem [#allocation9], %s1370
    %v1372 = vld [vmem:[%s1371] sm:$0x1]
    %v1373 = vld [vmem:[%s3] sm:$0x2]
    %v1374 = vpack.c.bf16 %v1363, %v1363
    %v1375 = vunpack.c.l.bf16 %v1373
    %s1376 = scalar_select %p1342, 1, 0
    %v1377 = vstv %s1376
    %vm1378 = vcmp.eq.s32.totalorder %v1377, 1
    %v1380 = vrot.slane %v1372, 6
    %v1382 = vsel %vm1378, %v1375, %v1380
    %v1383 = vpack.c.bf16 %v1382, %v1382
    %v1384 = vld [vmem:[#allocation6] sm:$0xff]
    %v1385 = vld [vmem:[#allocation6 + $0x8] sm:$0xff]
    %v1386 = vld [vmem:[#allocation6 + $0x10] sm:$0xff]
    %v1387 = vld [vmem:[#allocation6 + $0x18] sm:$0xff]
    %v1388 = vld [vmem:[#allocation6 + $0x20] sm:$0xff]
    %v1389 = vld [vmem:[#allocation6 + $0x28] sm:$0xff]
    %v1390 = vld [vmem:[#allocation6 + $0x30] sm:$0xff]
    %v1391 = vld [vmem:[#allocation6 + $0x38] sm:$0xff]
    %v1392 = vld [vmem:[#allocation6 + $0x40] sm:$0xff]
    %v1393 = vld [vmem:[#allocation6 + $0x48] sm:$0xff]
    %v1394 = vld [vmem:[#allocation6 + $0x50] sm:$0xff]
    %v1395 = vld [vmem:[#allocation6 + $0x58] sm:$0xff]
    %v1396 = vld [vmem:[#allocation6 + $0x60] sm:$0xff]
    %v1397 = vld [vmem:[#allocation6 + $0x68] sm:$0xff]
    %v1398 = vld [vmem:[#allocation6 + $0x70] sm:$0xff]
    %v1399 = vld [vmem:[#allocation6 + $0x78] sm:$0xff]
    %v1400 = vld [vmem:[#allocation6 + $0x80] sm:$0xff]
    %v1401 = vld [vmem:[#allocation6 + $0x88] sm:$0xff]
    %v1402 = vld [vmem:[#allocation6 + $0x90] sm:$0xff]
    %v1403 = vld [vmem:[#allocation6 + $0x98] sm:$0xff]
    %v1404 = vld [vmem:[#allocation6 + $0xa0] sm:$0xff]
    %v1405 = vld [vmem:[#allocation6 + $0xa8] sm:$0xff]
    %v1406 = vld [vmem:[#allocation6 + $0xb0] sm:$0xff]
    %v1407 = vld [vmem:[#allocation6 + $0xb8] sm:$0xff]
    %v1408 = vld [vmem:[#allocation6 + $0xc0] sm:$0xff]
    %v1409 = vld [vmem:[#allocation6 + $0xc8] sm:$0xff]
    %v1410 = vld [vmem:[#allocation6 + $0xd0] sm:$0xff]
    %v1411 = vld [vmem:[#allocation6 + $0xd8] sm:$0xff]
    %v1412 = vld [vmem:[#allocation6 + $0xe0] sm:$0xff]
    %v1413 = vld [vmem:[#allocation6 + $0xe8] sm:$0xff]
    %v1414 = vld [vmem:[#allocation6 + $0xf0] sm:$0xff]
    %v1415 = vld [vmem:[#allocation6 + $0xf8] sm:$0xff]
    %v1416 = vld [vmem:[#allocation6 + $0x100] sm:$0xff]
    %v1417 = vld [vmem:[#allocation6 + $0x108] sm:$0xff]
    %v1418 = vld [vmem:[#allocation6 + $0x110] sm:$0xff]
    %v1419 = vld [vmem:[#allocation6 + $0x118] sm:$0xff]
    %v1420 = vld [vmem:[#allocation6 + $0x120] sm:$0xff]
    %v1421 = vld [vmem:[#allocation6 + $0x128] sm:$0xff]
    %v1422 = vld [vmem:[#allocation6 + $0x130] sm:$0xff]
    %v1423 = vld [vmem:[#allocation6 + $0x138] sm:$0xff]
    %v1424 = vld [vmem:[#allocation6 + $0x140] sm:$0xff]
    %v1425 = vld [vmem:[#allocation6 + $0x148] sm:$0xff]
    %v1426 = vld [vmem:[#allocation6 + $0x150] sm:$0xff]
    %v1427 = vld [vmem:[#allocation6 + $0x158] sm:$0xff]
    %v1428 = vld [vmem:[#allocation6 + $0x160] sm:$0xff]
    %v1429 = vld [vmem:[#allocation6 + $0x168] sm:$0xff]
    %v1430 = vld [vmem:[#allocation6 + $0x170] sm:$0xff]
    %v1431 = vld [vmem:[#allocation6 + $0x178] sm:$0xff]
    %v1432 = vld [vmem:[#allocation6 + $0x180] sm:$0xff]
    %v1433 = vld [vmem:[#allocation6 + $0x188] sm:$0xff]
    %v1434 = vld [vmem:[#allocation6 + $0x190] sm:$0xff]
    %v1435 = vld [vmem:[#allocation6 + $0x198] sm:$0xff]
    %v1436 = vld [vmem:[#allocation6 + $0x1a0] sm:$0xff]
    %v1437 = vld [vmem:[#allocation6 + $0x1a8] sm:$0xff]
    %v1438 = vld [vmem:[#allocation6 + $0x1b0] sm:$0xff]
    %v1439 = vld [vmem:[#allocation6 + $0x1b8] sm:$0xff]
    %v1440 = vld [vmem:[#allocation6 + $0x1c0] sm:$0xff]
    %v1441 = vld [vmem:[#allocation6 + $0x1c8] sm:$0xff]
    %v1442 = vld [vmem:[#allocation6 + $0x1d0] sm:$0xff]
    %v1443 = vld [vmem:[#allocation6 + $0x1d8] sm:$0xff]
    %v1444 = vld [vmem:[#allocation6 + $0x1e0] sm:$0xff]
    %v1445 = vld [vmem:[#allocation6 + $0x1e8] sm:$0xff]
    %v1446 = vld [vmem:[#allocation6 + $0x1f0] sm:$0xff]
    %v1447 = vld [vmem:[#allocation6 + $0x1f8] sm:$0xff]
    %v1480 = vunpack.c.l.b16 %v1416
    %v1481 = vunpack.c.h.b16 %v1416
    %v1482 = vunpack.c.l.b16 %v1417
    %v1483 = vunpack.c.h.b16 %v1417
    %v1484 = vunpack.c.l.b16 %v1418
    %v1485 = vunpack.c.h.b16 %v1418
    %v1486 = vunpack.c.l.b16 %v1419
    %v1487 = vunpack.c.h.b16 %v1419
    %v1488 = vunpack.c.l.b16 %v1420
    %v1489 = vunpack.c.h.b16 %v1420
    %v1490 = vunpack.c.l.b16 %v1421
    %v1491 = vunpack.c.h.b16 %v1421
    %v1492 = vunpack.c.l.b16 %v1422
    %v1493 = vunpack.c.h.b16 %v1422
    %v1494 = vunpack.c.l.b16 %v1423
    %v1495 = vunpack.c.h.b16 %v1423
    %v1496 = vunpack.c.l.b16 %v1424
    %v1497 = vunpack.c.h.b16 %v1424
    %v1498 = vunpack.c.l.b16 %v1425
    %v1499 = vunpack.c.h.b16 %v1425
    %v1500 = vunpack.c.l.b16 %v1426
    %v1501 = vunpack.c.h.b16 %v1426
    %v1502 = vunpack.c.l.b16 %v1427
    %v1503 = vunpack.c.h.b16 %v1427
    %v1504 = vunpack.c.l.b16 %v1428
    %v1505 = vunpack.c.h.b16 %v1428
    %v1506 = vunpack.c.l.b16 %v1429
    %v1507 = vunpack.c.h.b16 %v1429
    %v1508 = vunpack.c.l.b16 %v1430
    %v1509 = vunpack.c.h.b16 %v1430
    %v1510 = vunpack.c.l.b16 %v1431
    %v1511 = vunpack.c.h.b16 %v1431
    %v1512 = vunpack.c.l.b16 %v1432
    %v1513 = vunpack.c.h.b16 %v1432
    %v1514 = vunpack.c.l.b16 %v1433
    %v1515 = vunpack.c.h.b16 %v1433
    %v1516 = vunpack.c.l.b16 %v1434
    %v1517 = vunpack.c.h.b16 %v1434
    %v1518 = vunpack.c.l.b16 %v1435
    %v1519 = vunpack.c.h.b16 %v1435
    %v1520 = vunpack.c.l.b16 %v1436
    %v1521 = vunpack.c.h.b16 %v1436
    %v1522 = vunpack.c.l.b16 %v1437
    %v1523 = vunpack.c.h.b16 %v1437
    %v1524 = vunpack.c.l.b16 %v1438
    %v1525 = vunpack.c.h.b16 %v1438
    %v1526 = vunpack.c.l.b16 %v1439
    %v1527 = vunpack.c.h.b16 %v1439
    %v1528 = vunpack.c.l.b16 %v1440
    %v1529 = vunpack.c.h.b16 %v1440
    %v1530 = vunpack.c.l.b16 %v1441
    %v1531 = vunpack.c.h.b16 %v1441
    %v1532 = vunpack.c.l.b16 %v1442
    %v1533 = vunpack.c.h.b16 %v1442
    %v1534 = vunpack.c.l.b16 %v1443
    %v1535 = vunpack.c.h.b16 %v1443
    %v1536 = vunpack.c.l.b16 %v1444
    %v1537 = vunpack.c.h.b16 %v1444
    %v1538 = vunpack.c.l.b16 %v1445
    %v1539 = vunpack.c.h.b16 %v1445
    %v1540 = vunpack.c.l.b16 %v1446
    %v1541 = vunpack.c.h.b16 %v1446
    %v1542 = vunpack.c.l.b16 %v1447
    %v1543 = vunpack.c.h.b16 %v1447
    %v1544 = vpack.c.b16 %v1484, %v1480
    %v1545 = vpack.c.b16 %v1485, %v1481
    %v1546 = vpack.c.b16 %v1486, %v1482
    %v1547 = vpack.c.b16 %v1487, %v1483
    %v1548 = vpack.c.b16 %v1492, %v1488
    %v1549 = vpack.c.b16 %v1493, %v1489
    %v1550 = vpack.c.b16 %v1494, %v1490
    %v1551 = vpack.c.b16 %v1495, %v1491
    %v1552 = vpack.c.b16 %v1500, %v1496
    %v1553 = vpack.c.b16 %v1501, %v1497
    %v1554 = vpack.c.b16 %v1502, %v1498
    %v1555 = vpack.c.b16 %v1503, %v1499
    %v1556 = vpack.c.b16 %v1508, %v1504
    %v1557 = vpack.c.b16 %v1509, %v1505
    %v1558 = vpack.c.b16 %v1510, %v1506
    %v1559 = vpack.c.b16 %v1511, %v1507
    %v1560 = vpack.c.b16 %v1516, %v1512
    %v1561 = vpack.c.b16 %v1517, %v1513
    %v1562 = vpack.c.b16 %v1518, %v1514
    %v1563 = vpack.c.b16 %v1519, %v1515
    %v1564 = vpack.c.b16 %v1524, %v1520
    %v1565 = vpack.c.b16 %v1525, %v1521
    %v1566 = vpack.c.b16 %v1526, %v1522
    %v1567 = vpack.c.b16 %v1527, %v1523
    %v1568 = vpack.c.b16 %v1532, %v1528
    %v1569 = vpack.c.b16 %v1533, %v1529
    %v1570 = vpack.c.b16 %v1534, %v1530
    %v1571 = vpack.c.b16 %v1535, %v1531
    %v1572 = vpack.c.b16 %v1540, %v1536
    %v1573 = vpack.c.b16 %v1541, %v1537
    %v1574 = vpack.c.b16 %v1542, %v1538
    %v1575 = vpack.c.b16 %v1543, %v1539
    %1608 = vmatprep.subr.bf16.mxu0 %v1545
    %1609 = vmatpush1.bf16.msra.mxu0 %v1544
    %1610 = vmatprep.subr.bf16.mxu0 %v1549
    %1611 = vmatpush1.bf16.msra.mxu0 %v1548
    %1612 = vmatprep.subr.bf16.mxu0 %v1553
    %1613 = vmatpush1.bf16.msra.mxu0 %v1552
    %1614 = vmatprep.subr.bf16.mxu0 %v1557
    %1615 = vmatpush1.bf16.msra.mxu0 %v1556
    %1616 = vmatprep.subr.bf16.mxu0 %v1561
    %1617 = vmatpush1.bf16.msra.mxu0 %v1560
    %1618 = vmatprep.subr.bf16.mxu0 %v1565
    %1619 = vmatpush1.bf16.msra.mxu0 %v1564
    %1620 = vmatprep.subr.bf16.mxu0 %v1569
    %1621 = vmatpush1.bf16.msra.mxu0 %v1568
    %1622 = vmatprep.subr.bf16.mxu0 %v1573
    %1623 = vmatpush1.bf16.msra.mxu0 %v1572
    %1624 = vmatprep.subr.bf16.mxu0 0
    %1625 = vmatpush1.bf16.msra.mxu0 0
    %1626 = vmatprep.subr.bf16.mxu0 0
    %1627 = vmatpush1.bf16.msra.mxu0 0
    %1628 = vmatprep.subr.bf16.mxu0 0
    %1629 = vmatpush1.bf16.msra.mxu0 0
    %1630 = vmatprep.subr.bf16.mxu0 0
    %1631 = vmatpush1.bf16.msra.mxu0 0
    %1632 = vmatprep.subr.bf16.mxu0 0
    %1633 = vmatpush1.bf16.msra.mxu0 0
    %1634 = vmatprep.subr.bf16.mxu0 0
    %1635 = vmatpush1.bf16.msra.mxu0 0
    %1636 = vmatprep.subr.bf16.mxu0 0
    %1637 = vmatpush1.bf16.msra.mxu0 0
    %1638 = vmatprep.subr.bf16.mxu0 0
    %1639 = vmatpush1.bf16.msra.mxu0 0
    %1640 = vmatprep.mubr.bf16.mxu0 0
    %1641 = vmatmul.mubr.bf16.gmra.mrb[0].mxu0 %v1374
    %v1642 = vpop.f32.mrb[0].mxu0
    %v1643 = vadd.f32 0.0, %v1642
    %v1644 = vpop.f32.mrb[0].mxu0
    %v1645 = vadd.f32 0.0, %v1644
    %v1646 = vpop.f32.mrb[0].mxu0
    %v1647 = vpop.f32.mrb[0].mxu0
    %1648 = vdwg.mxu0
    %1649 = vmatprep.subr.bf16.mxu0 %v1547
    %1650 = vmatpush1.bf16.msra.mxu0 %v1546
    %1651 = vmatprep.subr.bf16.mxu0 %v1551
    %1652 = vmatpush1.bf16.msra.mxu0 %v1550
    %1653 = vmatprep.subr.bf16.mxu0 %v1555
    %1654 = vmatpush1.bf16.msra.mxu0 %v1554
    %1655 = vmatprep.subr.bf16.mxu0 %v1559
    %1656 = vmatpush1.bf16.msra.mxu0 %v1558
    %1657 = vmatprep.subr.bf16.mxu0 %v1563
    %1658 = vmatpush1.bf16.msra.mxu0 %v1562
    %1659 = vmatprep.subr.bf16.mxu0 %v1567
    %1660 = vmatpush1.bf16.msra.mxu0 %v1566
    %1661 = vmatprep.subr.bf16.mxu0 %v1571
    %1662 = vmatpush1.bf16.msra.mxu0 %v1570
    %1663 = vmatprep.subr.bf16.mxu0 %v1575
    %1664 = vmatpush1.bf16.msra.mxu0 %v1574
    %1665 = vmatprep.subr.bf16.mxu0 0
    %1666 = vmatpush1.bf16.msra.mxu0 0
    %1667 = vmatprep.subr.bf16.mxu0 0
    %1668 = vmatpush1.bf16.msra.mxu0 0
    %1669 = vmatprep.subr.bf16.mxu0 0
    %1670 = vmatpush1.bf16.msra.mxu0 0
    %1671 = vmatprep.subr.bf16.mxu0 0
    %1672 = vmatpush1.bf16.msra.mxu0 0
    %1673 = vmatprep.subr.bf16.mxu0 0
    %1674 = vmatpush1.bf16.msra.mxu0 0
    %1675 = vmatprep.subr.bf16.mxu0 0
    %1676 = vmatpush1.bf16.msra.mxu0 0
    %1677 = vmatprep.subr.bf16.mxu0 0
    %1678 = vmatpush1.bf16.msra.mxu0 0
    %1679 = vmatprep.subr.bf16.mxu0 0
    %1680 = vmatpush1.bf16.msra.mxu0 0
    %1681 = vmatprep.mubr.bf16.mxu0 0
    %1682 = vmatmul.mubr.bf16.gmra.mrb[0].mxu0 %v1374
    %v1683 = vpop.f32.mrb[0].mxu0
    %v1684 = vadd.f32 0.0, %v1683
    %v1685 = vpop.f32.mrb[0].mxu0
    %v1686 = vadd.f32 0.0, %v1685
    %v1687 = vpop.f32.mrb[0].mxu0
    %v1688 = vpop.f32.mrb[0].mxu0
    %1689 = vdwg.mxu0
    %v1691 = vrot.slane %v1383, 1
    %v1725 = vunpack.c.l.b16 %v1384
    %v1726 = vunpack.c.h.b16 %v1384
    %v1727 = vunpack.c.l.b16 %v1385
    %v1728 = vunpack.c.h.b16 %v1385
    %v1729 = vunpack.c.l.b16 %v1386
    %v1730 = vunpack.c.h.b16 %v1386
    %v1731 = vunpack.c.l.b16 %v1387
    %v1732 = vunpack.c.h.b16 %v1387
    %v1733 = vunpack.c.l.b16 %v1388
    %v1734 = vunpack.c.h.b16 %v1388
    %v1735 = vunpack.c.l.b16 %v1389
    %v1736 = vunpack.c.h.b16 %v1389
    %v1737 = vunpack.c.l.b16 %v1390
    %v1738 = vunpack.c.h.b16 %v1390
    %v1739 = vunpack.c.l.b16 %v1391
    %v1740 = vunpack.c.h.b16 %v1391
    %v1741 = vunpack.c.l.b16 %v1392
    %v1742 = vunpack.c.h.b16 %v1392
    %v1743 = vunpack.c.l.b16 %v1393
    %v1744 = vunpack.c.h.b16 %v1393
    %v1745 = vunpack.c.l.b16 %v1394
    %v1746 = vunpack.c.h.b16 %v1394
    %v1747 = vunpack.c.l.b16 %v1395
    %v1748 = vunpack.c.h.b16 %v1395
    %v1749 = vunpack.c.l.b16 %v1396
    %v1750 = vunpack.c.h.b16 %v1396
    %v1751 = vunpack.c.l.b16 %v1397
    %v1752 = vunpack.c.h.b16 %v1397
    %v1753 = vunpack.c.l.b16 %v1398
    %v1754 = vunpack.c.h.b16 %v1398
    %v1755 = vunpack.c.l.b16 %v1399
    %v1756 = vunpack.c.h.b16 %v1399
    %v1757 = vunpack.c.l.b16 %v1400
    %v1758 = vunpack.c.h.b16 %v1400
    %v1759 = vunpack.c.l.b16 %v1401
    %v1760 = vunpack.c.h.b16 %v1401
    %v1761 = vunpack.c.l.b16 %v1402
    %v1762 = vunpack.c.h.b16 %v1402
    %v1763 = vunpack.c.l.b16 %v1403
    %v1764 = vunpack.c.h.b16 %v1403
    %v1765 = vunpack.c.l.b16 %v1404
    %v1766 = vunpack.c.h.b16 %v1404
    %v1767 = vunpack.c.l.b16 %v1405
    %v1768 = vunpack.c.h.b16 %v1405
    %v1769 = vunpack.c.l.b16 %v1406
    %v1770 = vunpack.c.h.b16 %v1406
    %v1771 = vunpack.c.l.b16 %v1407
    %v1772 = vunpack.c.h.b16 %v1407
    %v1773 = vunpack.c.l.b16 %v1408
    %v1774 = vunpack.c.h.b16 %v1408
    %v1775 = vunpack.c.l.b16 %v1409
    %v1776 = vunpack.c.h.b16 %v1409
    %v1777 = vunpack.c.l.b16 %v1410
    %v1778 = vunpack.c.h.b16 %v1410
    %v1779 = vunpack.c.l.b16 %v1411
    %v1780 = vunpack.c.h.b16 %v1411
    %v1781 = vunpack.c.l.b16 %v1412
    %v1782 = vunpack.c.h.b16 %v1412
    %v1783 = vunpack.c.l.b16 %v1413
    %v1784 = vunpack.c.h.b16 %v1413
    %v1785 = vunpack.c.l.b16 %v1414
    %v1786 = vunpack.c.h.b16 %v1414
    %v1787 = vunpack.c.l.b16 %v1415
    %v1788 = vunpack.c.h.b16 %v1415
    %v1789 = vpack.c.b16 %v1729, %v1725
    %v1790 = vpack.c.b16 %v1730, %v1726
    %v1791 = vpack.c.b16 %v1731, %v1727
    %v1792 = vpack.c.b16 %v1732, %v1728
    %v1793 = vpack.c.b16 %v1737, %v1733
    %v1794 = vpack.c.b16 %v1738, %v1734
    %v1795 = vpack.c.b16 %v1739, %v1735
    %v1796 = vpack.c.b16 %v1740, %v1736
    %v1797 = vpack.c.b16 %v1745, %v1741
    %v1798 = vpack.c.b16 %v1746, %v1742
    %v1799 = vpack.c.b16 %v1747, %v1743
    %v1800 = vpack.c.b16 %v1748, %v1744
    %v1801 = vpack.c.b16 %v1753, %v1749
    %v1802 = vpack.c.b16 %v1754, %v1750
    %v1803 = vpack.c.b16 %v1755, %v1751
    %v1804 = vpack.c.b16 %v1756, %v1752
    %v1805 = vpack.c.b16 %v1761, %v1757
    %v1806 = vpack.c.b16 %v1762, %v1758
    %v1807 = vpack.c.b16 %v1763, %v1759
    %v1808 = vpack.c.b16 %v1764, %v1760
    %v1809 = vpack.c.b16 %v1769, %v1765
    %v1810 = vpack.c.b16 %v1770, %v1766
    %v1811 = vpack.c.b16 %v1771, %v1767
    %v1812 = vpack.c.b16 %v1772, %v1768
    %v1813 = vpack.c.b16 %v1777, %v1773
    %v1814 = vpack.c.b16 %v1778, %v1774
    %v1815 = vpack.c.b16 %v1779, %v1775
    %v1816 = vpack.c.b16 %v1780, %v1776
    %v1817 = vpack.c.b16 %v1785, %v1781
    %v1818 = vpack.c.b16 %v1786, %v1782
    %v1819 = vpack.c.b16 %v1787, %v1783
    %v1820 = vpack.c.b16 %v1788, %v1784
    %1853 = vmatprep.subr.bf16.mxu0 %v1790
    %1854 = vmatpush1.bf16.msra.mxu0 %v1789
    %1855 = vmatprep.subr.bf16.mxu0 %v1794
    %1856 = vmatpush1.bf16.msra.mxu0 %v1793
    %1857 = vmatprep.subr.bf16.mxu0 %v1798
    %1858 = vmatpush1.bf16.msra.mxu0 %v1797
    %1859 = vmatprep.subr.bf16.mxu0 %v1802
    %1860 = vmatpush1.bf16.msra.mxu0 %v1801
    %1861 = vmatprep.subr.bf16.mxu0 %v1806
    %1862 = vmatpush1.bf16.msra.mxu0 %v1805
    %1863 = vmatprep.subr.bf16.mxu0 %v1810
    %1864 = vmatpush1.bf16.msra.mxu0 %v1809
    %1865 = vmatprep.subr.bf16.mxu0 %v1814
    %1866 = vmatpush1.bf16.msra.mxu0 %v1813
    %1867 = vmatprep.subr.bf16.mxu0 %v1818
    %1868 = vmatpush1.bf16.msra.mxu0 %v1817
    %1869 = vmatprep.subr.bf16.mxu0 0
    %1870 = vmatpush1.bf16.msra.mxu0 0
    %1871 = vmatprep.subr.bf16.mxu0 0
    %1872 = vmatpush1.bf16.msra.mxu0 0
    %1873 = vmatprep.subr.bf16.mxu0 0
    %1874 = vmatpush1.bf16.msra.mxu0 0
    %1875 = vmatprep.subr.bf16.mxu0 0
    %1876 = vmatpush1.bf16.msra.mxu0 0
    %1877 = vmatprep.subr.bf16.mxu0 0
    %1878 = vmatpush1.bf16.msra.mxu0 0
    %1879 = vmatprep.subr.bf16.mxu0 0
    %1880 = vmatpush1.bf16.msra.mxu0 0
    %1881 = vmatprep.subr.bf16.mxu0 0
    %1882 = vmatpush1.bf16.msra.mxu0 0
    %1883 = vmatprep.subr.bf16.mxu0 0
    %1884 = vmatpush1.bf16.msra.mxu0 0
    %1885 = vmatprep.mubr.bf16.mxu0 0
    %1886 = vmatmul.mubr.bf16.gmra.mrb[0].mxu0 %v1691
    %v1887 = vpop.f32.mrb[0].mxu0
    %v1888 = vadd.f32 %v1643, %v1887
    %v1889 = vpop.f32.mrb[0].mxu0
    %v1890 = vadd.f32 %v1645, %v1889
    %v1891 = vpop.f32.mrb[0].mxu0
    %v1892 = vpop.f32.mrb[0].mxu0
    %1893 = vdwg.mxu0
    %1894 = vmatprep.subr.bf16.mxu0 %v1792
    %1895 = vmatpush1.bf16.msra.mxu0 %v1791
    %1896 = vmatprep.subr.bf16.mxu0 %v1796
    %1897 = vmatpush1.bf16.msra.mxu0 %v1795
    %1898 = vmatprep.subr.bf16.mxu0 %v1800
    %1899 = vmatpush1.bf16.msra.mxu0 %v1799
    %1900 = vmatprep.subr.bf16.mxu0 %v1804
    %1901 = vmatpush1.bf16.msra.mxu0 %v1803
    %1902 = vmatprep.subr.bf16.mxu0 %v1808
    %1903 = vmatpush1.bf16.msra.mxu0 %v1807
    %1904 = vmatprep.subr.bf16.mxu0 %v1812
    %1905 = vmatpush1.bf16.msra.mxu0 %v1811
    %1906 = vmatprep.subr.bf16.mxu0 %v1816
    %1907 = vmatpush1.bf16.msra.mxu0 %v1815
    %1908 = vmatprep.subr.bf16.mxu0 %v1820
    %1909 = vmatpush1.bf16.msra.mxu0 %v1819
    %1910 = vmatprep.subr.bf16.mxu0 0
    %1911 = vmatpush1.bf16.msra.mxu0 0
    %1912 = vmatprep.subr.bf16.mxu0 0
    %1913 = vmatpush1.bf16.msra.mxu0 0
    %1914 = vmatprep.subr.bf16.mxu0 0
    %1915 = vmatpush1.bf16.msra.mxu0 0
    %1916 = vmatprep.subr.bf16.mxu0 0
    %1917 = vmatpush1.bf16.msra.mxu0 0
    %1918 = vmatprep.subr.bf16.mxu0 0
    %1919 = vmatpush1.bf16.msra.mxu0 0
    %1920 = vmatprep.subr.bf16.mxu0 0
    %1921 = vmatpush1.bf16.msra.mxu0 0
    %1922 = vmatprep.subr.bf16.mxu0 0
    %1923 = vmatpush1.bf16.msra.mxu0 0
    %1924 = vmatprep.subr.bf16.mxu0 0
    %1925 = vmatpush1.bf16.msra.mxu0 0
    %1926 = vmatprep.mubr.bf16.mxu0 0
    %1927 = vmatmul.mubr.bf16.gmra.mrb[0].mxu0 %v1691
    %v1928 = vpop.f32.mrb[0].mxu0
    %v1929 = vadd.f32 %v1684, %v1928
    %v1930 = vpop.f32.mrb[0].mxu0
    %v1931 = vadd.f32 %v1686, %v1930
    %v1932 = vpop.f32.mrb[0].mxu0
    %v1933 = vpop.f32.mrb[0].mxu0
    %1934 = vdwg.mxu0
    %v1935 = vld [vmem:[%s5] sm:$0xf]
    %v1937 = vlaneseq
    %v1938 = vshrl.u32 %v1937, 7
    %v1939 = vsub.s32 0, %v1938
    %v1940 = vrot.slane %v1935, %v1939
    %v1941 = vlaneseq
    %v1942 = vshrl.u32 %v1941, 7
    %v1943 = vsub.s32 1, %v1942
    %v1944 = vrot.slane %v1935, %v1943
    %v1945 = vlaneseq
    %v1946 = vshrl.u32 %v1945, 7
    %v1947 = vsub.s32 2, %v1946
    %v1948 = vrot.slane %v1935, %v1947
    %v1949 = vlaneseq
    %v1950 = vshrl.u32 %v1949, 7
    %v1951 = vsub.s32 3, %v1950
    %v1952 = vrot.slane %v1935, %v1951
    %v1957 = vadd.f32 %v1888, %v1940
    %v1958 = vadd.f32 %v1890, %v1944
    %v1959 = vadd.f32 %v1929, %v1948
    %v1960 = vadd.f32 %v1931, %v1952
    %v1961 = vxor.u32 %v1957, 2147483648
    %v1962 = vmul.f32 %v1961, 1.442695
    %v1963 = vpow.pop %v1962
    %v1964 = vadd.f32 %v1963, 1.0
    %v1965 = vrcp.pop %v1964
    %v1966 = vmul.f32 1.0, %v1965
    %v1967 = vxor.u32 %v1958, 2147483648
    %v1968 = vmul.f32 %v1967, 1.442695
    %v1969 = vpow.pop %v1968
    %v1970 = vadd.f32 %v1969, 1.0
    %v1971 = vrcp.pop %v1970
    %v1972 = vmul.f32 1.0, %v1971
    %v1973 = vxor.u32 %v1959, 2147483648
    %v1974 = vmul.f32 %v1973, 1.442695
    %v1975 = vpow.pop %v1974
    %v1976 = vadd.f32 %v1975, 1.0
    %v1977 = vrcp.pop %v1976
    %v1978 = vmul.f32 1.0, %v1977
    %v1979 = vtanh.pop %v1960
    %v1980 = vmul.f32 %v1966, %v1979
    %v1981 = vmul.f32 %v1978, %v1366
    %v1982 = vadd.f32 %v1980, %v1981
    %v1983 = vtanh.pop %v1982
    %v1984 = vmul.f32 %v1972, %v1983
    %1985 = vst [vmem:[#allocation9 + $0x2] sm:$0x1] %v1984
    %1986 = vst [vmem:[#allocation10 + $0x2] sm:$0x1] %v1982
    %s1987 = sld [smem:[#allocation3 + $0x3]]
    %p1988 = scmp.eq.s32.totalorder %s1987, 1
    %s1989 = sld [smem:[#allocation4 + $0x3]]
    %s1990 = sld [smem:[#allocation5 + $0x3]]
    %p1991 = scmp.ge.s32.totalorder %s1990, 0
    %p1992 = scmp.eq.s32.totalorder %s1990, 4294967294
    %p1993 = scmp.gt.s32.totalorder %s1990, 0
    %s1994 = scalar_select %p1993, %s1990, 0
    %p1995 = scmp.lt.s32.totalorder %s1994, 7
    %s1996 = scalar_select %p1995, %s1994, 7
    %s1997 = scalar_lea.vmem [#allocation9], %s1996
    %v1998 = vld [vmem:[%s1997] sm:$0x1]
    %s1999 = scalar_lea.vmem [#allocation10], %s1996
    %v2000 = vld [vmem:[%s1999] sm:$0x1]
    %v2001 = vld [vmem:[%s6] sm:$0x1]
    %s2002 = scalar_select %p1992, 1, 0
    %v2003 = vstv %s2002
    %vm2004 = vcmp.eq.s32.totalorder %v2003, 1
    %v2005 = vsel %vm2004, %v2001, 0.0
    %s2006 = scalar_select %p1991, 1, 0
    %v2007 = vstv %s2006
    %vm2008 = vcmp.eq.s32.totalorder %v2007, 1
    %v2009 = vsel %vm2008, %v1998, %v2005
    %v2010 = vld [vmem:[%s7] sm:$0x1]
    %v2011 = vsel %vm2004, %v2010, 0.0
    %v2012 = vsel %vm2008, %v2000, %v2011
    %p2013 = scmp.gt.s32.totalorder %s1989, 0
    %s2014 = scalar_select %p2013, %s1989, 0
    %p2015 = scmp.lt.s32.totalorder %s2014, 7
    %s2016 = scalar_select %p2015, %s2014, 7
    %s2017 = scalar_lea.vmem [#allocation9], %s2016
    %v2018 = vld [vmem:[%s2017] sm:$0x1]
    %v2019 = vld [vmem:[%s3] sm:$0x2]
    %v2020 = vpack.c.bf16 %v2009, %v2009
    %v2021 = vunpack.c.l.bf16 %v2019
    %s2022 = scalar_select %p1988, 1, 0
    %v2023 = vstv %s2022
    %vm2024 = vcmp.eq.s32.totalorder %v2023, 1
    %v2026 = vrot.slane %v2018, 5
    %v2028 = vsel %vm2024, %v2021, %v2026
    %v2029 = vpack.c.bf16 %v2028, %v2028
    %v2030 = vld [vmem:[#allocation6] sm:$0xff]
    %v2031 = vld [vmem:[#allocation6 + $0x8] sm:$0xff]
    %v2032 = vld [vmem:[#allocation6 + $0x10] sm:$0xff]
    %v2033 = vld [vmem:[#allocation6 + $0x18] sm:$0xff]
    %v2034 = vld [vmem:[#allocation6 + $0x20] sm:$0xff]
    %v2035 = vld [vmem:[#allocation6 + $0x28] sm:$0xff]
    %v2036 = vld [vmem:[#allocation6 + $0x30] sm:$0xff]
    %v2037 = vld [vmem:[#allocation6 + $0x38] sm:$0xff]
    %v2038 = vld [vmem:[#allocation6 + $0x40] sm:$0xff]
    %v2039 = vld [vmem:[#allocation6 + $0x48] sm:$0xff]
    %v2040 = vld [vmem:[#allocation6 + $0x50] sm:$0xff]
    %v2041 = vld [vmem:[#allocation6 + $0x58] sm:$0xff]
    %v2042 = vld [vmem:[#allocation6 + $0x60] sm:$0xff]
    %v2043 = vld [vmem:[#allocation6 + $0x68] sm:$0xff]
    %v2044 = vld [vmem:[#allocation6 + $0x70] sm:$0xff]
    %v2045 = vld [vmem:[#allocation6 + $0x78] sm:$0xff]
    %v2046 = vld [vmem:[#allocation6 + $0x80] sm:$0xff]
    %v2047 = vld [vmem:[#allocation6 + $0x88] sm:$0xff]
    %v2048 = vld [vmem:[#allocation6 + $0x90] sm:$0xff]
    %v2049 = vld [vmem:[#allocation6 + $0x98] sm:$0xff]
    %v2050 = vld [vmem:[#allocation6 + $0xa0] sm:$0xff]
    %v2051 = vld [vmem:[#allocation6 + $0xa8] sm:$0xff]
    %v2052 = vld [vmem:[#allocation6 + $0xb0] sm:$0xff]
    %v2053 = vld [vmem:[#allocation6 + $0xb8] sm:$0xff]
    %v2054 = vld [vmem:[#allocation6 + $0xc0] sm:$0xff]
    %v2055 = vld [vmem:[#allocation6 + $0xc8] sm:$0xff]
    %v2056 = vld [vmem:[#allocation6 + $0xd0] sm:$0xff]
    %v2057 = vld [vmem:[#allocation6 + $0xd8] sm:$0xff]
    %v2058 = vld [vmem:[#allocation6 + $0xe0] sm:$0xff]
    %v2059 = vld [vmem:[#allocation6 + $0xe8] sm:$0xff]
    %v2060 = vld [vmem:[#allocation6 + $0xf0] sm:$0xff]
    %v2061 = vld [vmem:[#allocation6 + $0xf8] sm:$0xff]
    %v2062 = vld [vmem:[#allocation6 + $0x100] sm:$0xff]
    %v2063 = vld [vmem:[#allocation6 + $0x108] sm:$0xff]
    %v2064 = vld [vmem:[#allocation6 + $0x110] sm:$0xff]
    %v2065 = vld [vmem:[#allocation6 + $0x118] sm:$0xff]
    %v2066 = vld [vmem:[#allocation6 + $0x120] sm:$0xff]
    %v2067 = vld [vmem:[#allocation6 + $0x128] sm:$0xff]
    %v2068 = vld [vmem:[#allocation6 + $0x130] sm:$0xff]
    %v2069 = vld [vmem:[#allocation6 + $0x138] sm:$0xff]
    %v2070 = vld [vmem:[#allocation6 + $0x140] sm:$0xff]
    %v2071 = vld [vmem:[#allocation6 + $0x148] sm:$0xff]
    %v2072 = vld [vmem:[#allocation6 + $0x150] sm:$0xff]
    %v2073 = vld [vmem:[#allocation6 + $0x158] sm:$0xff]
    %v2074 = vld [vmem:[#allocation6 + $0x160] sm:$0xff]
    %v2075 = vld [vmem:[#allocation6 + $0x168] sm:$0xff]
    %v2076 = vld [vmem:[#allocation6 + $0x170] sm:$0xff]
    %v2077 = vld [vmem:[#allocation6 + $0x178] sm:$0xff]
    %v2078 = vld [vmem:[#allocation6 + $0x180] sm:$0xff]
    %v2079 = vld [vmem:[#allocation6 + $0x188] sm:$0xff]
    %v2080 = vld [vmem:[#allocation6 + $0x190] sm:$0xff]
    %v2081 = vld [vmem:[#allocation6 + $0x198] sm:$0xff]
    %v2082 = vld [vmem:[#allocation6 + $0x1a0] sm:$0xff]
    %v2083 = vld [vmem:[#allocation6 + $0x1a8] sm:$0xff]
    %v2084 = vld [vmem:[#allocation6 + $0x1b0] sm:$0xff]
    %v2085 = vld [vmem:[#allocation6 + $0x1b8] sm:$0xff]
    %v2086 = vld [vmem:[#allocation6 + $0x1c0] sm:$0xff]
    %v2087 = vld [vmem:[#allocation6 + $0x1c8] sm:$0xff]
    %v2088 = vld [vmem:[#allocation6 + $0x1d0] sm:$0xff]
    %v2089 = vld [vmem:[#allocation6 + $0x1d8] sm:$0xff]
    %v2090 = vld [vmem:[#allocation6 + $0x1e0] sm:$0xff]
    %v2091 = vld [vmem:[#allocation6 + $0x1e8] sm:$0xff]
    %v2092 = vld [vmem:[#allocation6 + $0x1f0] sm:$0xff]
    %v2093 = vld [vmem:[#allocation6 + $0x1f8] sm:$0xff]
    %v2126 = vunpack.c.l.b16 %v2062
    %v2127 = vunpack.c.h.b16 %v2062
    %v2128 = vunpack.c.l.b16 %v2063
    %v2129 = vunpack.c.h.b16 %v2063
    %v2130 = vunpack.c.l.b16 %v2064
    %v2131 = vunpack.c.h.b16 %v2064
    %v2132 = vunpack.c.l.b16 %v2065
    %v2133 = vunpack.c.h.b16 %v2065
    %v2134 = vunpack.c.l.b16 %v2066
    %v2135 = vunpack.c.h.b16 %v2066
    %v2136 = vunpack.c.l.b16 %v2067
    %v2137 = vunpack.c.h.b16 %v2067
    %v2138 = vunpack.c.l.b16 %v2068
    %v2139 = vunpack.c.h.b16 %v2068
    %v2140 = vunpack.c.l.b16 %v2069
    %v2141 = vunpack.c.h.b16 %v2069
    %v2142 = vunpack.c.l.b16 %v2070
    %v2143 = vunpack.c.h.b16 %v2070
    %v2144 = vunpack.c.l.b16 %v2071
    %v2145 = vunpack.c.h.b16 %v2071
    %v2146 = vunpack.c.l.b16 %v2072
    %v2147 = vunpack.c.h.b16 %v2072
    %v2148 = vunpack.c.l.b16 %v2073
    %v2149 = vunpack.c.h.b16 %v2073
    %v2150 = vunpack.c.l.b16 %v2074
    %v2151 = vunpack.c.h.b16 %v2074
    %v2152 = vunpack.c.l.b16 %v2075
    %v2153 = vunpack.c.h.b16 %v2075
    %v2154 = vunpack.c.l.b16 %v2076
    %v2155 = vunpack.c.h.b16 %v2076
    %v2156 = vunpack.c.l.b16 %v2077
    %v2157 = vunpack.c.h.b16 %v2077
    %v2158 = vunpack.c.l.b16 %v2078
    %v2159 = vunpack.c.h.b16 %v2078
    %v2160 = vunpack.c.l.b16 %v2079
    %v2161 = vunpack.c.h.b16 %v2079
    %v2162 = vunpack.c.l.b16 %v2080
    %v2163 = vunpack.c.h.b16 %v2080
    %v2164 = vunpack.c.l.b16 %v2081
    %v2165 = vunpack.c.h.b16 %v2081
    %v2166 = vunpack.c.l.b16 %v2082
    %v2167 = vunpack.c.h.b16 %v2082
    %v2168 = vunpack.c.l.b16 %v2083
    %v2169 = vunpack.c.h.b16 %v2083
    %v2170 = vunpack.c.l.b16 %v2084
    %v2171 = vunpack.c.h.b16 %v2084
    %v2172 = vunpack.c.l.b16 %v2085
    %v2173 = vunpack.c.h.b16 %v2085
    %v2174 = vunpack.c.l.b16 %v2086
    %v2175 = vunpack.c.h.b16 %v2086
    %v2176 = vunpack.c.l.b16 %v2087
    %v2177 = vunpack.c.h.b16 %v2087
    %v2178 = vunpack.c.l.b16 %v2088
    %v2179 = vunpack.c.h.b16 %v2088
    %v2180 = vunpack.c.l.b16 %v2089
    %v2181 = vunpack.c.h.b16 %v2089
    %v2182 = vunpack.c.l.b16 %v2090
    %v2183 = vunpack.c.h.b16 %v2090
    %v2184 = vunpack.c.l.b16 %v2091
    %v2185 = vunpack.c.h.b16 %v2091
    %v2186 = vunpack.c.l.b16 %v2092
    %v2187 = vunpack.c.h.b16 %v2092
    %v2188 = vunpack.c.l.b16 %v2093
    %v2189 = vunpack.c.h.b16 %v2093
    %v2190 = vpack.c.b16 %v2130, %v2126
    %v2191 = vpack.c.b16 %v2131, %v2127
    %v2192 = vpack.c.b16 %v2132, %v2128
    %v2193 = vpack.c.b16 %v2133, %v2129
    %v2194 = vpack.c.b16 %v2138, %v2134
    %v2195 = vpack.c.b16 %v2139, %v2135
    %v2196 = vpack.c.b16 %v2140, %v2136
    %v2197 = vpack.c.b16 %v2141, %v2137
    %v2198 = vpack.c.b16 %v2146, %v2142
    %v2199 = vpack.c.b16 %v2147, %v2143
    %v2200 = vpack.c.b16 %v2148, %v2144
    %v2201 = vpack.c.b16 %v2149, %v2145
    %v2202 = vpack.c.b16 %v2154, %v2150
    %v2203 = vpack.c.b16 %v2155, %v2151
    %v2204 = vpack.c.b16 %v2156, %v2152
    %v2205 = vpack.c.b16 %v2157, %v2153
    %v2206 = vpack.c.b16 %v2162, %v2158
    %v2207 = vpack.c.b16 %v2163, %v2159
    %v2208 = vpack.c.b16 %v2164, %v2160
    %v2209 = vpack.c.b16 %v2165, %v2161
    %v2210 = vpack.c.b16 %v2170, %v2166
    %v2211 = vpack.c.b16 %v2171, %v2167
    %v2212 = vpack.c.b16 %v2172, %v2168
    %v2213 = vpack.c.b16 %v2173, %v2169
    %v2214 = vpack.c.b16 %v2178, %v2174
    %v2215 = vpack.c.b16 %v2179, %v2175
    %v2216 = vpack.c.b16 %v2180, %v2176
    %v2217 = vpack.c.b16 %v2181, %v2177
    %v2218 = vpack.c.b16 %v2186, %v2182
    %v2219 = vpack.c.b16 %v2187, %v2183
    %v2220 = vpack.c.b16 %v2188, %v2184
    %v2221 = vpack.c.b16 %v2189, %v2185
    %2254 = vmatprep.subr.bf16.mxu0 %v2191
    %2255 = vmatpush1.bf16.msra.mxu0 %v2190
    %2256 = vmatprep.subr.bf16.mxu0 %v2195
    %2257 = vmatpush1.bf16.msra.mxu0 %v2194
    %2258 = vmatprep.subr.bf16.mxu0 %v2199
    %2259 = vmatpush1.bf16.msra.mxu0 %v2198
    %2260 = vmatprep.subr.bf16.mxu0 %v2203
    %2261 = vmatpush1.bf16.msra.mxu0 %v2202
    %2262 = vmatprep.subr.bf16.mxu0 %v2207
    %2263 = vmatpush1.bf16.msra.mxu0 %v2206
    %2264 = vmatprep.subr.bf16.mxu0 %v2211
    %2265 = vmatpush1.bf16.msra.mxu0 %v2210
    %2266 = vmatprep.subr.bf16.mxu0 %v2215
    %2267 = vmatpush1.bf16.msra.mxu0 %v2214
    %2268 = vmatprep.subr.bf16.mxu0 %v2219
    %2269 = vmatpush1.bf16.msra.mxu0 %v2218
    %2270 = vmatprep.subr.bf16.mxu0 0
    %2271 = vmatpush1.bf16.msra.mxu0 0
    %2272 = vmatprep.subr.bf16.mxu0 0
    %2273 = vmatpush1.bf16.msra.mxu0 0
    %2274 = vmatprep.subr.bf16.mxu0 0
    %2275 = vmatpush1.bf16.msra.mxu0 0
    %2276 = vmatprep.subr.bf16.mxu0 0
    %2277 = vmatpush1.bf16.msra.mxu0 0
    %2278 = vmatprep.subr.bf16.mxu0 0
    %2279 = vmatpush1.bf16.msra.mxu0 0
    %2280 = vmatprep.subr.bf16.mxu0 0
    %2281 = vmatpush1.bf16.msra.mxu0 0
    %2282 = vmatprep.subr.bf16.mxu0 0
    %2283 = vmatpush1.bf16.msra.mxu0 0
    %2284 = vmatprep.subr.bf16.mxu0 0
    %2285 = vmatpush1.bf16.msra.mxu0 0
    %2286 = vmatprep.mubr.bf16.mxu0 0
    %2287 = vmatmul.mubr.bf16.gmra.mrb[0].mxu0 %v2020
    %v2288 = vpop.f32.mrb[0].mxu0
    %v2289 = vadd.f32 0.0, %v2288
    %v2290 = vpop.f32.mrb[0].mxu0
    %v2291 = vadd.f32 0.0, %v2290
    %v2292 = vpop.f32.mrb[0].mxu0
    %v2293 = vpop.f32.mrb[0].mxu0
    %2294 = vdwg.mxu0
    %2295 = vmatprep.subr.bf16.mxu0 %v2193
    %2296 = vmatpush1.bf16.msra.mxu0 %v2192
    %2297 = vmatprep.subr.bf16.mxu0 %v2197
    %2298 = vmatpush1.bf16.msra.mxu0 %v2196
    %2299 = vmatprep.subr.bf16.mxu0 %v2201
    %2300 = vmatpush1.bf16.msra.mxu0 %v2200
    %2301 = vmatprep.subr.bf16.mxu0 %v2205
    %2302 = vmatpush1.bf16.msra.mxu0 %v2204
    %2303 = vmatprep.subr.bf16.mxu0 %v2209
    %2304 = vmatpush1.bf16.msra.mxu0 %v2208
    %2305 = vmatprep.subr.bf16.mxu0 %v2213
    %2306 = vmatpush1.bf16.msra.mxu0 %v2212
    %2307 = vmatprep.subr.bf16.mxu0 %v2217
    %2308 = vmatpush1.bf16.msra.mxu0 %v2216
    %2309 = vmatprep.subr.bf16.mxu0 %v2221
    %2310 = vmatpush1.bf16.msra.mxu0 %v2220
    %2311 = vmatprep.subr.bf16.mxu0 0
    %2312 = vmatpush1.bf16.msra.mxu0 0
    %2313 = vmatprep.subr.bf16.mxu0 0
    %2314 = vmatpush1.bf16.msra.mxu0 0
    %2315 = vmatprep.subr.bf16.mxu0 0
    %2316 = vmatpush1.bf16.msra.mxu0 0
    %2317 = vmatprep.subr.bf16.mxu0 0
    %2318 = vmatpush1.bf16.msra.mxu0 0
    %2319 = vmatprep.subr.bf16.mxu0 0
    %2320 = vmatpush1.bf16.msra.mxu0 0
    %2321 = vmatprep.subr.bf16.mxu0 0
    %2322 = vmatpush1.bf16.msra.mxu0 0
    %2323 = vmatprep.subr.bf16.mxu0 0
    %2324 = vmatpush1.bf16.msra.mxu0 0
    %2325 = vmatprep.subr.bf16.mxu0 0
    %2326 = vmatpush1.bf16.msra.mxu0 0
    %2327 = vmatprep.mubr.bf16.mxu0 0
    %2328 = vmatmul.mubr.bf16.gmra.mrb[0].mxu0 %v2020
    %v2329 = vpop.f32.mrb[0].mxu0
    %v2330 = vadd.f32 0.0, %v2329
    %v2331 = vpop.f32.mrb[0].mxu0
    %v2332 = vadd.f32 0.0, %v2331
    %v2333 = vpop.f32.mrb[0].mxu0
    %v2334 = vpop.f32.mrb[0].mxu0
    %2335 = vdwg.mxu0
    %v2337 = vshrl.u32 %v2029, 16
    %v2339 = vrot.slane %v2337, 1
    %v2373 = vunpack.c.l.b16 %v2030
    %v2374 = vunpack.c.h.b16 %v2030
    %v2375 = vunpack.c.l.b16 %v2031
    %v2376 = vunpack.c.h.b16 %v2031
    %v2377 = vunpack.c.l.b16 %v2032
    %v2378 = vunpack.c.h.b16 %v2032
    %v2379 = vunpack.c.l.b16 %v2033
    %v2380 = vunpack.c.h.b16 %v2033
    %v2381 = vunpack.c.l.b16 %v2034
    %v2382 = vunpack.c.h.b16 %v2034
    %v2383 = vunpack.c.l.b16 %v2035
    %v2384 = vunpack.c.h.b16 %v2035
    %v2385 = vunpack.c.l.b16 %v2036
    %v2386 = vunpack.c.h.b16 %v2036
    %v2387 = vunpack.c.l.b16 %v2037
    %v2388 = vunpack.c.h.b16 %v2037
    %v2389 = vunpack.c.l.b16 %v2038
    %v2390 = vunpack.c.h.b16 %v2038
    %v2391 = vunpack.c.l.b16 %v2039
    %v2392 = vunpack.c.h.b16 %v2039
    %v2393 = vunpack.c.l.b16 %v2040
    %v2394 = vunpack.c.h.b16 %v2040
    %v2395 = vunpack.c.l.b16 %v2041
    %v2396 = vunpack.c.h.b16 %v2041
    %v2397 = vunpack.c.l.b16 %v2042
    %v2398 = vunpack.c.h.b16 %v2042
    %v2399 = vunpack.c.l.b16 %v2043
    %v2400 = vunpack.c.h.b16 %v2043
    %v2401 = vunpack.c.l.b16 %v2044
    %v2402 = vunpack.c.h.b16 %v2044
    %v2403 = vunpack.c.l.b16 %v2045
    %v2404 = vunpack.c.h.b16 %v2045
    %v2405 = vunpack.c.l.b16 %v2046
    %v2406 = vunpack.c.h.b16 %v2046
    %v2407 = vunpack.c.l.b16 %v2047
    %v2408 = vunpack.c.h.b16 %v2047
    %v2409 = vunpack.c.l.b16 %v2048
    %v2410 = vunpack.c.h.b16 %v2048
    %v2411 = vunpack.c.l.b16 %v2049
    %v2412 = vunpack.c.h.b16 %v2049
    %v2413 = vunpack.c.l.b16 %v2050
    %v2414 = vunpack.c.h.b16 %v2050
    %v2415 = vunpack.c.l.b16 %v2051
    %v2416 = vunpack.c.h.b16 %v2051
    %v2417 = vunpack.c.l.b16 %v2052
    %v2418 = vunpack.c.h.b16 %v2052
    %v2419 = vunpack.c.l.b16 %v2053
    %v2420 = vunpack.c.h.b16 %v2053
    %v2421 = vunpack.c.l.b16 %v2054
    %v2422 = vunpack.c.h.b16 %v2054
    %v2423 = vunpack.c.l.b16 %v2055
    %v2424 = vunpack.c.h.b16 %v2055
    %v2425 = vunpack.c.l.b16 %v2056
    %v2426 = vunpack.c.h.b16 %v2056
    %v2427 = vunpack.c.l.b16 %v2057
    %v2428 = vunpack.c.h.b16 %v2057
    %v2429 = vunpack.c.l.b16 %v2058
    %v2430 = vunpack.c.h.b16 %v2058
    %v2431 = vunpack.c.l.b16 %v2059
    %v2432 = vunpack.c.h.b16 %v2059
    %v2433 = vunpack.c.l.b16 %v2060
    %v2434 = vunpack.c.h.b16 %v2060
    %v2435 = vunpack.c.l.b16 %v2061
    %v2436 = vunpack.c.h.b16 %v2061
    %v2437 = vpack.c.b16 %v2377, %v2373
    %v2438 = vpack.c.b16 %v2378, %v2374
    %v2439 = vpack.c.b16 %v2379, %v2375
    %v2440 = vpack.c.b16 %v2380, %v2376
    %v2441 = vpack.c.b16 %v2385, %v2381
    %v2442 = vpack.c.b16 %v2386, %v2382
    %v2443 = vpack.c.b16 %v2387, %v2383
    %v2444 = vpack.c.b16 %v2388, %v2384
    %v2445 = vpack.c.b16 %v2393, %v2389
    %v2446 = vpack.c.b16 %v2394, %v2390
    %v2447 = vpack.c.b16 %v2395, %v2391
    %v2448 = vpack.c.b16 %v2396, %v2392
    %v2449 = vpack.c.b16 %v2401, %v2397
    %v2450 = vpack.c.b16 %v2402, %v2398
    %v2451 = vpack.c.b16 %v2403, %v2399
    %v2452 = vpack.c.b16 %v2404, %v2400
    %v2453 = vpack.c.b16 %v2409, %v2405
    %v2454 = vpack.c.b16 %v2410, %v2406
    %v2455 = vpack.c.b16 %v2411, %v2407
    %v2456 = vpack.c.b16 %v2412, %v2408
    %v2457 = vpack.c.b16 %v2417, %v2413
    %v2458 = vpack.c.b16 %v2418, %v2414
    %v2459 = vpack.c.b16 %v2419, %v2415
    %v2460 = vpack.c.b16 %v2420, %v2416
    %v2461 = vpack.c.b16 %v2425, %v2421
    %v2462 = vpack.c.b16 %v2426, %v2422
    %v2463 = vpack.c.b16 %v2427, %v2423
    %v2464 = vpack.c.b16 %v2428, %v2424
    %v2465 = vpack.c.b16 %v2433, %v2429
    %v2466 = vpack.c.b16 %v2434, %v2430
    %v2467 = vpack.c.b16 %v2435, %v2431
    %v2468 = vpack.c.b16 %v2436, %v2432
    %2501 = vmatprep.subr.bf16.mxu0 %v2438
    %2502 = vmatpush1.bf16.msra.mxu0 %v2437
    %2503 = vmatprep.subr.bf16.mxu0 %v2442
    %2504 = vmatpush1.bf16.msra.mxu0 %v2441
    %2505 = vmatprep.subr.bf16.mxu0 %v2446
    %2506 = vmatpush1.bf16.msra.mxu0 %v2445
    %2507 = vmatprep.subr.bf16.mxu0 %v2450
    %2508 = vmatpush1.bf16.msra.mxu0 %v2449
    %2509 = vmatprep.subr.bf16.mxu0 %v2454
    %2510 = vmatpush1.bf16.msra.mxu0 %v2453
    %2511 = vmatprep.subr.bf16.mxu0 %v2458
    %2512 = vmatpush1.bf16.msra.mxu0 %v2457
    %2513 = vmatprep.subr.bf16.mxu0 %v2462
    %2514 = vmatpush1.bf16.msra.mxu0 %v2461
    %2515 = vmatprep.subr.bf16.mxu0 %v2466
    %2516 = vmatpush1.bf16.msra.mxu0 %v2465
    %2517 = vmatprep.subr.bf16.mxu0 0
    %2518 = vmatpush1.bf16.msra.mxu0 0
    %2519 = vmatprep.subr.bf16.mxu0 0
    %2520 = vmatpush1.bf16.msra.mxu0 0
    %2521 = vmatprep.subr.bf16.mxu0 0
    %2522 = vmatpush1.bf16.msra.mxu0 0
    %2523 = vmatprep.subr.bf16.mxu0 0
    %2524 = vmatpush1.bf16.msra.mxu0 0
    %2525 = vmatprep.subr.bf16.mxu0 0
    %2526 = vmatpush1.bf16.msra.mxu0 0
    %2527 = vmatprep.subr.bf16.mxu0 0
    %2528 = vmatpush1.bf16.msra.mxu0 0
    %2529 = vmatprep.subr.bf16.mxu0 0
    %2530 = vmatpush1.bf16.msra.mxu0 0
    %2531 = vmatprep.subr.bf16.mxu0 0
    %2532 = vmatpush1.bf16.msra.mxu0 0
    %2533 = vmatprep.mubr.bf16.mxu0 0
    %2534 = vmatmul.mubr.bf16.gmra.mrb[0].mxu0 %v2339
    %v2535 = vpop.f32.mrb[0].mxu0
    %v2536 = vadd.f32 %v2289, %v2535
    %v2537 = vpop.f32.mrb[0].mxu0
    %v2538 = vadd.f32 %v2291, %v2537
    %v2539 = vpop.f32.mrb[0].mxu0
    %v2540 = vpop.f32.mrb[0].mxu0
    %2541 = vdwg.mxu0
    %2542 = vmatprep.subr.bf16.mxu0 %v2440
    %2543 = vmatpush1.bf16.msra.mxu0 %v2439
    %2544 = vmatprep.subr.bf16.mxu0 %v2444
    %2545 = vmatpush1.bf16.msra.mxu0 %v2443
    %2546 = vmatprep.subr.bf16.mxu0 %v2448
    %2547 = vmatpush1.bf16.msra.mxu0 %v2447
    %2548 = vmatprep.subr.bf16.mxu0 %v2452
    %2549 = vmatpush1.bf16.msra.mxu0 %v2451
    %2550 = vmatprep.subr.bf16.mxu0 %v2456
    %2551 = vmatpush1.bf16.msra.mxu0 %v2455
    %2552 = vmatprep.subr.bf16.mxu0 %v2460
    %2553 = vmatpush1.bf16.msra.mxu0 %v2459
    %2554 = vmatprep.subr.bf16.mxu0 %v2464
    %2555 = vmatpush1.bf16.msra.mxu0 %v2463
    %2556 = vmatprep.subr.bf16.mxu0 %v2468
    %2557 = vmatpush1.bf16.msra.mxu0 %v2467
    %2558 = vmatprep.subr.bf16.mxu0 0
    %2559 = vmatpush1.bf16.msra.mxu0 0
    %2560 = vmatprep.subr.bf16.mxu0 0
    %2561 = vmatpush1.bf16.msra.mxu0 0
    %2562 = vmatprep.subr.bf16.mxu0 0
    %2563 = vmatpush1.bf16.msra.mxu0 0
    %2564 = vmatprep.subr.bf16.mxu0 0
    %2565 = vmatpush1.bf16.msra.mxu0 0
    %2566 = vmatprep.subr.bf16.mxu0 0
    %2567 = vmatpush1.bf16.msra.mxu0 0
    %2568 = vmatprep.subr.bf16.mxu0 0
    %2569 = vmatpush1.bf16.msra.mxu0 0
    %2570 = vmatprep.subr.bf16.mxu0 0
    %2571 = vmatpush1.bf16.msra.mxu0 0
    %2572 = vmatprep.subr.bf16.mxu0 0
    %2573 = vmatpush1.bf16.msra.mxu0 0
    %2574 = vmatprep.mubr.bf16.mxu0 0
    %2575 = vmatmul.mubr.bf16.gmra.mrb[0].mxu0 %v2339
    %v2576 = vpop.f32.mrb[0].mxu0
    %v2577 = vadd.f32 %v2330, %v2576
    %v2578 = vpop.f32.mrb[0].mxu0
    %v2579 = vadd.f32 %v2332, %v2578
    %v2580 = vpop.f32.mrb[0].mxu0
    %v2581 = vpop.f32.mrb[0].mxu0
    %2582 = vdwg.mxu0
    %v2583 = vld [vmem:[%s5] sm:$0xf]
    %v2585 = vlaneseq
    %v2586 = vshrl.u32 %v2585, 7
    %v2587 = vsub.s32 0, %v2586
    %v2588 = vrot.slane %v2583, %v2587
    %v2589 = vlaneseq
    %v2590 = vshrl.u32 %v2589, 7
    %v2591 = vsub.s32 1, %v2590
    %v2592 = vrot.slane %v2583, %v2591
    %v2593 = vlaneseq
    %v2594 = vshrl.u32 %v2593, 7
    %v2595 = vsub.s32 2, %v2594
    %v2596 = vrot.slane %v2583, %v2595
    %v2597 = vlaneseq
    %v2598 = vshrl.u32 %v2597, 7
    %v2599 = vsub.s32 3, %v2598
    %v2600 = vrot.slane %v2583, %v2599
    %v2605 = vadd.f32 %v2536, %v2588
    %v2606 = vadd.f32 %v2538, %v2592
    %v2607 = vadd.f32 %v2577, %v2596
    %v2608 = vadd.f32 %v2579, %v2600
    %v2609 = vxor.u32 %v2605, 2147483648
    %v2610 = vmul.f32 %v2609, 1.442695
    %v2611 = vpow.pop %v2610
    %v2612 = vadd.f32 %v2611, 1.0
    %v2613 = vrcp.pop %v2612
    %v2614 = vmul.f32 1.0, %v2613
    %v2615 = vxor.u32 %v2606, 2147483648
    %v2616 = vmul.f32 %v2615, 1.442695
    %v2617 = vpow.pop %v2616
    %v2618 = vadd.f32 %v2617, 1.0
    %v2619 = vrcp.pop %v2618
    %v2620 = vmul.f32 1.0, %v2619
    %v2621 = vxor.u32 %v2607, 2147483648
    %v2622 = vmul.f32 %v2621, 1.442695
    %v2623 = vpow.pop %v2622
    %v2624 = vadd.f32 %v2623, 1.0
    %v2625 = vrcp.pop %v2624
    %v2626 = vmul.f32 1.0, %v2625
    %v2627 = vtanh.pop %v2608
    %v2628 = vmul.f32 %v2614, %v2627
    %v2629 = vmul.f32 %v2626, %v2012
    %v2630 = vadd.f32 %v2628, %v2629
    %v2631 = vtanh.pop %v2630
    %v2632 = vmul.f32 %v2620, %v2631
    %2633 = vst [vmem:[#allocation9 + $0x3] sm:$0x1] %v2632
    %2634 = vst [vmem:[#allocation10 + $0x3] sm:$0x1] %v2630
    %s2635 = sld [smem:[#allocation3 + $0x4]]
    %p2636 = scmp.eq.s32.totalorder %s2635, 1
    %s2637 = sld [smem:[#allocation4 + $0x4]]
    %s2638 = sld [smem:[#allocation5 + $0x4]]
    %p2639 = scmp.ge.s32.totalorder %s2638, 0
    %p2640 = scmp.eq.s32.totalorder %s2638, 4294967294
    %p2641 = scmp.gt.s32.totalorder %s2638, 0
    %s2642 = scalar_select %p2641, %s2638, 0
    %p2643 = scmp.lt.s32.totalorder %s2642, 7
    %s2644 = scalar_select %p2643, %s2642, 7
    %s2645 = scalar_lea.vmem [#allocation9], %s2644
    %v2646 = vld [vmem:[%s2645] sm:$0x1]
    %s2647 = scalar_lea.vmem [#allocation10], %s2644
    %v2648 = vld [vmem:[%s2647] sm:$0x1]
    %v2649 = vld [vmem:[%s6] sm:$0x1]
    %s2650 = scalar_select %p2640, 1, 0
    %v2651 = vstv %s2650
    %vm2652 = vcmp.eq.s32.totalorder %v2651, 1
    %v2653 = vsel %vm2652, %v2649, 0.0
    %s2654 = scalar_select %p2639, 1, 0
    %v2655 = vstv %s2654
    %vm2656 = vcmp.eq.s32.totalorder %v2655, 1
    %v2657 = vsel %vm2656, %v2646, %v2653
    %v2658 = vld [vmem:[%s7] sm:$0x1]
    %v2659 = vsel %vm2652, %v2658, 0.0
    %v2660 = vsel %vm2656, %v2648, %v2659
    %p2661 = scmp.gt.s32.totalorder %s2637, 0
    %s2662 = scalar_select %p2661, %s2637, 0
    %p2663 = scmp.lt.s32.totalorder %s2662, 7
    %s2664 = scalar_select %p2663, %s2662, 7
    %s2665 = scalar_lea.vmem [#allocation9], %s2664
    %v2666 = vld [vmem:[%s2665] sm:$0x1]
    %v2667 = vld [vmem:[%s3] sm:$0x4]
    %v2668 = vpack.c.bf16 %v2657, %v2657
    %v2669 = vunpack.c.l.bf16 %v2667
    %s2670 = scalar_select %p2636, 1, 0
    %v2671 = vstv %s2670
    %vm2672 = vcmp.eq.s32.totalorder %v2671, 1
    %v2674 = vrot.slane %v2666, 4
    %v2676 = vsel %vm2672, %v2669, %v2674
    %v2677 = vpack.c.bf16 %v2676, %v2676
    %v2678 = vld [vmem:[#allocation6] sm:$0xff]
    %v2679 = vld [vmem:[#allocation6 + $0x8] sm:$0xff]
    %v2680 = vld [vmem:[#allocation6 + $0x10] sm:$0xff]
    %v2681 = vld [vmem:[#allocation6 + $0x18] sm:$0xff]
    %v2682 = vld [vmem:[#allocation6 + $0x20] sm:$0xff]
    %v2683 = vld [vmem:[#allocation6 + $0x28] sm:$0xff]
    %v2684 = vld [vmem:[#allocation6 + $0x30] sm:$0xff]
    %v2685 = vld [vmem:[#allocation6 + $0x38] sm:$0xff]
    %v2686 = vld [vmem:[#allocation6 + $0x40] sm:$0xff]
    %v2687 = vld [vmem:[#allocation6 + $0x48] sm:$0xff]
    %v2688 = vld [vmem:[#allocation6 + $0x50] sm:$0xff]
    %v2689 = vld [vmem:[#allocation6 + $0x58] sm:$0xff]
    %v2690 = vld [vmem:[#allocation6 + $0x60] sm:$0xff]
    %v2691 = vld [vmem:[#allocation6 + $0x68] sm:$0xff]
    %v2692 = vld [vmem:[#allocation6 + $0x70] sm:$0xff]
    %v2693 = vld [vmem:[#allocation6 + $0x78] sm:$0xff]
    %v2694 = vld [vmem:[#allocation6 + $0x80] sm:$0xff]
    %v2695 = vld [vmem:[#allocation6 + $0x88] sm:$0xff]
    %v2696 = vld [vmem:[#allocation6 + $0x90] sm:$0xff]
    %v2697 = vld [vmem:[#allocation6 + $0x98] sm:$0xff]
    %v2698 = vld [vmem:[#allocation6 + $0xa0] sm:$0xff]
    %v2699 = vld [vmem:[#allocation6 + $0xa8] sm:$0xff]
    %v2700 = vld [vmem:[#allocation6 + $0xb0] sm:$0xff]
    %v2701 = vld [vmem:[#allocation6 + $0xb8] sm:$0xff]
    %v2702 = vld [vmem:[#allocation6 + $0xc0] sm:$0xff]
    %v2703 = vld [vmem:[#allocation6 + $0xc8] sm:$0xff]
    %v2704 = vld [vmem:[#allocation6 + $0xd0] sm:$0xff]
    %v2705 = vld [vmem:[#allocation6 + $0xd8] sm:$0xff]
    %v2706 = vld [vmem:[#allocation6 + $0xe0] sm:$0xff]
    %v2707 = vld [vmem:[#allocation6 + $0xe8] sm:$0xff]
    %v2708 = vld [vmem:[#allocation6 + $0xf0] sm:$0xff]
    %v2709 = vld [vmem:[#allocation6 + $0xf8] sm:$0xff]
    %v2710 = vld [vmem:[#allocation6 + $0x100] sm:$0xff]
    %v2711 = vld [vmem:[#allocation6 + $0x108] sm:$0xff]
    %v2712 = vld [vmem:[#allocation6 + $0x110] sm:$0xff]
    %v2713 = vld [vmem:[#allocation6 + $0x118] sm:$0xff]
    %v2714 = vld [vmem:[#allocation6 + $0x120] sm:$0xff]
    %v2715 = vld [vmem:[#allocation6 + $0x128] sm:$0xff]
    %v2716 = vld [vmem:[#allocation6 + $0x130] sm:$0xff]
    %v2717 = vld [vmem:[#allocation6 + $0x138] sm:$0xff]
    %v2718 = vld [vmem:[#allocation6 + $0x140] sm:$0xff]
    %v2719 = vld [vmem:[#allocation6 + $0x148] sm:$0xff]
    %v2720 = vld [vmem:[#allocation6 + $0x150] sm:$0xff]
    %v2721 = vld [vmem:[#allocation6 + $0x158] sm:$0xff]
    %v2722 = vld [vmem:[#allocation6 + $0x160] sm:$0xff]
    %v2723 = vld [vmem:[#allocation6 + $0x168] sm:$0xff]
    %v2724 = vld [vmem:[#allocation6 + $0x170] sm:$0xff]
    %v2725 = vld [vmem:[#allocation6 + $0x178] sm:$0xff]
    %v2726 = vld [vmem:[#allocation6 + $0x180] sm:$0xff]
    %v2727 = vld [vmem:[#allocation6 + $0x188] sm:$0xff]
    %v2728 = vld [vmem:[#allocation6 + $0x190] sm:$0xff]
    %v2729 = vld [vmem:[#allocation6 + $0x198] sm:$0xff]
    %v2730 = vld [vmem:[#allocation6 + $0x1a0] sm:$0xff]
    %v2731 = vld [vmem:[#allocation6 + $0x1a8] sm:$0xff]
    %v2732 = vld [vmem:[#allocation6 + $0x1b0] sm:$0xff]
    %v2733 = vld [vmem:[#allocation6 + $0x1b8] sm:$0xff]
    %v2734 = vld [vmem:[#allocation6 + $0x1c0] sm:$0xff]
    %v2735 = vld [vmem:[#allocation6 + $0x1c8] sm:$0xff]
    %v2736 = vld [vmem:[#allocation6 + $0x1d0] sm:$0xff]
    %v2737 = vld [vmem:[#allocation6 + $0x1d8] sm:$0xff]
    %v2738 = vld [vmem:[#allocation6 + $0x1e0] sm:$0xff]
    %v2739 = vld [vmem:[#allocation6 + $0x1e8] sm:$0xff]
    %v2740 = vld [vmem:[#allocation6 + $0x1f0] sm:$0xff]
    %v2741 = vld [vmem:[#allocation6 + $0x1f8] sm:$0xff]
    %v2774 = vunpack.c.l.b16 %v2710
    %v2775 = vunpack.c.h.b16 %v2710
    %v2776 = vunpack.c.l.b16 %v2711
    %v2777 = vunpack.c.h.b16 %v2711
    %v2778 = vunpack.c.l.b16 %v2712
    %v2779 = vunpack.c.h.b16 %v2712
    %v2780 = vunpack.c.l.b16 %v2713
    %v2781 = vunpack.c.h.b16 %v2713
    %v2782 = vunpack.c.l.b16 %v2714
    %v2783 = vunpack.c.h.b16 %v2714
    %v2784 = vunpack.c.l.b16 %v2715
    %v2785 = vunpack.c.h.b16 %v2715
    %v2786 = vunpack.c.l.b16 %v2716
    %v2787 = vunpack.c.h.b16 %v2716
    %v2788 = vunpack.c.l.b16 %v2717
    %v2789 = vunpack.c.h.b16 %v2717
    %v2790 = vunpack.c.l.b16 %v2718
    %v2791 = vunpack.c.h.b16 %v2718
    %v2792 = vunpack.c.l.b16 %v2719
    %v2793 = vunpack.c.h.b16 %v2719
    %v2794 = vunpack.c.l.b16 %v2720
    %v2795 = vunpack.c.h.b16 %v2720
    %v2796 = vunpack.c.l.b16 %v2721
    %v2797 = vunpack.c.h.b16 %v2721
    %v2798 = vunpack.c.l.b16 %v2722
    %v2799 = vunpack.c.h.b16 %v2722
    %v2800 = vunpack.c.l.b16 %v2723
    %v2801 = vunpack.c.h.b16 %v2723
    %v2802 = vunpack.c.l.b16 %v2724
    %v2803 = vunpack.c.h.b16 %v2724
    %v2804 = vunpack.c.l.b16 %v2725
    %v2805 = vunpack.c.h.b16 %v2725
    %v2806 = vunpack.c.l.b16 %v2726
    %v2807 = vunpack.c.h.b16 %v2726
    %v2808 = vunpack.c.l.b16 %v2727
    %v2809 = vunpack.c.h.b16 %v2727
    %v2810 = vunpack.c.l.b16 %v2728
    %v2811 = vunpack.c.h.b16 %v2728
    %v2812 = vunpack.c.l.b16 %v2729
    %v2813 = vunpack.c.h.b16 %v2729
    %v2814 = vunpack.c.l.b16 %v2730
    %v2815 = vunpack.c.h.b16 %v2730
    %v2816 = vunpack.c.l.b16 %v2731
    %v2817 = vunpack.c.h.b16 %v2731
    %v2818 = vunpack.c.l.b16 %v2732
    %v2819 = vunpack.c.h.b16 %v2732
    %v2820 = vunpack.c.l.b16 %v2733
    %v2821 = vunpack.c.h.b16 %v2733
    %v2822 = vunpack.c.l.b16 %v2734
    %v2823 = vunpack.c.h.b16 %v2734
    %v2824 = vunpack.c.l.b16 %v2735
    %v2825 = vunpack.c.h.b16 %v2735
    %v2826 = vunpack.c.l.b16 %v2736
    %v2827 = vunpack.c.h.b16 %v2736
    %v2828 = vunpack.c.l.b16 %v2737
    %v2829 = vunpack.c.h.b16 %v2737
    %v2830 = vunpack.c.l.b16 %v2738
    %v2831 = vunpack.c.h.b16 %v2738
    %v2832 = vunpack.c.l.b16 %v2739
    %v2833 = vunpack.c.h.b16 %v2739
    %v2834 = vunpack.c.l.b16 %v2740
    %v2835 = vunpack.c.h.b16 %v2740
    %v2836 = vunpack.c.l.b16 %v2741
    %v2837 = vunpack.c.h.b16 %v2741
    %v2838 = vpack.c.b16 %v2778, %v2774
    %v2839 = vpack.c.b16 %v2779, %v2775
    %v2840 = vpack.c.b16 %v2780, %v2776
    %v2841 = vpack.c.b16 %v2781, %v2777
    %v2842 = vpack.c.b16 %v2786, %v2782
    %v2843 = vpack.c.b16 %v2787, %v2783
    %v2844 = vpack.c.b16 %v2788, %v2784
    %v2845 = vpack.c.b16 %v2789, %v2785
    %v2846 = vpack.c.b16 %v2794, %v2790
    %v2847 = vpack.c.b16 %v2795, %v2791
    %v2848 = vpack.c.b16 %v2796, %v2792
    %v2849 = vpack.c.b16 %v2797, %v2793
    %v2850 = vpack.c.b16 %v2802, %v2798
    %v2851 = vpack.c.b16 %v2803, %v2799
    %v2852 = vpack.c.b16 %v2804, %v2800
    %v2853 = vpack.c.b16 %v2805, %v2801
    %v2854 = vpack.c.b16 %v2810, %v2806
    %v2855 = vpack.c.b16 %v2811, %v2807
    %v2856 = vpack.c.b16 %v2812, %v2808
    %v2857 = vpack.c.b16 %v2813, %v2809
    %v2858 = vpack.c.b16 %v2818, %v2814
    %v2859 = vpack.c.b16 %v2819, %v2815
    %v2860 = vpack.c.b16 %v2820, %v2816
    %v2861 = vpack.c.b16 %v2821, %v2817
    %v2862 = vpack.c.b16 %v2826, %v2822
    %v2863 = vpack.c.b16 %v2827, %v2823
    %v2864 = vpack.c.b16 %v2828, %v2824
    %v2865 = vpack.c.b16 %v2829, %v2825
    %v2866 = vpack.c.b16 %v2834, %v2830
    %v2867 = vpack.c.b16 %v2835, %v2831
    %v2868 = vpack.c.b16 %v2836, %v2832
    %v2869 = vpack.c.b16 %v2837, %v2833
    %2902 = vmatprep.subr.bf16.mxu0 %v2839
    %2903 = vmatpush1.bf16.msra.mxu0 %v2838
    %2904 = vmatprep.subr.bf16.mxu0 %v2843
    %2905 = vmatpush1.bf16.msra.mxu0 %v2842
    %2906 = vmatprep.subr.bf16.mxu0 %v2847
    %2907 = vmatpush1.bf16.msra.mxu0 %v2846
    %2908 = vmatprep.subr.bf16.mxu0 %v2851
    %2909 = vmatpush1.bf16.msra.mxu0 %v2850
    %2910 = vmatprep.subr.bf16.mxu0 %v2855
    %2911 = vmatpush1.bf16.msra.mxu0 %v2854
    %2912 = vmatprep.subr.bf16.mxu0 %v2859
    %2913 = vmatpush1.bf16.msra.mxu0 %v2858
    %2914 = vmatprep.subr.bf16.mxu0 %v2863
    %2915 = vmatpush1.bf16.msra.mxu0 %v2862
    %2916 = vmatprep.subr.bf16.mxu0 %v2867
    %2917 = vmatpush1.bf16.msra.mxu0 %v2866
    %2918 = vmatprep.subr.bf16.mxu0 0
    %2919 = vmatpush1.bf16.msra.mxu0 0
    %2920 = vmatprep.subr.bf16.mxu0 0
    %2921 = vmatpush1.bf16.msra.mxu0 0
    %2922 = vmatprep.subr.bf16.mxu0 0
    %2923 = vmatpush1.bf16.msra.mxu0 0
    %2924 = vmatprep.subr.bf16.mxu0 0
    %2925 = vmatpush1.bf16.msra.mxu0 0
    %2926 = vmatprep.subr.bf16.mxu0 0
    %2927 = vmatpush1.bf16.msra.mxu0 0
    %2928 = vmatprep.subr.bf16.mxu0 0
    %2929 = vmatpush1.bf16.msra.mxu0 0
    %2930 = vmatprep.subr.bf16.mxu0 0
    %2931 = vmatpush1.bf16.msra.mxu0 0
    %2932 = vmatprep.subr.bf16.mxu0 0
    %2933 = vmatpush1.bf16.msra.mxu0 0
    %2934 = vmatprep.mubr.bf16.mxu0 0
    %2935 = vmatmul.mubr.bf16.gmra.mrb[0].mxu0 %v2668
    %v2936 = vpop.f32.mrb[0].mxu0
    %v2937 = vadd.f32 0.0, %v2936
    %v2938 = vpop.f32.mrb[0].mxu0
    %v2939 = vadd.f32 0.0, %v2938
    %v2940 = vpop.f32.mrb[0].mxu0
    %v2941 = vpop.f32.mrb[0].mxu0
    %2942 = vdwg.mxu0
    %2943 = vmatprep.subr.bf16.mxu0 %v2841
    %2944 = vmatpush1.bf16.msra.mxu0 %v2840
    %2945 = vmatprep.subr.bf16.mxu0 %v2845
    %2946 = vmatpush1.bf16.msra.mxu0 %v2844
    %2947 = vmatprep.subr.bf16.mxu0 %v2849
    %2948 = vmatpush1.bf16.msra.mxu0 %v2848
    %2949 = vmatprep.subr.bf16.mxu0 %v2853
    %2950 = vmatpush1.bf16.msra.mxu0 %v2852
    %2951 = vmatprep.subr.bf16.mxu0 %v2857
    %2952 = vmatpush1.bf16.msra.mxu0 %v2856
    %2953 = vmatprep.subr.bf16.mxu0 %v2861
    %2954 = vmatpush1.bf16.msra.mxu0 %v2860
    %2955 = vmatprep.subr.bf16.mxu0 %v2865
    %2956 = vmatpush1.bf16.msra.mxu0 %v2864
    %2957 = vmatprep.subr.bf16.mxu0 %v2869
    %2958 = vmatpush1.bf16.msra.mxu0 %v2868
    %2959 = vmatprep.subr.bf16.mxu0 0
    %2960 = vmatpush1.bf16.msra.mxu0 0
    %2961 = vmatprep.subr.bf16.mxu0 0
    %2962 = vmatpush1.bf16.msra.mxu0 0
    %2963 = vmatprep.subr.bf16.mxu0 0
    %2964 = vmatpush1.bf16.msra.mxu0 0
    %2965 = vmatprep.subr.bf16.mxu0 0
    %2966 = vmatpush1.bf16.msra.mxu0 0
    %2967 = vmatprep.subr.bf16.mxu0 0
    %2968 = vmatpush1.bf16.msra.mxu0 0
    %2969 = vmatprep.subr.bf16.mxu0 0
    %2970 = vmatpush1.bf16.msra.mxu0 0
    %2971 = vmatprep.subr.bf16.mxu0 0
    %2972 = vmatpush1.bf16.msra.mxu0 0
    %2973 = vmatprep.subr.bf16.mxu0 0
    %2974 = vmatpush1.bf16.msra.mxu0 0
    %2975 = vmatprep.mubr.bf16.mxu0 0
    %2976 = vmatmul.mubr.bf16.gmra.mrb[0].mxu0 %v2668
    %v2977 = vpop.f32.mrb[0].mxu0
    %v2978 = vadd.f32 0.0, %v2977
    %v2979 = vpop.f32.mrb[0].mxu0
    %v2980 = vadd.f32 0.0, %v2979
    %v2981 = vpop.f32.mrb[0].mxu0
    %v2982 = vpop.f32.mrb[0].mxu0
    %2983 = vdwg.mxu0
    %v2985 = vrot.slane %v2677, 2
    %v3019 = vunpack.c.l.b16 %v2678
    %v3020 = vunpack.c.h.b16 %v2678
    %v3021 = vunpack.c.l.b16 %v2679
    %v3022 = vunpack.c.h.b16 %v2679
    %v3023 = vunpack.c.l.b16 %v2680
    %v3024 = vunpack.c.h.b16 %v2680
    %v3025 = vunpack.c.l.b16 %v2681
    %v3026 = vunpack.c.h.b16 %v2681
    %v3027 = vunpack.c.l.b16 %v2682
    %v3028 = vunpack.c.h.b16 %v2682
    %v3029 = vunpack.c.l.b16 %v2683
    %v3030 = vunpack.c.h.b16 %v2683
    %v3031 = vunpack.c.l.b16 %v2684
    %v3032 = vunpack.c.h.b16 %v2684
    %v3033 = vunpack.c.l.b16 %v2685
    %v3034 = vunpack.c.h.b16 %v2685
    %v3035 = vunpack.c.l.b16 %v2686
    %v3036 = vunpack.c.h.b16 %v2686
    %v3037 = vunpack.c.l.b16 %v2687
    %v3038 = vunpack.c.h.b16 %v2687
    %v3039 = vunpack.c.l.b16 %v2688
    %v3040 = vunpack.c.h.b16 %v2688
    %v3041 = vunpack.c.l.b16 %v2689
    %v3042 = vunpack.c.h.b16 %v2689
    %v3043 = vunpack.c.l.b16 %v2690
    %v3044 = vunpack.c.h.b16 %v2690
    %v3045 = vunpack.c.l.b16 %v2691
    %v3046 = vunpack.c.h.b16 %v2691
    %v3047 = vunpack.c.l.b16 %v2692
    %v3048 = vunpack.c.h.b16 %v2692
    %v3049 = vunpack.c.l.b16 %v2693
    %v3050 = vunpack.c.h.b16 %v2693
    %v3051 = vunpack.c.l.b16 %v2694
    %v3052 = vunpack.c.h.b16 %v2694
    %v3053 = vunpack.c.l.b16 %v2695
    %v3054 = vunpack.c.h.b16 %v2695
    %v3055 = vunpack.c.l.b16 %v2696
    %v3056 = vunpack.c.h.b16 %v2696
    %v3057 = vunpack.c.l.b16 %v2697
    %v3058 = vunpack.c.h.b16 %v2697
    %v3059 = vunpack.c.l.b16 %v2698
    %v3060 = vunpack.c.h.b16 %v2698
    %v3061 = vunpack.c.l.b16 %v2699
    %v3062 = vunpack.c.h.b16 %v2699
    %v3063 = vunpack.c.l.b16 %v2700
    %v3064 = vunpack.c.h.b16 %v2700
    %v3065 = vunpack.c.l.b16 %v2701
    %v3066 = vunpack.c.h.b16 %v2701
    %v3067 = vunpack.c.l.b16 %v2702
    %v3068 = vunpack.c.h.b16 %v2702
    %v3069 = vunpack.c.l.b16 %v2703
    %v3070 = vunpack.c.h.b16 %v2703
    %v3071 = vunpack.c.l.b16 %v2704
    %v3072 = vunpack.c.h.b16 %v2704
    %v3073 = vunpack.c.l.b16 %v2705
    %v3074 = vunpack.c.h.b16 %v2705
    %v3075 = vunpack.c.l.b16 %v2706
    %v3076 = vunpack.c.h.b16 %v2706
    %v3077 = vunpack.c.l.b16 %v2707
    %v3078 = vunpack.c.h.b16 %v2707
    %v3079 = vunpack.c.l.b16 %v2708
    %v3080 = vunpack.c.h.b16 %v2708
    %v3081 = vunpack.c.l.b16 %v2709
    %v3082 = vunpack.c.h.b16 %v2709
    %v3083 = vpack.c.b16 %v3023, %v3019
    %v3084 = vpack.c.b16 %v3024, %v3020
    %v3085 = vpack.c.b16 %v3025, %v3021
    %v3086 = vpack.c.b16 %v3026, %v3022
    %v3087 = vpack.c.b16 %v3031, %v3027
    %v3088 = vpack.c.b16 %v3032, %v3028
    %v3089 = vpack.c.b16 %v3033, %v3029
    %v3090 = vpack.c.b16 %v3034, %v3030
    %v3091 = vpack.c.b16 %v3039, %v3035
    %v3092 = vpack.c.b16 %v3040, %v3036
    %v3093 = vpack.c.b16 %v3041, %v3037
    %v3094 = vpack.c.b16 %v3042, %v3038
    %v3095 = vpack.c.b16 %v3047, %v3043
    %v3096 = vpack.c.b16 %v3048, %v3044
    %v3097 = vpack.c.b16 %v3049, %v3045
    %v3098 = vpack.c.b16 %v3050, %v3046
    %v3099 = vpack.c.b16 %v3055, %v3051
    %v3100 = vpack.c.b16 %v3056, %v3052
    %v3101 = vpack.c.b16 %v3057, %v3053
    %v3102 = vpack.c.b16 %v3058, %v3054
    %v3103 = vpack.c.b16 %v3063, %v3059
    %v3104 = vpack.c.b16 %v3064, %v3060
    %v3105 = vpack.c.b16 %v3065, %v3061
    %v3106 = vpack.c.b16 %v3066, %v3062
    %v3107 = vpack.c.b16 %v3071, %v3067
    %v3108 = vpack.c.b16 %v3072, %v3068
    %v3109 = vpack.c.b16 %v3073, %v3069
    %v3110 = vpack.c.b16 %v3074, %v3070
    %v3111 = vpack.c.b16 %v3079, %v3075
    %v3112 = vpack.c.b16 %v3080, %v3076
    %v3113 = vpack.c.b16 %v3081, %v3077
    %v3114 = vpack.c.b16 %v3082, %v3078
    %3147 = vmatprep.subr.bf16.mxu0 %v3084
    %3148 = vmatpush1.bf16.msra.mxu0 %v3083
    %3149 = vmatprep.subr.bf16.mxu0 %v3088
    %3150 = vmatpush1.bf16.msra.mxu0 %v3087
    %3151 = vmatprep.subr.bf16.mxu0 %v3092
    %3152 = vmatpush1.bf16.msra.mxu0 %v3091
    %3153 = vmatprep.subr.bf16.mxu0 %v3096
    %3154 = vmatpush1.bf16.msra.mxu0 %v3095
    %3155 = vmatprep.subr.bf16.mxu0 %v3100
    %3156 = vmatpush1.bf16.msra.mxu0 %v3099
    %3157 = vmatprep.subr.bf16.mxu0 %v3104
    %3158 = vmatpush1.bf16.msra.mxu0 %v3103
    %3159 = vmatprep.subr.bf16.mxu0 %v3108
    %3160 = vmatpush1.bf16.msra.mxu0 %v3107
    %3161 = vmatprep.subr.bf16.mxu0 %v3112
    %3162 = vmatpush1.bf16.msra.mxu0 %v3111
    %3163 = vmatprep.subr.bf16.mxu0 0
    %3164 = vmatpush1.bf16.msra.mxu0 0
    %3165 = vmatprep.subr.bf16.mxu0 0
    %3166 = vmatpush1.bf16.msra.mxu0 0
    %3167 = vmatprep.subr.bf16.mxu0 0
    %3168 = vmatpush1.bf16.msra.mxu0 0
    %3169 = vmatprep.subr.bf16.mxu0 0
    %3170 = vmatpush1.bf16.msra.mxu0 0
    %3171 = vmatprep.subr.bf16.mxu0 0
    %3172 = vmatpush1.bf16.msra.mxu0 0
    %3173 = vmatprep.subr.bf16.mxu0 0
    %3174 = vmatpush1.bf16.msra.mxu0 0
    %3175 = vmatprep.subr.bf16.mxu0 0
    %3176 = vmatpush1.bf16.msra.mxu0 0
    %3177 = vmatprep.subr.bf16.mxu0 0
    %3178 = vmatpush1.bf16.msra.mxu0 0
    %3179 = vmatprep.mubr.bf16.mxu0 0
    %3180 = vmatmul.mubr.bf16.gmra.mrb[0].mxu0 %v2985
    %v3181 = vpop.f32.mrb[0].mxu0
    %v3182 = vadd.f32 %v2937, %v3181
    %v3183 = vpop.f32.mrb[0].mxu0
    %v3184 = vadd.f32 %v2939, %v3183
    %v3185 = vpop.f32.mrb[0].mxu0
    %v3186 = vpop.f32.mrb[0].mxu0
    %3187 = vdwg.mxu0
    %3188 = vmatprep.subr.bf16.mxu0 %v3086
    %3189 = vmatpush1.bf16.msra.mxu0 %v3085
    %3190 = vmatprep.subr.bf16.mxu0 %v3090
    %3191 = vmatpush1.bf16.msra.mxu0 %v3089
    %3192 = vmatprep.subr.bf16.mxu0 %v3094
    %3193 = vmatpush1.bf16.msra.mxu0 %v3093
    %3194 = vmatprep.subr.bf16.mxu0 %v3098
    %3195 = vmatpush1.bf16.msra.mxu0 %v3097
    %3196 = vmatprep.subr.bf16.mxu0 %v3102
    %3197 = vmatpush1.bf16.msra.mxu0 %v3101
    %3198 = vmatprep.subr.bf16.mxu0 %v3106
    %3199 = vmatpush1.bf16.msra.mxu0 %v3105
    %3200 = vmatprep.subr.bf16.mxu0 %v3110
    %3201 = vmatpush1.bf16.msra.mxu0 %v3109
    %3202 = vmatprep.subr.bf16.mxu0 %v3114
    %3203 = vmatpush1.bf16.msra.mxu0 %v3113
    %3204 = vmatprep.subr.bf16.mxu0 0
    %3205 = vmatpush1.bf16.msra.mxu0 0
    %3206 = vmatprep.subr.bf16.mxu0 0
    %3207 = vmatpush1.bf16.msra.mxu0 0
    %3208 = vmatprep.subr.bf16.mxu0 0
    %3209 = vmatpush1.bf16.msra.mxu0 0
    %3210 = vmatprep.subr.bf16.mxu0 0
    %3211 = vmatpush1.bf16.msra.mxu0 0
    %3212 = vmatprep.subr.bf16.mxu0 0
    %3213 = vmatpush1.bf16.msra.mxu0 0
    %3214 = vmatprep.subr.bf16.mxu0 0
    %3215 = vmatpush1.bf16.msra.mxu0 0
    %3216 = vmatprep.subr.bf16.mxu0 0
    %3217 = vmatpush1.bf16.msra.mxu0 0
    %3218 = vmatprep.subr.bf16.mxu0 0
    %3219 = vmatpush1.bf16.msra.mxu0 0
    %3220 = vmatprep.mubr.bf16.mxu0 0
    %3221 = vmatmul.mubr.bf16.gmra.mrb[0].mxu0 %v2985
    %v3222 = vpop.f32.mrb[0].mxu0
    %v3223 = vadd.f32 %v2978, %v3222
    %v3224 = vpop.f32.mrb[0].mxu0
    %v3225 = vadd.f32 %v2980, %v3224
    %v3226 = vpop.f32.mrb[0].mxu0
    %v3227 = vpop.f32.mrb[0].mxu0
    %3228 = vdwg.mxu0
    %v3229 = vld [vmem:[%s5] sm:$0xf]
    %v3231 = vlaneseq
    %v3232 = vshrl.u32 %v3231, 7
    %v3233 = vsub.s32 0, %v3232
    %v3234 = vrot.slane %v3229, %v3233
    %v3235 = vlaneseq
    %v3236 = vshrl.u32 %v3235, 7
    %v3237 = vsub.s32 1, %v3236
    %v3238 = vrot.slane %v3229, %v3237
    %v3239 = vlaneseq
    %v3240 = vshrl.u32 %v3239, 7
    %v3241 = vsub.s32 2, %v3240
    %v3242 = vrot.slane %v3229, %v3241
    %v3243 = vlaneseq
    %v3244 = vshrl.u32 %v3243, 7
    %v3245 = vsub.s32 3, %v3244
    %v3246 = vrot.slane %v3229, %v3245
    %v3251 = vadd.f32 %v3182, %v3234
    %v3252 = vadd.f32 %v3184, %v3238
    %v3253 = vadd.f32 %v3223, %v3242
    %v3254 = vadd.f32 %v3225, %v3246
    %v3255 = vxor.u32 %v3251, 2147483648
    %v3256 = vmul.f32 %v3255, 1.442695
    %v3257 = vpow.pop %v3256
    %v3258 = vadd.f32 %v3257, 1.0
    %v3259 = vrcp.pop %v3258
    %v3260 = vmul.f32 1.0, %v3259
    %v3261 = vxor.u32 %v3252, 2147483648
    %v3262 = vmul.f32 %v3261, 1.442695
    %v3263 = vpow.pop %v3262
    %v3264 = vadd.f32 %v3263, 1.0
    %v3265 = vrcp.pop %v3264
    %v3266 = vmul.f32 1.0, %v3265
    %v3267 = vxor.u32 %v3253, 2147483648
    %v3268 = vmul.f32 %v3267, 1.442695
    %v3269 = vpow.pop %v3268
    %v3270 = vadd.f32 %v3269, 1.0
    %v3271 = vrcp.pop %v3270
    %v3272 = vmul.f32 1.0, %v3271
    %v3273 = vtanh.pop %v3254
    %v3274 = vmul.f32 %v3260, %v3273
    %v3275 = vmul.f32 %v3272, %v2660
    %v3276 = vadd.f32 %v3274, %v3275
    %v3277 = vtanh.pop %v3276
    %v3278 = vmul.f32 %v3266, %v3277
    %3279 = vst [vmem:[#allocation9 + $0x4] sm:$0x1] %v3278
    %3280 = vst [vmem:[#allocation10 + $0x4] sm:$0x1] %v3276
    %s3281 = sld [smem:[#allocation3 + $0x5]]
    %p3282 = scmp.eq.s32.totalorder %s3281, 1
    %s3283 = sld [smem:[#allocation4 + $0x5]]
    %s3284 = sld [smem:[#allocation5 + $0x5]]
    %p3285 = scmp.ge.s32.totalorder %s3284, 0
    %p3286 = scmp.eq.s32.totalorder %s3284, 4294967294
    %p3287 = scmp.gt.s32.totalorder %s3284, 0
    %s3288 = scalar_select %p3287, %s3284, 0
    %p3289 = scmp.lt.s32.totalorder %s3288, 7
    %s3290 = scalar_select %p3289, %s3288, 7
    %s3291 = scalar_lea.vmem [#allocation9], %s3290
    %v3292 = vld [vmem:[%s3291] sm:$0x1]
    %s3293 = scalar_lea.vmem [#allocation10], %s3290
    %v3294 = vld [vmem:[%s3293] sm:$0x1]
    %v3295 = vld [vmem:[%s6] sm:$0x1]
    %s3296 = scalar_select %p3286, 1, 0
    %v3297 = vstv %s3296
    %vm3298 = vcmp.eq.s32.totalorder %v3297, 1
    %v3299 = vsel %vm3298, %v3295, 0.0
    %s3300 = scalar_select %p3285, 1, 0
    %v3301 = vstv %s3300
    %vm3302 = vcmp.eq.s32.totalorder %v3301, 1
    %v3303 = vsel %vm3302, %v3292, %v3299
    %v3304 = vld [vmem:[%s7] sm:$0x1]
    %v3305 = vsel %vm3298, %v3304, 0.0
    %v3306 = vsel %vm3302, %v3294, %v3305
    %p3307 = scmp.gt.s32.totalorder %s3283, 0
    %s3308 = scalar_select %p3307, %s3283, 0
    %p3309 = scmp.lt.s32.totalorder %s3308, 7
    %s3310 = scalar_select %p3309, %s3308, 7
    %s3311 = scalar_lea.vmem [#allocation9], %s3310
    %v3312 = vld [vmem:[%s3311] sm:$0x1]
    %v3313 = vld [vmem:[%s3] sm:$0x4]
    %v3314 = vpack.c.bf16 %v3303, %v3303
    %v3315 = vunpack.c.l.bf16 %v3313
    %s3316 = scalar_select %p3282, 1, 0
    %v3317 = vstv %s3316
    %vm3318 = vcmp.eq.s32.totalorder %v3317, 1
    %v3320 = vrot.slane %v3312, 3
    %v3322 = vsel %vm3318, %v3315, %v3320
    %v3323 = vpack.c.bf16 %v3322, %v3322
    %v3324 = vld [vmem:[#allocation6] sm:$0xff]
    %v3325 = vld [vmem:[#allocation6 + $0x8] sm:$0xff]
    %v3326 = vld [vmem:[#allocation6 + $0x10] sm:$0xff]
    %v3327 = vld [vmem:[#allocation6 + $0x18] sm:$0xff]
    %v3328 = vld [vmem:[#allocation6 + $0x20] sm:$0xff]
    %v3329 = vld [vmem:[#allocation6 + $0x28] sm:$0xff]
    %v3330 = vld [vmem:[#allocation6 + $0x30] sm:$0xff]
    %v3331 = vld [vmem:[#allocation6 + $0x38] sm:$0xff]
    %v3332 = vld [vmem:[#allocation6 + $0x40] sm:$0xff]
    %v3333 = vld [vmem:[#allocation6 + $0x48] sm:$0xff]
    %v3334 = vld [vmem:[#allocation6 + $0x50] sm:$0xff]
    %v3335 = vld [vmem:[#allocation6 + $0x58] sm:$0xff]
    %v3336 = vld [vmem:[#allocation6 + $0x60] sm:$0xff]
    %v3337 = vld [vmem:[#allocation6 + $0x68] sm:$0xff]
    %v3338 = vld [vmem:[#allocation6 + $0x70] sm:$0xff]
    %v3339 = vld [vmem:[#allocation6 + $0x78] sm:$0xff]
    %v3340 = vld [vmem:[#allocation6 + $0x80] sm:$0xff]
    %v3341 = vld [vmem:[#allocation6 + $0x88] sm:$0xff]
    %v3342 = vld [vmem:[#allocation6 + $0x90] sm:$0xff]
    %v3343 = vld [vmem:[#allocation6 + $0x98] sm:$0xff]
    %v3344 = vld [vmem:[#allocation6 + $0xa0] sm:$0xff]
    %v3345 = vld [vmem:[#allocation6 + $0xa8] sm:$0xff]
    %v3346 = vld [vmem:[#allocation6 + $0xb0] sm:$0xff]
    %v3347 = vld [vmem:[#allocation6 + $0xb8] sm:$0xff]
    %v3348 = vld [vmem:[#allocation6 + $0xc0] sm:$0xff]
    %v3349 = vld [vmem:[#allocation6 + $0xc8] sm:$0xff]
    %v3350 = vld [vmem:[#allocation6 + $0xd0] sm:$0xff]
    %v3351 = vld [vmem:[#allocation6 + $0xd8] sm:$0xff]
    %v3352 = vld [vmem:[#allocation6 + $0xe0] sm:$0xff]
    %v3353 = vld [vmem:[#allocation6 + $0xe8] sm:$0xff]
    %v3354 = vld [vmem:[#allocation6 + $0xf0] sm:$0xff]
    %v3355 = vld [vmem:[#allocation6 + $0xf8] sm:$0xff]
    %v3356 = vld [vmem:[#allocation6 + $0x100] sm:$0xff]
    %v3357 = vld [vmem:[#allocation6 + $0x108] sm:$0xff]
    %v3358 = vld [vmem:[#allocation6 + $0x110] sm:$0xff]
    %v3359 = vld [vmem:[#allocation6 + $0x118] sm:$0xff]
    %v3360 = vld [vmem:[#allocation6 + $0x120] sm:$0xff]
    %v3361 = vld [vmem:[#allocation6 + $0x128] sm:$0xff]
    %v3362 = vld [vmem:[#allocation6 + $0x130] sm:$0xff]
    %v3363 = vld [vmem:[#allocation6 + $0x138] sm:$0xff]
    %v3364 = vld [vmem:[#allocation6 + $0x140] sm:$0xff]
    %v3365 = vld [vmem:[#allocation6 + $0x148] sm:$0xff]
    %v3366 = vld [vmem:[#allocation6 + $0x150] sm:$0xff]
    %v3367 = vld [vmem:[#allocation6 + $0x158] sm:$0xff]
    %v3368 = vld [vmem:[#allocation6 + $0x160] sm:$0xff]
    %v3369 = vld [vmem:[#allocation6 + $0x168] sm:$0xff]
    %v3370 = vld [vmem:[#allocation6 + $0x170] sm:$0xff]
    %v3371 = vld [vmem:[#allocation6 + $0x178] sm:$0xff]
    %v3372 = vld [vmem:[#allocation6 + $0x180] sm:$0xff]
    %v3373 = vld [vmem:[#allocation6 + $0x188] sm:$0xff]
    %v3374 = vld [vmem:[#allocation6 + $0x190] sm:$0xff]
    %v3375 = vld [vmem:[#allocation6 + $0x198] sm:$0xff]
    %v3376 = vld [vmem:[#allocation6 + $0x1a0] sm:$0xff]
    %v3377 = vld [vmem:[#allocation6 + $0x1a8] sm:$0xff]
    %v3378 = vld [vmem:[#allocation6 + $0x1b0] sm:$0xff]
    %v3379 = vld [vmem:[#allocation6 + $0x1b8] sm:$0xff]
    %v3380 = vld [vmem:[#allocation6 + $0x1c0] sm:$0xff]
    %v3381 = vld [vmem:[#allocation6 + $0x1c8] sm:$0xff]
    %v3382 = vld [vmem:[#allocation6 + $0x1d0] sm:$0xff]
    %v3383 = vld [vmem:[#allocation6 + $0x1d8] sm:$0xff]
    %v3384 = vld [vmem:[#allocation6 + $0x1e0] sm:$0xff]
    %v3385 = vld [vmem:[#allocation6 + $0x1e8] sm:$0xff]
    %v3386 = vld [vmem:[#allocation6 + $0x1f0] sm:$0xff]
    %v3387 = vld [vmem:[#allocation6 + $0x1f8] sm:$0xff]
    %v3420 = vunpack.c.l.b16 %v3356
    %v3421 = vunpack.c.h.b16 %v3356
    %v3422 = vunpack.c.l.b16 %v3357
    %v3423 = vunpack.c.h.b16 %v3357
    %v3424 = vunpack.c.l.b16 %v3358
    %v3425 = vunpack.c.h.b16 %v3358
    %v3426 = vunpack.c.l.b16 %v3359
    %v3427 = vunpack.c.h.b16 %v3359
    %v3428 = vunpack.c.l.b16 %v3360
    %v3429 = vunpack.c.h.b16 %v3360
    %v3430 = vunpack.c.l.b16 %v3361
    %v3431 = vunpack.c.h.b16 %v3361
    %v3432 = vunpack.c.l.b16 %v3362
    %v3433 = vunpack.c.h.b16 %v3362
    %v3434 = vunpack.c.l.b16 %v3363
    %v3435 = vunpack.c.h.b16 %v3363
    %v3436 = vunpack.c.l.b16 %v3364
    %v3437 = vunpack.c.h.b16 %v3364
    %v3438 = vunpack.c.l.b16 %v3365
    %v3439 = vunpack.c.h.b16 %v3365
    %v3440 = vunpack.c.l.b16 %v3366
    %v3441 = vunpack.c.h.b16 %v3366
    %v3442 = vunpack.c.l.b16 %v3367
    %v3443 = vunpack.c.h.b16 %v3367
    %v3444 = vunpack.c.l.b16 %v3368
    %v3445 = vunpack.c.h.b16 %v3368
    %v3446 = vunpack.c.l.b16 %v3369
    %v3447 = vunpack.c.h.b16 %v3369
    %v3448 = vunpack.c.l.b16 %v3370
    %v3449 = vunpack.c.h.b16 %v3370
    %v3450 = vunpack.c.l.b16 %v3371
    %v3451 = vunpack.c.h.b16 %v3371
    %v3452 = vunpack.c.l.b16 %v3372
    %v3453 = vunpack.c.h.b16 %v3372
    %v3454 = vunpack.c.l.b16 %v3373
    %v3455 = vunpack.c.h.b16 %v3373
    %v3456 = vunpack.c.l.b16 %v3374
    %v3457 = vunpack.c.h.b16 %v3374
    %v3458 = vunpack.c.l.b16 %v3375
    %v3459 = vunpack.c.h.b16 %v3375
    %v3460 = vunpack.c.l.b16 %v3376
    %v3461 = vunpack.c.h.b16 %v3376
    %v3462 = vunpack.c.l.b16 %v3377
    %v3463 = vunpack.c.h.b16 %v3377
    %v3464 = vunpack.c.l.b16 %v3378
    %v3465 = vunpack.c.h.b16 %v3378
    %v3466 = vunpack.c.l.b16 %v3379
    %v3467 = vunpack.c.h.b16 %v3379
    %v3468 = vunpack.c.l.b16 %v3380
    %v3469 = vunpack.c.h.b16 %v3380
    %v3470 = vunpack.c.l.b16 %v3381
    %v3471 = vunpack.c.h.b16 %v3381
    %v3472 = vunpack.c.l.b16 %v3382
    %v3473 = vunpack.c.h.b16 %v3382
    %v3474 = vunpack.c.l.b16 %v3383
    %v3475 = vunpack.c.h.b16 %v3383
    %v3476 = vunpack.c.l.b16 %v3384
    %v3477 = vunpack.c.h.b16 %v3384
    %v3478 = vunpack.c.l.b16 %v3385
    %v3479 = vunpack.c.h.b16 %v3385
    %v3480 = vunpack.c.l.b16 %v3386
    %v3481 = vunpack.c.h.b16 %v3386
    %v3482 = vunpack.c.l.b16 %v3387
    %v3483 = vunpack.c.h.b16 %v3387
    %v3484 = vpack.c.b16 %v3424, %v3420
    %v3485 = vpack.c.b16 %v3425, %v3421
    %v3486 = vpack.c.b16 %v3426, %v3422
    %v3487 = vpack.c.b16 %v3427, %v3423
    %v3488 = vpack.c.b16 %v3432, %v3428
    %v3489 = vpack.c.b16 %v3433, %v3429
    %v3490 = vpack.c.b16 %v3434, %v3430
    %v3491 = vpack.c.b16 %v3435, %v3431
    %v3492 = vpack.c.b16 %v3440, %v3436
    %v3493 = vpack.c.b16 %v3441, %v3437
    %v3494 = vpack.c.b16 %v3442, %v3438
    %v3495 = vpack.c.b16 %v3443, %v3439
    %v3496 = vpack.c.b16 %v3448, %v3444
    %v3497 = vpack.c.b16 %v3449, %v3445
    %v3498 = vpack.c.b16 %v3450, %v3446
    %v3499 = vpack.c.b16 %v3451, %v3447
    %v3500 = vpack.c.b16 %v3456, %v3452
    %v3501 = vpack.c.b16 %v3457, %v3453
    %v3502 = vpack.c.b16 %v3458, %v3454
    %v3503 = vpack.c.b16 %v3459, %v3455
    %v3504 = vpack.c.b16 %v3464, %v3460
    %v3505 = vpack.c.b16 %v3465, %v3461
    %v3506 = vpack.c.b16 %v3466, %v3462
    %v3507 = vpack.c.b16 %v3467, %v3463
    %v3508 = vpack.c.b16 %v3472, %v3468
    %v3509 = vpack.c.b16 %v3473, %v3469
    %v3510 = vpack.c.b16 %v3474, %v3470
    %v3511 = vpack.c.b16 %v3475, %v3471
    %v3512 = vpack.c.b16 %v3480, %v3476
    %v3513 = vpack.c.b16 %v3481, %v3477
    %v3514 = vpack.c.b16 %v3482, %v3478
    %v3515 = vpack.c.b16 %v3483, %v3479
    %3548 = vmatprep.subr.bf16.mxu0 %v3485
    %3549 = vmatpush1.bf16.msra.mxu0 %v3484
    %3550 = vmatprep.subr.bf16.mxu0 %v3489
    %3551 = vmatpush1.bf16.msra.mxu0 %v3488
    %3552 = vmatprep.subr.bf16.mxu0 %v3493
    %3553 = vmatpush1.bf16.msra.mxu0 %v3492
    %3554 = vmatprep.subr.bf16.mxu0 %v3497
    %3555 = vmatpush1.bf16.msra.mxu0 %v3496
    %3556 = vmatprep.subr.bf16.mxu0 %v3501
    %3557 = vmatpush1.bf16.msra.mxu0 %v3500
    %3558 = vmatprep.subr.bf16.mxu0 %v3505
    %3559 = vmatpush1.bf16.msra.mxu0 %v3504
    %3560 = vmatprep.subr.bf16.mxu0 %v3509
    %3561 = vmatpush1.bf16.msra.mxu0 %v3508
    %3562 = vmatprep.subr.bf16.mxu0 %v3513
    %3563 = vmatpush1.bf16.msra.mxu0 %v3512
    %3564 = vmatprep.subr.bf16.mxu0 0
    %3565 = vmatpush1.bf16.msra.mxu0 0
    %3566 = vmatprep.subr.bf16.mxu0 0
    %3567 = vmatpush1.bf16.msra.mxu0 0
    %3568 = vmatprep.subr.bf16.mxu0 0
    %3569 = vmatpush1.bf16.msra.mxu0 0
    %3570 = vmatprep.subr.bf16.mxu0 0
    %3571 = vmatpush1.bf16.msra.mxu0 0
    %3572 = vmatprep.subr.bf16.mxu0 0
    %3573 = vmatpush1.bf16.msra.mxu0 0
    %3574 = vmatprep.subr.bf16.mxu0 0
    %3575 = vmatpush1.bf16.msra.mxu0 0
    %3576 = vmatprep.subr.bf16.mxu0 0
    %3577 = vmatpush1.bf16.msra.mxu0 0
    %3578 = vmatprep.subr.bf16.mxu0 0
    %3579 = vmatpush1.bf16.msra.mxu0 0
    %3580 = vmatprep.mubr.bf16.mxu0 0
    %3581 = vmatmul.mubr.bf16.gmra.mrb[0].mxu0 %v3314
    %v3582 = vpop.f32.mrb[0].mxu0
    %v3583 = vadd.f32 0.0, %v3582
    %v3584 = vpop.f32.mrb[0].mxu0
    %v3585 = vadd.f32 0.0, %v3584
    %v3586 = vpop.f32.mrb[0].mxu0
    %v3587 = vpop.f32.mrb[0].mxu0
    %3588 = vdwg.mxu0
    %3589 = vmatprep.subr.bf16.mxu0 %v3487
    %3590 = vmatpush1.bf16.msra.mxu0 %v3486
    %3591 = vmatprep.subr.bf16.mxu0 %v3491
    %3592 = vmatpush1.bf16.msra.mxu0 %v3490
    %3593 = vmatprep.subr.bf16.mxu0 %v3495
    %3594 = vmatpush1.bf16.msra.mxu0 %v3494
    %3595 = vmatprep.subr.bf16.mxu0 %v3499
    %3596 = vmatpush1.bf16.msra.mxu0 %v3498
    %3597 = vmatprep.subr.bf16.mxu0 %v3503
    %3598 = vmatpush1.bf16.msra.mxu0 %v3502
    %3599 = vmatprep.subr.bf16.mxu0 %v3507
    %3600 = vmatpush1.bf16.msra.mxu0 %v3506
    %3601 = vmatprep.subr.bf16.mxu0 %v3511
    %3602 = vmatpush1.bf16.msra.mxu0 %v3510
    %3603 = vmatprep.subr.bf16.mxu0 %v3515
    %3604 = vmatpush1.bf16.msra.mxu0 %v3514
    %3605 = vmatprep.subr.bf16.mxu0 0
    %3606 = vmatpush1.bf16.msra.mxu0 0
    %3607 = vmatprep.subr.bf16.mxu0 0
    %3608 = vmatpush1.bf16.msra.mxu0 0
    %3609 = vmatprep.subr.bf16.mxu0 0
    %3610 = vmatpush1.bf16.msra.mxu0 0
    %3611 = vmatprep.subr.bf16.mxu0 0
    %3612 = vmatpush1.bf16.msra.mxu0 0
    %3613 = vmatprep.subr.bf16.mxu0 0
    %3614 = vmatpush1.bf16.msra.mxu0 0
    %3615 = vmatprep.subr.bf16.mxu0 0
    %3616 = vmatpush1.bf16.msra.mxu0 0
    %3617 = vmatprep.subr.bf16.mxu0 0
    %3618 = vmatpush1.bf16.msra.mxu0 0
    %3619 = vmatprep.subr.bf16.mxu0 0
    %3620 = vmatpush1.bf16.msra.mxu0 0
    %3621 = vmatprep.mubr.bf16.mxu0 0
    %3622 = vmatmul.mubr.bf16.gmra.mrb[0].mxu0 %v3314
    %v3623 = vpop.f32.mrb[0].mxu0
    %v3624 = vadd.f32 0.0, %v3623
    %v3625 = vpop.f32.mrb[0].mxu0
    %v3626 = vadd.f32 0.0, %v3625
    %v3627 = vpop.f32.mrb[0].mxu0
    %v3628 = vpop.f32.mrb[0].mxu0
    %3629 = vdwg.mxu0
    %v3631 = vshrl.u32 %v3323, 16
    %v3633 = vrot.slane %v3631, 2
    %v3667 = vunpack.c.l.b16 %v3324
    %v3668 = vunpack.c.h.b16 %v3324
    %v3669 = vunpack.c.l.b16 %v3325
    %v3670 = vunpack.c.h.b16 %v3325
    %v3671 = vunpack.c.l.b16 %v3326
    %v3672 = vunpack.c.h.b16 %v3326
    %v3673 = vunpack.c.l.b16 %v3327
    %v3674 = vunpack.c.h.b16 %v3327
    %v3675 = vunpack.c.l.b16 %v3328
    %v3676 = vunpack.c.h.b16 %v3328
    %v3677 = vunpack.c.l.b16 %v3329
    %v3678 = vunpack.c.h.b16 %v3329
    %v3679 = vunpack.c.l.b16 %v3330
    %v3680 = vunpack.c.h.b16 %v3330
    %v3681 = vunpack.c.l.b16 %v3331
    %v3682 = vunpack.c.h.b16 %v3331
    %v3683 = vunpack.c.l.b16 %v3332
    %v3684 = vunpack.c.h.b16 %v3332
    %v3685 = vunpack.c.l.b16 %v3333
    %v3686 = vunpack.c.h.b16 %v3333
    %v3687 = vunpack.c.l.b16 %v3334
    %v3688 = vunpack.c.h.b16 %v3334
    %v3689 = vunpack.c.l.b16 %v3335
    %v3690 = vunpack.c.h.b16 %v3335
    %v3691 = vunpack.c.l.b16 %v3336
    %v3692 = vunpack.c.h.b16 %v3336
    %v3693 = vunpack.c.l.b16 %v3337
    %v3694 = vunpack.c.h.b16 %v3337
    %v3695 = vunpack.c.l.b16 %v3338
    %v3696 = vunpack.c.h.b16 %v3338
    %v3697 = vunpack.c.l.b16 %v3339
    %v3698 = vunpack.c.h.b16 %v3339
    %v3699 = vunpack.c.l.b16 %v3340
    %v3700 = vunpack.c.h.b16 %v3340
    %v3701 = vunpack.c.l.b16 %v3341
    %v3702 = vunpack.c.h.b16 %v3341
    %v3703 = vunpack.c.l.b16 %v3342
    %v3704 = vunpack.c.h.b16 %v3342
    %v3705 = vunpack.c.l.b16 %v3343
    %v3706 = vunpack.c.h.b16 %v3343
    %v3707 = vunpack.c.l.b16 %v3344
    %v3708 = vunpack.c.h.b16 %v3344
    %v3709 = vunpack.c.l.b16 %v3345
    %v3710 = vunpack.c.h.b16 %v3345
    %v3711 = vunpack.c.l.b16 %v3346
    %v3712 = vunpack.c.h.b16 %v3346
    %v3713 = vunpack.c.l.b16 %v3347
    %v3714 = vunpack.c.h.b16 %v3347
    %v3715 = vunpack.c.l.b16 %v3348
    %v3716 = vunpack.c.h.b16 %v3348
    %v3717 = vunpack.c.l.b16 %v3349
    %v3718 = vunpack.c.h.b16 %v3349
    %v3719 = vunpack.c.l.b16 %v3350
    %v3720 = vunpack.c.h.b16 %v3350
    %v3721 = vunpack.c.l.b16 %v3351
    %v3722 = vunpack.c.h.b16 %v3351
    %v3723 = vunpack.c.l.b16 %v3352
    %v3724 = vunpack.c.h.b16 %v3352
    %v3725 = vunpack.c.l.b16 %v3353
    %v3726 = vunpack.c.h.b16 %v3353
    %v3727 = vunpack.c.l.b16 %v3354
    %v3728 = vunpack.c.h.b16 %v3354
    %v3729 = vunpack.c.l.b16 %v3355
    %v3730 = vunpack.c.h.b16 %v3355
    %v3731 = vpack.c.b16 %v3671, %v3667
    %v3732 = vpack.c.b16 %v3672, %v3668
    %v3733 = vpack.c.b16 %v3673, %v3669
    %v3734 = vpack.c.b16 %v3674, %v3670
    %v3735 = vpack.c.b16 %v3679, %v3675
    %v3736 = vpack.c.b16 %v3680, %v3676
    %v3737 = vpack.c.b16 %v3681, %v3677
    %v3738 = vpack.c.b16 %v3682, %v3678
    %v3739 = vpack.c.b16 %v3687, %v3683
    %v3740 = vpack.c.b16 %v3688, %v3684
    %v3741 = vpack.c.b16 %v3689, %v3685
    %v3742 = vpack.c.b16 %v3690, %v3686
    %v3743 = vpack.c.b16 %v3695, %v3691
    %v3744 = vpack.c.b16 %v3696, %v3692
    %v3745 = vpack.c.b16 %v3697, %v3693
    %v3746 = vpack.c.b16 %v3698, %v3694
    %v3747 = vpack.c.b16 %v3703, %v3699
    %v3748 = vpack.c.b16 %v3704, %v3700
    %v3749 = vpack.c.b16 %v3705, %v3701
    %v3750 = vpack.c.b16 %v3706, %v3702
    %v3751 = vpack.c.b16 %v3711, %v3707
    %v3752 = vpack.c.b16 %v3712, %v3708
    %v3753 = vpack.c.b16 %v3713, %v3709
    %v3754 = vpack.c.b16 %v3714, %v3710
    %v3755 = vpack.c.b16 %v3719, %v3715
    %v3756 = vpack.c.b16 %v3720, %v3716
    %v3757 = vpack.c.b16 %v3721, %v3717
    %v3758 = vpack.c.b16 %v3722, %v3718
    %v3759 = vpack.c.b16 %v3727, %v3723
    %v3760 = vpack.c.b16 %v3728, %v3724
    %v3761 = vpack.c.b16 %v3729, %v3725
    %v3762 = vpack.c.b16 %v3730, %v3726
    %3795 = vmatprep.subr.bf16.mxu0 %v3732
    %3796 = vmatpush1.bf16.msra.mxu0 %v3731
    %3797 = vmatprep.subr.bf16.mxu0 %v3736
    %3798 = vmatpush1.bf16.msra.mxu0 %v3735
    %3799 = vmatprep.subr.bf16.mxu0 %v3740
    %3800 = vmatpush1.bf16.msra.mxu0 %v3739
    %3801 = vmatprep.subr.bf16.mxu0 %v3744
    %3802 = vmatpush1.bf16.msra.mxu0 %v3743
    %3803 = vmatprep.subr.bf16.mxu0 %v3748
    %3804 = vmatpush1.bf16.msra.mxu0 %v3747
    %3805 = vmatprep.subr.bf16.mxu0 %v3752
    %3806 = vmatpush1.bf16.msra.mxu0 %v3751
    %3807 = vmatprep.subr.bf16.mxu0 %v3756
    %3808 = vmatpush1.bf16.msra.mxu0 %v3755
    %3809 = vmatprep.subr.bf16.mxu0 %v3760
    %3810 = vmatpush1.bf16.msra.mxu0 %v3759
    %3811 = vmatprep.subr.bf16.mxu0 0
    %3812 = vmatpush1.bf16.msra.mxu0 0
    %3813 = vmatprep.subr.bf16.mxu0 0
    %3814 = vmatpush1.bf16.msra.mxu0 0
    %3815 = vmatprep.subr.bf16.mxu0 0
    %3816 = vmatpush1.bf16.msra.mxu0 0
    %3817 = vmatprep.subr.bf16.mxu0 0
    %3818 = vmatpush1.bf16.msra.mxu0 0
    %3819 = vmatprep.subr.bf16.mxu0 0
    %3820 = vmatpush1.bf16.msra.mxu0 0
    %3821 = vmatprep.subr.bf16.mxu0 0
    %3822 = vmatpush1.bf16.msra.mxu0 0
    %3823 = vmatprep.subr.bf16.mxu0 0
    %3824 = vmatpush1.bf16.msra.mxu0 0
    %3825 = vmatprep.subr.bf16.mxu0 0
    %3826 = vmatpush1.bf16.msra.mxu0 0
    %3827 = vmatprep.mubr.bf16.mxu0 0
    %3828 = vmatmul.mubr.bf16.gmra.mrb[0].mxu0 %v3633
    %v3829 = vpop.f32.mrb[0].mxu0
    %v3830 = vadd.f32 %v3583, %v3829
    %v3831 = vpop.f32.mrb[0].mxu0
    %v3832 = vadd.f32 %v3585, %v3831
    %v3833 = vpop.f32.mrb[0].mxu0
    %v3834 = vpop.f32.mrb[0].mxu0
    %3835 = vdwg.mxu0
    %3836 = vmatprep.subr.bf16.mxu0 %v3734
    %3837 = vmatpush1.bf16.msra.mxu0 %v3733
    %3838 = vmatprep.subr.bf16.mxu0 %v3738
    %3839 = vmatpush1.bf16.msra.mxu0 %v3737
    %3840 = vmatprep.subr.bf16.mxu0 %v3742
    %3841 = vmatpush1.bf16.msra.mxu0 %v3741
    %3842 = vmatprep.subr.bf16.mxu0 %v3746
    %3843 = vmatpush1.bf16.msra.mxu0 %v3745
    %3844 = vmatprep.subr.bf16.mxu0 %v3750
    %3845 = vmatpush1.bf16.msra.mxu0 %v3749
    %3846 = vmatprep.subr.bf16.mxu0 %v3754
    %3847 = vmatpush1.bf16.msra.mxu0 %v3753
    %3848 = vmatprep.subr.bf16.mxu0 %v3758
    %3849 = vmatpush1.bf16.msra.mxu0 %v3757
    %3850 = vmatprep.subr.bf16.mxu0 %v3762
    %3851 = vmatpush1.bf16.msra.mxu0 %v3761
    %3852 = vmatprep.subr.bf16.mxu0 0
    %3853 = vmatpush1.bf16.msra.mxu0 0
    %3854 = vmatprep.subr.bf16.mxu0 0
    %3855 = vmatpush1.bf16.msra.mxu0 0
    %3856 = vmatprep.subr.bf16.mxu0 0
    %3857 = vmatpush1.bf16.msra.mxu0 0
    %3858 = vmatprep.subr.bf16.mxu0 0
    %3859 = vmatpush1.bf16.msra.mxu0 0
    %3860 = vmatprep.subr.bf16.mxu0 0
    %3861 = vmatpush1.bf16.msra.mxu0 0
    %3862 = vmatprep.subr.bf16.mxu0 0
    %3863 = vmatpush1.bf16.msra.mxu0 0
    %3864 = vmatprep.subr.bf16.mxu0 0
    %3865 = vmatpush1.bf16.msra.mxu0 0
    %3866 = vmatprep.subr.bf16.mxu0 0
    %3867 = vmatpush1.bf16.msra.mxu0 0
    %3868 = vmatprep.mubr.bf16.mxu0 0
    %3869 = vmatmul.mubr.bf16.gmra.mrb[0].mxu0 %v3633
    %v3870 = vpop.f32.mrb[0].mxu0
    %v3871 = vadd.f32 %v3624, %v3870
    %v3872 = vpop.f32.mrb[0].mxu0
    %v3873 = vadd.f32 %v3626, %v3872
    %v3874 = vpop.f32.mrb[0].mxu0
    %v3875 = vpop.f32.mrb[0].mxu0
    %3876 = vdwg.mxu0
    %v3877 = vld [vmem:[%s5] sm:$0xf]
    %v3879 = vlaneseq
    %v3880 = vshrl.u32 %v3879, 7
    %v3881 = vsub.s32 0, %v3880
    %v3882 = vrot.slane %v3877, %v3881
    %v3883 = vlaneseq
    %v3884 = vshrl.u32 %v3883, 7
    %v3885 = vsub.s32 1, %v3884
    %v3886 = vrot.slane %v3877, %v3885
    %v3887 = vlaneseq
    %v3888 = vshrl.u32 %v3887, 7
    %v3889 = vsub.s32 2, %v3888
    %v3890 = vrot.slane %v3877, %v3889
    %v3891 = vlaneseq
    %v3892 = vshrl.u32 %v3891, 7
    %v3893 = vsub.s32 3, %v3892
    %v3894 = vrot.slane %v3877, %v3893
    %v3899 = vadd.f32 %v3830, %v3882
    %v3900 = vadd.f32 %v3832, %v3886
    %v3901 = vadd.f32 %v3871, %v3890
    %v3902 = vadd.f32 %v3873, %v3894
    %v3903 = vxor.u32 %v3899, 2147483648
    %v3904 = vmul.f32 %v3903, 1.442695
    %v3905 = vpow.pop %v3904
    %v3906 = vadd.f32 %v3905, 1.0
    %v3907 = vrcp.pop %v3906
    %v3908 = vmul.f32 1.0, %v3907
    %v3909 = vxor.u32 %v3900, 2147483648
    %v3910 = vmul.f32 %v3909, 1.442695
    %v3911 = vpow.pop %v3910
    %v3912 = vadd.f32 %v3911, 1.0
    %v3913 = vrcp.pop %v3912
    %v3914 = vmul.f32 1.0, %v3913
    %v3915 = vxor.u32 %v3901, 2147483648
    %v3916 = vmul.f32 %v3915, 1.442695
    %v3917 = vpow.pop %v3916
    %v3918 = vadd.f32 %v3917, 1.0
    %v3919 = vrcp.pop %v3918
    %v3920 = vmul.f32 1.0, %v3919
    %v3921 = vtanh.pop %v3902
    %v3922 = vmul.f32 %v3908, %v3921
    %v3923 = vmul.f32 %v3920, %v3306
    %v3924 = vadd.f32 %v3922, %v3923
    %v3925 = vtanh.pop %v3924
    %v3926 = vmul.f32 %v3914, %v3925
    %3927 = vst [vmem:[#allocation9 + $0x5] sm:$0x1] %v3926
    %3928 = vst [vmem:[#allocation10 + $0x5] sm:$0x1] %v3924
    %s3929 = sld [smem:[#allocation3 + $0x6]]
    %p3930 = scmp.eq.s32.totalorder %s3929, 1
    %s3931 = sld [smem:[#allocation4 + $0x6]]
    %s3932 = sld [smem:[#allocation5 + $0x6]]
    %p3933 = scmp.ge.s32.totalorder %s3932, 0
    %p3934 = scmp.eq.s32.totalorder %s3932, 4294967294
    %p3935 = scmp.gt.s32.totalorder %s3932, 0
    %s3936 = scalar_select %p3935, %s3932, 0
    %p3937 = scmp.lt.s32.totalorder %s3936, 7
    %s3938 = scalar_select %p3937, %s3936, 7
    %s3939 = scalar_lea.vmem [#allocation9], %s3938
    %v3940 = vld [vmem:[%s3939] sm:$0x1]
    %s3941 = scalar_lea.vmem [#allocation10], %s3938
    %v3942 = vld [vmem:[%s3941] sm:$0x1]
    %v3943 = vld [vmem:[%s6] sm:$0x1]
    %s3944 = scalar_select %p3934, 1, 0
    %v3945 = vstv %s3944
    %vm3946 = vcmp.eq.s32.totalorder %v3945, 1
    %v3947 = vsel %vm3946, %v3943, 0.0
    %s3948 = scalar_select %p3933, 1, 0
    %v3949 = vstv %s3948
    %vm3950 = vcmp.eq.s32.totalorder %v3949, 1
    %v3951 = vsel %vm3950, %v3940, %v3947
    %v3952 = vld [vmem:[%s7] sm:$0x1]
    %v3953 = vsel %vm3946, %v3952, 0.0
    %v3954 = vsel %vm3950, %v3942, %v3953
    %p3955 = scmp.gt.s32.totalorder %s3931, 0
    %s3956 = scalar_select %p3955, %s3931, 0
    %p3957 = scmp.lt.s32.totalorder %s3956, 7
    %s3958 = scalar_select %p3957, %s3956, 7
    %s3959 = scalar_lea.vmem [#allocation9], %s3958
    %v3960 = vld [vmem:[%s3959] sm:$0x1]
    %v3961 = vld [vmem:[%s3] sm:$0x8]
    %v3962 = vpack.c.bf16 %v3951, %v3951
    %v3963 = vunpack.c.l.bf16 %v3961
    %s3964 = scalar_select %p3930, 1, 0
    %v3965 = vstv %s3964
    %vm3966 = vcmp.eq.s32.totalorder %v3965, 1
    %v3968 = vrot.slane %v3960, 2
    %v3970 = vsel %vm3966, %v3963, %v3968
    %v3971 = vpack.c.bf16 %v3970, %v3970
    %v3972 = vld [vmem:[#allocation6] sm:$0xff]
    %v3973 = vld [vmem:[#allocation6 + $0x8] sm:$0xff]
    %v3974 = vld [vmem:[#allocation6 + $0x10] sm:$0xff]
    %v3975 = vld [vmem:[#allocation6 + $0x18] sm:$0xff]
    %v3976 = vld [vmem:[#allocation6 + $0x20] sm:$0xff]
    %v3977 = vld [vmem:[#allocation6 + $0x28] sm:$0xff]
    %v3978 = vld [vmem:[#allocation6 + $0x30] sm:$0xff]
    %v3979 = vld [vmem:[#allocation6 + $0x38] sm:$0xff]
    %v3980 = vld [vmem:[#allocation6 + $0x40] sm:$0xff]
    %v3981 = vld [vmem:[#allocation6 + $0x48] sm:$0xff]
    %v3982 = vld [vmem:[#allocation6 + $0x50] sm:$0xff]
    %v3983 = vld [vmem:[#allocation6 + $0x58] sm:$0xff]
    %v3984 = vld [vmem:[#allocation6 + $0x60] sm:$0xff]
    %v3985 = vld [vmem:[#allocation6 + $0x68] sm:$0xff]
    %v3986 = vld [vmem:[#allocation6 + $0x70] sm:$0xff]
    %v3987 = vld [vmem:[#allocation6 + $0x78] sm:$0xff]
    %v3988 = vld [vmem:[#allocation6 + $0x80] sm:$0xff]
    %v3989 = vld [vmem:[#allocation6 + $0x88] sm:$0xff]
    %v3990 = vld [vmem:[#allocation6 + $0x90] sm:$0xff]
    %v3991 = vld [vmem:[#allocation6 + $0x98] sm:$0xff]
    %v3992 = vld [vmem:[#allocation6 + $0xa0] sm:$0xff]
    %v3993 = vld [vmem:[#allocation6 + $0xa8] sm:$0xff]
    %v3994 = vld [vmem:[#allocation6 + $0xb0] sm:$0xff]
    %v3995 = vld [vmem:[#allocation6 + $0xb8] sm:$0xff]
    %v3996 = vld [vmem:[#allocation6 + $0xc0] sm:$0xff]
    %v3997 = vld [vmem:[#allocation6 + $0xc8] sm:$0xff]
    %v3998 = vld [vmem:[#allocation6 + $0xd0] sm:$0xff]
    %v3999 = vld [vmem:[#allocation6 + $0xd8] sm:$0xff]
    %v4000 = vld [vmem:[#allocation6 + $0xe0] sm:$0xff]
    %v4001 = vld [vmem:[#allocation6 + $0xe8] sm:$0xff]
    %v4002 = vld [vmem:[#allocation6 + $0xf0] sm:$0xff]
    %v4003 = vld [vmem:[#allocation6 + $0xf8] sm:$0xff]
    %v4004 = vld [vmem:[#allocation6 + $0x100] sm:$0xff]
    %v4005 = vld [vmem:[#allocation6 + $0x108] sm:$0xff]
    %v4006 = vld [vmem:[#allocation6 + $0x110] sm:$0xff]
    %v4007 = vld [vmem:[#allocation6 + $0x118] sm:$0xff]
    %v4008 = vld [vmem:[#allocation6 + $0x120] sm:$0xff]
    %v4009 = vld [vmem:[#allocation6 + $0x128] sm:$0xff]
    %v4010 = vld [vmem:[#allocation6 + $0x130] sm:$0xff]
    %v4011 = vld [vmem:[#allocation6 + $0x138] sm:$0xff]
    %v4012 = vld [vmem:[#allocation6 + $0x140] sm:$0xff]
    %v4013 = vld [vmem:[#allocation6 + $0x148] sm:$0xff]
    %v4014 = vld [vmem:[#allocation6 + $0x150] sm:$0xff]
    %v4015 = vld [vmem:[#allocation6 + $0x158] sm:$0xff]
    %v4016 = vld [vmem:[#allocation6 + $0x160] sm:$0xff]
    %v4017 = vld [vmem:[#allocation6 + $0x168] sm:$0xff]
    %v4018 = vld [vmem:[#allocation6 + $0x170] sm:$0xff]
    %v4019 = vld [vmem:[#allocation6 + $0x178] sm:$0xff]
    %v4020 = vld [vmem:[#allocation6 + $0x180] sm:$0xff]
    %v4021 = vld [vmem:[#allocation6 + $0x188] sm:$0xff]
    %v4022 = vld [vmem:[#allocation6 + $0x190] sm:$0xff]
    %v4023 = vld [vmem:[#allocation6 + $0x198] sm:$0xff]
    %v4024 = vld [vmem:[#allocation6 + $0x1a0] sm:$0xff]
    %v4025 = vld [vmem:[#allocation6 + $0x1a8] sm:$0xff]
    %v4026 = vld [vmem:[#allocation6 + $0x1b0] sm:$0xff]
    %v4027 = vld [vmem:[#allocation6 + $0x1b8] sm:$0xff]
    %v4028 = vld [vmem:[#allocation6 + $0x1c0] sm:$0xff]
    %v4029 = vld [vmem:[#allocation6 + $0x1c8] sm:$0xff]
    %v4030 = vld [vmem:[#allocation6 + $0x1d0] sm:$0xff]
    %v4031 = vld [vmem:[#allocation6 + $0x1d8] sm:$0xff]
    %v4032 = vld [vmem:[#allocation6 + $0x1e0] sm:$0xff]
    %v4033 = vld [vmem:[#allocation6 + $0x1e8] sm:$0xff]
    %v4034 = vld [vmem:[#allocation6 + $0x1f0] sm:$0xff]
    %v4035 = vld [vmem:[#allocation6 + $0x1f8] sm:$0xff]
    %v4068 = vunpack.c.l.b16 %v4004
    %v4069 = vunpack.c.h.b16 %v4004
    %v4070 = vunpack.c.l.b16 %v4005
    %v4071 = vunpack.c.h.b16 %v4005
    %v4072 = vunpack.c.l.b16 %v4006
    %v4073 = vunpack.c.h.b16 %v4006
    %v4074 = vunpack.c.l.b16 %v4007
    %v4075 = vunpack.c.h.b16 %v4007
    %v4076 = vunpack.c.l.b16 %v4008
    %v4077 = vunpack.c.h.b16 %v4008
    %v4078 = vunpack.c.l.b16 %v4009
    %v4079 = vunpack.c.h.b16 %v4009
    %v4080 = vunpack.c.l.b16 %v4010
    %v4081 = vunpack.c.h.b16 %v4010
    %v4082 = vunpack.c.l.b16 %v4011
    %v4083 = vunpack.c.h.b16 %v4011
    %v4084 = vunpack.c.l.b16 %v4012
    %v4085 = vunpack.c.h.b16 %v4012
    %v4086 = vunpack.c.l.b16 %v4013
    %v4087 = vunpack.c.h.b16 %v4013
    %v4088 = vunpack.c.l.b16 %v4014
    %v4089 = vunpack.c.h.b16 %v4014
    %v4090 = vunpack.c.l.b16 %v4015
    %v4091 = vunpack.c.h.b16 %v4015
    %v4092 = vunpack.c.l.b16 %v4016
    %v4093 = vunpack.c.h.b16 %v4016
    %v4094 = vunpack.c.l.b16 %v4017
    %v4095 = vunpack.c.h.b16 %v4017
    %v4096 = vunpack.c.l.b16 %v4018
    %v4097 = vunpack.c.h.b16 %v4018
    %v4098 = vunpack.c.l.b16 %v4019
    %v4099 = vunpack.c.h.b16 %v4019
    %v4100 = vunpack.c.l.b16 %v4020
    %v4101 = vunpack.c.h.b16 %v4020
    %v4102 = vunpack.c.l.b16 %v4021
    %v4103 = vunpack.c.h.b16 %v4021
    %v4104 = vunpack.c.l.b16 %v4022
    %v4105 = vunpack.c.h.b16 %v4022
    %v4106 = vunpack.c.l.b16 %v4023
    %v4107 = vunpack.c.h.b16 %v4023
    %v4108 = vunpack.c.l.b16 %v4024
    %v4109 = vunpack.c.h.b16 %v4024
    %v4110 = vunpack.c.l.b16 %v4025
    %v4111 = vunpack.c.h.b16 %v4025
    %v4112 = vunpack.c.l.b16 %v4026
    %v4113 = vunpack.c.h.b16 %v4026
    %v4114 = vunpack.c.l.b16 %v4027
    %v4115 = vunpack.c.h.b16 %v4027
    %v4116 = vunpack.c.l.b16 %v4028
    %v4117 = vunpack.c.h.b16 %v4028
    %v4118 = vunpack.c.l.b16 %v4029
    %v4119 = vunpack.c.h.b16 %v4029
    %v4120 = vunpack.c.l.b16 %v4030
    %v4121 = vunpack.c.h.b16 %v4030
    %v4122 = vunpack.c.l.b16 %v4031
    %v4123 = vunpack.c.h.b16 %v4031
    %v4124 = vunpack.c.l.b16 %v4032
    %v4125 = vunpack.c.h.b16 %v4032
    %v4126 = vunpack.c.l.b16 %v4033
    %v4127 = vunpack.c.h.b16 %v4033
    %v4128 = vunpack.c.l.b16 %v4034
    %v4129 = vunpack.c.h.b16 %v4034
    %v4130 = vunpack.c.l.b16 %v4035
    %v4131 = vunpack.c.h.b16 %v4035
    %v4132 = vpack.c.b16 %v4072, %v4068
    %v4133 = vpack.c.b16 %v4073, %v4069
    %v4134 = vpack.c.b16 %v4074, %v4070
    %v4135 = vpack.c.b16 %v4075, %v4071
    %v4136 = vpack.c.b16 %v4080, %v4076
    %v4137 = vpack.c.b16 %v4081, %v4077
    %v4138 = vpack.c.b16 %v4082, %v4078
    %v4139 = vpack.c.b16 %v4083, %v4079
    %v4140 = vpack.c.b16 %v4088, %v4084
    %v4141 = vpack.c.b16 %v4089, %v4085
    %v4142 = vpack.c.b16 %v4090, %v4086
    %v4143 = vpack.c.b16 %v4091, %v4087
    %v4144 = vpack.c.b16 %v4096, %v4092
    %v4145 = vpack.c.b16 %v4097, %v4093
    %v4146 = vpack.c.b16 %v4098, %v4094
    %v4147 = vpack.c.b16 %v4099, %v4095
    %v4148 = vpack.c.b16 %v4104, %v4100
    %v4149 = vpack.c.b16 %v4105, %v4101
    %v4150 = vpack.c.b16 %v4106, %v4102
    %v4151 = vpack.c.b16 %v4107, %v4103
    %v4152 = vpack.c.b16 %v4112, %v4108
    %v4153 = vpack.c.b16 %v4113, %v4109
    %v4154 = vpack.c.b16 %v4114, %v4110
    %v4155 = vpack.c.b16 %v4115, %v4111
    %v4156 = vpack.c.b16 %v4120, %v4116
    %v4157 = vpack.c.b16 %v4121, %v4117
    %v4158 = vpack.c.b16 %v4122, %v4118
    %v4159 = vpack.c.b16 %v4123, %v4119
    %v4160 = vpack.c.b16 %v4128, %v4124
    %v4161 = vpack.c.b16 %v4129, %v4125
    %v4162 = vpack.c.b16 %v4130, %v4126
    %v4163 = vpack.c.b16 %v4131, %v4127
    %4196 = vmatprep.subr.bf16.mxu0 %v4133
    %4197 = vmatpush1.bf16.msra.mxu0 %v4132
    %4198 = vmatprep.subr.bf16.mxu0 %v4137
    %4199 = vmatpush1.bf16.msra.mxu0 %v4136
    %4200 = vmatprep.subr.bf16.mxu0 %v4141
    %4201 = vmatpush1.bf16.msra.mxu0 %v4140
    %4202 = vmatprep.subr.bf16.mxu0 %v4145
    %4203 = vmatpush1.bf16.msra.mxu0 %v4144
    %4204 = vmatprep.subr.bf16.mxu0 %v4149
    %4205 = vmatpush1.bf16.msra.mxu0 %v4148
    %4206 = vmatprep.subr.bf16.mxu0 %v4153
    %4207 = vmatpush1.bf16.msra.mxu0 %v4152
    %4208 = vmatprep.subr.bf16.mxu0 %v4157
    %4209 = vmatpush1.bf16.msra.mxu0 %v4156
    %4210 = vmatprep.subr.bf16.mxu0 %v4161
    %4211 = vmatpush1.bf16.msra.mxu0 %v4160
    %4212 = vmatprep.subr.bf16.mxu0 0
    %4213 = vmatpush1.bf16.msra.mxu0 0
    %4214 = vmatprep.subr.bf16.mxu0 0
    %4215 = vmatpush1.bf16.msra.mxu0 0
    %4216 = vmatprep.subr.bf16.mxu0 0
    %4217 = vmatpush1.bf16.msra.mxu0 0
    %4218 = vmatprep.subr.bf16.mxu0 0
    %4219 = vmatpush1.bf16.msra.mxu0 0
    %4220 = vmatprep.subr.bf16.mxu0 0
    %4221 = vmatpush1.bf16.msra.mxu0 0
    %4222 = vmatprep.subr.bf16.mxu0 0
    %4223 = vmatpush1.bf16.msra.mxu0 0
    %4224 = vmatprep.subr.bf16.mxu0 0
    %4225 = vmatpush1.bf16.msra.mxu0 0
    %4226 = vmatprep.subr.bf16.mxu0 0
    %4227 = vmatpush1.bf16.msra.mxu0 0
    %4228 = vmatprep.mubr.bf16.mxu0 0
    %4229 = vmatmul.mubr.bf16.gmra.mrb[0].mxu0 %v3962
    %v4230 = vpop.f32.mrb[0].mxu0
    %v4231 = vadd.f32 0.0, %v4230
    %v4232 = vpop.f32.mrb[0].mxu0
    %v4233 = vadd.f32 0.0, %v4232
    %v4234 = vpop.f32.mrb[0].mxu0
    %v4235 = vpop.f32.mrb[0].mxu0
    %4236 = vdwg.mxu0
    %4237 = vmatprep.subr.bf16.mxu0 %v4135
    %4238 = vmatpush1.bf16.msra.mxu0 %v4134
    %4239 = vmatprep.subr.bf16.mxu0 %v4139
    %4240 = vmatpush1.bf16.msra.mxu0 %v4138
    %4241 = vmatprep.subr.bf16.mxu0 %v4143
    %4242 = vmatpush1.bf16.msra.mxu0 %v4142
    %4243 = vmatprep.subr.bf16.mxu0 %v4147
    %4244 = vmatpush1.bf16.msra.mxu0 %v4146
    %4245 = vmatprep.subr.bf16.mxu0 %v4151
    %4246 = vmatpush1.bf16.msra.mxu0 %v4150
    %4247 = vmatprep.subr.bf16.mxu0 %v4155
    %4248 = vmatpush1.bf16.msra.mxu0 %v4154
    %4249 = vmatprep.subr.bf16.mxu0 %v4159
    %4250 = vmatpush1.bf16.msra.mxu0 %v4158
    %4251 = vmatprep.subr.bf16.mxu0 %v4163
    %4252 = vmatpush1.bf16.msra.mxu0 %v4162
    %4253 = vmatprep.subr.bf16.mxu0 0
    %4254 = vmatpush1.bf16.msra.mxu0 0
    %4255 = vmatprep.subr.bf16.mxu0 0
    %4256 = vmatpush1.bf16.msra.mxu0 0
    %4257 = vmatprep.subr.bf16.mxu0 0
    %4258 = vmatpush1.bf16.msra.mxu0 0
    %4259 = vmatprep.subr.bf16.mxu0 0
    %4260 = vmatpush1.bf16.msra.mxu0 0
    %4261 = vmatprep.subr.bf16.mxu0 0
    %4262 = vmatpush1.bf16.msra.mxu0 0
    %4263 = vmatprep.subr.bf16.mxu0 0
    %4264 = vmatpush1.bf16.msra.mxu0 0
    %4265 = vmatprep.subr.bf16.mxu0 0
    %4266 = vmatpush1.bf16.msra.mxu0 0
    %4267 = vmatprep.subr.bf16.mxu0 0
    %4268 = vmatpush1.bf16.msra.mxu0 0
    %4269 = vmatprep.mubr.bf16.mxu0 0
    %4270 = vmatmul.mubr.bf16.gmra.mrb[0].mxu0 %v3962
    %v4271 = vpop.f32.mrb[0].mxu0
    %v4272 = vadd.f32 0.0, %v4271
    %v4273 = vpop.f32.mrb[0].mxu0
    %v4274 = vadd.f32 0.0, %v4273
    %v4275 = vpop.f32.mrb[0].mxu0
    %v4276 = vpop.f32.mrb[0].mxu0
    %4277 = vdwg.mxu0
    %v4279 = vrot.slane %v3971, 3
    %v4313 = vunpack.c.l.b16 %v3972
    %v4314 = vunpack.c.h.b16 %v3972
    %v4315 = vunpack.c.l.b16 %v3973
    %v4316 = vunpack.c.h.b16 %v3973
    %v4317 = vunpack.c.l.b16 %v3974
    %v4318 = vunpack.c.h.b16 %v3974
    %v4319 = vunpack.c.l.b16 %v3975
    %v4320 = vunpack.c.h.b16 %v3975
    %v4321 = vunpack.c.l.b16 %v3976
    %v4322 = vunpack.c.h.b16 %v3976
    %v4323 = vunpack.c.l.b16 %v3977
    %v4324 = vunpack.c.h.b16 %v3977
    %v4325 = vunpack.c.l.b16 %v3978
    %v4326 = vunpack.c.h.b16 %v3978
    %v4327 = vunpack.c.l.b16 %v3979
    %v4328 = vunpack.c.h.b16 %v3979
    %v4329 = vunpack.c.l.b16 %v3980
    %v4330 = vunpack.c.h.b16 %v3980
    %v4331 = vunpack.c.l.b16 %v3981
    %v4332 = vunpack.c.h.b16 %v3981
    %v4333 = vunpack.c.l.b16 %v3982
    %v4334 = vunpack.c.h.b16 %v3982
    %v4335 = vunpack.c.l.b16 %v3983
    %v4336 = vunpack.c.h.b16 %v3983
    %v4337 = vunpack.c.l.b16 %v3984
    %v4338 = vunpack.c.h.b16 %v3984
    %v4339 = vunpack.c.l.b16 %v3985
    %v4340 = vunpack.c.h.b16 %v3985
    %v4341 = vunpack.c.l.b16 %v3986
    %v4342 = vunpack.c.h.b16 %v3986
    %v4343 = vunpack.c.l.b16 %v3987
    %v4344 = vunpack.c.h.b16 %v3987
    %v4345 = vunpack.c.l.b16 %v3988
    %v4346 = vunpack.c.h.b16 %v3988
    %v4347 = vunpack.c.l.b16 %v3989
    %v4348 = vunpack.c.h.b16 %v3989
    %v4349 = vunpack.c.l.b16 %v3990
    %v4350 = vunpack.c.h.b16 %v3990
    %v4351 = vunpack.c.l.b16 %v3991
    %v4352 = vunpack.c.h.b16 %v3991
    %v4353 = vunpack.c.l.b16 %v3992
    %v4354 = vunpack.c.h.b16 %v3992
    %v4355 = vunpack.c.l.b16 %v3993
    %v4356 = vunpack.c.h.b16 %v3993
    %v4357 = vunpack.c.l.b16 %v3994
    %v4358 = vunpack.c.h.b16 %v3994
    %v4359 = vunpack.c.l.b16 %v3995
    %v4360 = vunpack.c.h.b16 %v3995
    %v4361 = vunpack.c.l.b16 %v3996
    %v4362 = vunpack.c.h.b16 %v3996
    %v4363 = vunpack.c.l.b16 %v3997
    %v4364 = vunpack.c.h.b16 %v3997
    %v4365 = vunpack.c.l.b16 %v3998
    %v4366 = vunpack.c.h.b16 %v3998
    %v4367 = vunpack.c.l.b16 %v3999
    %v4368 = vunpack.c.h.b16 %v3999
    %v4369 = vunpack.c.l.b16 %v4000
    %v4370 = vunpack.c.h.b16 %v4000
    %v4371 = vunpack.c.l.b16 %v4001
    %v4372 = vunpack.c.h.b16 %v4001
    %v4373 = vunpack.c.l.b16 %v4002
    %v4374 = vunpack.c.h.b16 %v4002
    %v4375 = vunpack.c.l.b16 %v4003
    %v4376 = vunpack.c.h.b16 %v4003
    %v4377 = vpack.c.b16 %v4317, %v4313
    %v4378 = vpack.c.b16 %v4318, %v4314
    %v4379 = vpack.c.b16 %v4319, %v4315
    %v4380 = vpack.c.b16 %v4320, %v4316
    %v4381 = vpack.c.b16 %v4325, %v4321
    %v4382 = vpack.c.b16 %v4326, %v4322
    %v4383 = vpack.c.b16 %v4327, %v4323
    %v4384 = vpack.c.b16 %v4328, %v4324
    %v4385 = vpack.c.b16 %v4333, %v4329
    %v4386 = vpack.c.b16 %v4334, %v4330
    %v4387 = vpack.c.b16 %v4335, %v4331
    %v4388 = vpack.c.b16 %v4336, %v4332
    %v4389 = vpack.c.b16 %v4341, %v4337
    %v4390 = vpack.c.b16 %v4342, %v4338
    %v4391 = vpack.c.b16 %v4343, %v4339
    %v4392 = vpack.c.b16 %v4344, %v4340
    %v4393 = vpack.c.b16 %v4349, %v4345
    %v4394 = vpack.c.b16 %v4350, %v4346
    %v4395 = vpack.c.b16 %v4351, %v4347
    %v4396 = vpack.c.b16 %v4352, %v4348
    %v4397 = vpack.c.b16 %v4357, %v4353
    %v4398 = vpack.c.b16 %v4358, %v4354
    %v4399 = vpack.c.b16 %v4359, %v4355
    %v4400 = vpack.c.b16 %v4360, %v4356
    %v4401 = vpack.c.b16 %v4365, %v4361
    %v4402 = vpack.c.b16 %v4366, %v4362
    %v4403 = vpack.c.b16 %v4367, %v4363
    %v4404 = vpack.c.b16 %v4368, %v4364
    %v4405 = vpack.c.b16 %v4373, %v4369
    %v4406 = vpack.c.b16 %v4374, %v4370
    %v4407 = vpack.c.b16 %v4375, %v4371
    %v4408 = vpack.c.b16 %v4376, %v4372
    %4441 = vmatprep.subr.bf16.mxu0 %v4378
    %4442 = vmatpush1.bf16.msra.mxu0 %v4377
    %4443 = vmatprep.subr.bf16.mxu0 %v4382
    %4444 = vmatpush1.bf16.msra.mxu0 %v4381
    %4445 = vmatprep.subr.bf16.mxu0 %v4386
    %4446 = vmatpush1.bf16.msra.mxu0 %v4385
    %4447 = vmatprep.subr.bf16.mxu0 %v4390
    %4448 = vmatpush1.bf16.msra.mxu0 %v4389
    %4449 = vmatprep.subr.bf16.mxu0 %v4394
    %4450 = vmatpush1.bf16.msra.mxu0 %v4393
    %4451 = vmatprep.subr.bf16.mxu0 %v4398
    %4452 = vmatpush1.bf16.msra.mxu0 %v4397
    %4453 = vmatprep.subr.bf16.mxu0 %v4402
    %4454 = vmatpush1.bf16.msra.mxu0 %v4401
    %4455 = vmatprep.subr.bf16.mxu0 %v4406
    %4456 = vmatpush1.bf16.msra.mxu0 %v4405
    %4457 = vmatprep.subr.bf16.mxu0 0
    %4458 = vmatpush1.bf16.msra.mxu0 0
    %4459 = vmatprep.subr.bf16.mxu0 0
    %4460 = vmatpush1.bf16.msra.mxu0 0
    %4461 = vmatprep.subr.bf16.mxu0 0
    %4462 = vmatpush1.bf16.msra.mxu0 0
    %4463 = vmatprep.subr.bf16.mxu0 0
    %4464 = vmatpush1.bf16.msra.mxu0 0
    %4465 = vmatprep.subr.bf16.mxu0 0
    %4466 = vmatpush1.bf16.msra.mxu0 0
    %4467 = vmatprep.subr.bf16.mxu0 0
    %4468 = vmatpush1.bf16.msra.mxu0 0
    %4469 = vmatprep.subr.bf16.mxu0 0
    %4470 = vmatpush1.bf16.msra.mxu0 0
    %4471 = vmatprep.subr.bf16.mxu0 0
    %4472 = vmatpush1.bf16.msra.mxu0 0
    %4473 = vmatprep.mubr.bf16.mxu0 0
    %4474 = vmatmul.mubr.bf16.gmra.mrb[0].mxu0 %v4279
    %v4475 = vpop.f32.mrb[0].mxu0
    %v4476 = vadd.f32 %v4231, %v4475
    %v4477 = vpop.f32.mrb[0].mxu0
    %v4478 = vadd.f32 %v4233, %v4477
    %v4479 = vpop.f32.mrb[0].mxu0
    %v4480 = vpop.f32.mrb[0].mxu0
    %4481 = vdwg.mxu0
    %4482 = vmatprep.subr.bf16.mxu0 %v4380
    %4483 = vmatpush1.bf16.msra.mxu0 %v4379
    %4484 = vmatprep.subr.bf16.mxu0 %v4384
    %4485 = vmatpush1.bf16.msra.mxu0 %v4383
    %4486 = vmatprep.subr.bf16.mxu0 %v4388
    %4487 = vmatpush1.bf16.msra.mxu0 %v4387
    %4488 = vmatprep.subr.bf16.mxu0 %v4392
    %4489 = vmatpush1.bf16.msra.mxu0 %v4391
    %4490 = vmatprep.subr.bf16.mxu0 %v4396
    %4491 = vmatpush1.bf16.msra.mxu0 %v4395
    %4492 = vmatprep.subr.bf16.mxu0 %v4400
    %4493 = vmatpush1.bf16.msra.mxu0 %v4399
    %4494 = vmatprep.subr.bf16.mxu0 %v4404
    %4495 = vmatpush1.bf16.msra.mxu0 %v4403
    %4496 = vmatprep.subr.bf16.mxu0 %v4408
    %4497 = vmatpush1.bf16.msra.mxu0 %v4407
    %4498 = vmatprep.subr.bf16.mxu0 0
    %4499 = vmatpush1.bf16.msra.mxu0 0
    %4500 = vmatprep.subr.bf16.mxu0 0
    %4501 = vmatpush1.bf16.msra.mxu0 0
    %4502 = vmatprep.subr.bf16.mxu0 0
    %4503 = vmatpush1.bf16.msra.mxu0 0
    %4504 = vmatprep.subr.bf16.mxu0 0
    %4505 = vmatpush1.bf16.msra.mxu0 0
    %4506 = vmatprep.subr.bf16.mxu0 0
    %4507 = vmatpush1.bf16.msra.mxu0 0
    %4508 = vmatprep.subr.bf16.mxu0 0
    %4509 = vmatpush1.bf16.msra.mxu0 0
    %4510 = vmatprep.subr.bf16.mxu0 0
    %4511 = vmatpush1.bf16.msra.mxu0 0
    %4512 = vmatprep.subr.bf16.mxu0 0
    %4513 = vmatpush1.bf16.msra.mxu0 0
    %4514 = vmatprep.mubr.bf16.mxu0 0
    %4515 = vmatmul.mubr.bf16.gmra.mrb[0].mxu0 %v4279
    %v4516 = vpop.f32.mrb[0].mxu0
    %v4517 = vadd.f32 %v4272, %v4516
    %v4518 = vpop.f32.mrb[0].mxu0
    %v4519 = vadd.f32 %v4274, %v4518
    %v4520 = vpop.f32.mrb[0].mxu0
    %v4521 = vpop.f32.mrb[0].mxu0
    %4522 = vdwg.mxu0
    %v4523 = vld [vmem:[%s5] sm:$0xf]
    %v4525 = vlaneseq
    %v4526 = vshrl.u32 %v4525, 7
    %v4527 = vsub.s32 0, %v4526
    %v4528 = vrot.slane %v4523, %v4527
    %v4529 = vlaneseq
    %v4530 = vshrl.u32 %v4529, 7
    %v4531 = vsub.s32 1, %v4530
    %v4532 = vrot.slane %v4523, %v4531
    %v4533 = vlaneseq
    %v4534 = vshrl.u32 %v4533, 7
    %v4535 = vsub.s32 2, %v4534
    %v4536 = vrot.slane %v4523, %v4535
    %v4537 = vlaneseq
    %v4538 = vshrl.u32 %v4537, 7
    %v4539 = vsub.s32 3, %v4538
    %v4540 = vrot.slane %v4523, %v4539
    %v4545 = vadd.f32 %v4476, %v4528
    %v4546 = vadd.f32 %v4478, %v4532
    %v4547 = vadd.f32 %v4517, %v4536
    %v4548 = vadd.f32 %v4519, %v4540
    %v4549 = vxor.u32 %v4545, 2147483648
    %v4550 = vmul.f32 %v4549, 1.442695
    %v4551 = vpow.pop %v4550
    %v4552 = vadd.f32 %v4551, 1.0
    %v4553 = vrcp.pop %v4552
    %v4554 = vmul.f32 1.0, %v4553
    %v4555 = vxor.u32 %v4546, 2147483648
    %v4556 = vmul.f32 %v4555, 1.442695
    %v4557 = vpow.pop %v4556
    %v4558 = vadd.f32 %v4557, 1.0
    %v4559 = vrcp.pop %v4558
    %v4560 = vmul.f32 1.0, %v4559
    %v4561 = vxor.u32 %v4547, 2147483648
    %v4562 = vmul.f32 %v4561, 1.442695
    %v4563 = vpow.pop %v4562
    %v4564 = vadd.f32 %v4563, 1.0
    %v4565 = vrcp.pop %v4564
    %v4566 = vmul.f32 1.0, %v4565
    %v4567 = vtanh.pop %v4548
    %v4568 = vmul.f32 %v4554, %v4567
    %v4569 = vmul.f32 %v4566, %v3954
    %v4570 = vadd.f32 %v4568, %v4569
    %v4571 = vtanh.pop %v4570
    %v4572 = vmul.f32 %v4560, %v4571
    %4573 = vst [vmem:[#allocation9 + $0x6] sm:$0x1] %v4572
    %4574 = vst [vmem:[#allocation10 + $0x6] sm:$0x1] %v4570
    %s4575 = sld [smem:[#allocation3 + $0x7]]
    %p4576 = scmp.eq.s32.totalorder %s4575, 1
    %s4577 = sld [smem:[#allocation4 + $0x7]]
    %s4578 = sld [smem:[#allocation5 + $0x7]]
    %p4579 = scmp.ge.s32.totalorder %s4578, 0
    %p4580 = scmp.eq.s32.totalorder %s4578, 4294967294
    %p4581 = scmp.gt.s32.totalorder %s4578, 0
    %s4582 = scalar_select %p4581, %s4578, 0
    %p4583 = scmp.lt.s32.totalorder %s4582, 7
    %s4584 = scalar_select %p4583, %s4582, 7
    %s4585 = scalar_lea.vmem [#allocation9], %s4584
    %v4586 = vld [vmem:[%s4585] sm:$0x1]
    %s4587 = scalar_lea.vmem [#allocation10], %s4584
    %v4588 = vld [vmem:[%s4587] sm:$0x1]
    %v4589 = vld [vmem:[%s6] sm:$0x1]
    %s4590 = scalar_select %p4580, 1, 0
    %v4591 = vstv %s4590
    %vm4592 = vcmp.eq.s32.totalorder %v4591, 1
    %v4593 = vsel %vm4592, %v4589, 0.0
    %s4594 = scalar_select %p4579, 1, 0
    %v4595 = vstv %s4594
    %vm4596 = vcmp.eq.s32.totalorder %v4595, 1
    %v4597 = vsel %vm4596, %v4586, %v4593
    %v4598 = vld [vmem:[%s7] sm:$0x1]
    %v4599 = vsel %vm4592, %v4598, 0.0
    %v4600 = vsel %vm4596, %v4588, %v4599
    %p4601 = scmp.gt.s32.totalorder %s4577, 0
    %s4602 = scalar_select %p4601, %s4577, 0
    %p4603 = scmp.lt.s32.totalorder %s4602, 7
    %s4604 = scalar_select %p4603, %s4602, 7
    %s4605 = scalar_lea.vmem [#allocation9], %s4604
    %v4606 = vld [vmem:[%s4605] sm:$0x1]
    %v4607 = vld [vmem:[%s3] sm:$0x8]
    %v4608 = vpack.c.bf16 %v4597, %v4597
    %v4609 = vunpack.c.l.bf16 %v4607
    %s4610 = scalar_select %p4576, 1, 0
    %v4611 = vstv %s4610
    %vm4612 = vcmp.eq.s32.totalorder %v4611, 1
    %v4614 = vrot.slane %v4606, 1
    %v4616 = vsel %vm4612, %v4609, %v4614
    %v4617 = vpack.c.bf16 %v4616, %v4616
    %v4618 = vld [vmem:[#allocation6] sm:$0xff]
    %v4619 = vld [vmem:[#allocation6 + $0x8] sm:$0xff]
    %v4620 = vld [vmem:[#allocation6 + $0x10] sm:$0xff]
    %v4621 = vld [vmem:[#allocation6 + $0x18] sm:$0xff]
    %v4622 = vld [vmem:[#allocation6 + $0x20] sm:$0xff]
    %v4623 = vld [vmem:[#allocation6 + $0x28] sm:$0xff]
    %v4624 = vld [vmem:[#allocation6 + $0x30] sm:$0xff]
    %v4625 = vld [vmem:[#allocation6 + $0x38] sm:$0xff]
    %v4626 = vld [vmem:[#allocation6 + $0x40] sm:$0xff]
    %v4627 = vld [vmem:[#allocation6 + $0x48] sm:$0xff]
    %v4628 = vld [vmem:[#allocation6 + $0x50] sm:$0xff]
    %v4629 = vld [vmem:[#allocation6 + $0x58] sm:$0xff]
    %v4630 = vld [vmem:[#allocation6 + $0x60] sm:$0xff]
    %v4631 = vld [vmem:[#allocation6 + $0x68] sm:$0xff]
    %v4632 = vld [vmem:[#allocation6 + $0x70] sm:$0xff]
    %v4633 = vld [vmem:[#allocation6 + $0x78] sm:$0xff]
    %v4634 = vld [vmem:[#allocation6 + $0x80] sm:$0xff]
    %v4635 = vld [vmem:[#allocation6 + $0x88] sm:$0xff]
    %v4636 = vld [vmem:[#allocation6 + $0x90] sm:$0xff]
    %v4637 = vld [vmem:[#allocation6 + $0x98] sm:$0xff]
    %v4638 = vld [vmem:[#allocation6 + $0xa0] sm:$0xff]
    %v4639 = vld [vmem:[#allocation6 + $0xa8] sm:$0xff]
    %v4640 = vld [vmem:[#allocation6 + $0xb0] sm:$0xff]
    %v4641 = vld [vmem:[#allocation6 + $0xb8] sm:$0xff]
    %v4642 = vld [vmem:[#allocation6 + $0xc0] sm:$0xff]
    %v4643 = vld [vmem:[#allocation6 + $0xc8] sm:$0xff]
    %v4644 = vld [vmem:[#allocation6 + $0xd0] sm:$0xff]
    %v4645 = vld [vmem:[#allocation6 + $0xd8] sm:$0xff]
    %v4646 = vld [vmem:[#allocation6 + $0xe0] sm:$0xff]
    %v4647 = vld [vmem:[#allocation6 + $0xe8] sm:$0xff]
    %v4648 = vld [vmem:[#allocation6 + $0xf0] sm:$0xff]
    %v4649 = vld [vmem:[#allocation6 + $0xf8] sm:$0xff]
    %v4650 = vld [vmem:[#allocation6 + $0x100] sm:$0xff]
    %v4651 = vld [vmem:[#allocation6 + $0x108] sm:$0xff]
    %v4652 = vld [vmem:[#allocation6 + $0x110] sm:$0xff]
    %v4653 = vld [vmem:[#allocation6 + $0x118] sm:$0xff]
    %v4654 = vld [vmem:[#allocation6 + $0x120] sm:$0xff]
    %v4655 = vld [vmem:[#allocation6 + $0x128] sm:$0xff]
    %v4656 = vld [vmem:[#allocation6 + $0x130] sm:$0xff]
    %v4657 = vld [vmem:[#allocation6 + $0x138] sm:$0xff]
    %v4658 = vld [vmem:[#allocation6 + $0x140] sm:$0xff]
    %v4659 = vld [vmem:[#allocation6 + $0x148] sm:$0xff]
    %v4660 = vld [vmem:[#allocation6 + $0x150] sm:$0xff]
    %v4661 = vld [vmem:[#allocation6 + $0x158] sm:$0xff]
    %v4662 = vld [vmem:[#allocation6 + $0x160] sm:$0xff]
    %v4663 = vld [vmem:[#allocation6 + $0x168] sm:$0xff]
    %v4664 = vld [vmem:[#allocation6 + $0x170] sm:$0xff]
    %v4665 = vld [vmem:[#allocation6 + $0x178] sm:$0xff]
    %v4666 = vld [vmem:[#allocation6 + $0x180] sm:$0xff]
    %v4667 = vld [vmem:[#allocation6 + $0x188] sm:$0xff]
    %v4668 = vld [vmem:[#allocation6 + $0x190] sm:$0xff]
    %v4669 = vld [vmem:[#allocation6 + $0x198] sm:$0xff]
    %v4670 = vld [vmem:[#allocation6 + $0x1a0] sm:$0xff]
    %v4671 = vld [vmem:[#allocation6 + $0x1a8] sm:$0xff]
    %v4672 = vld [vmem:[#allocation6 + $0x1b0] sm:$0xff]
    %v4673 = vld [vmem:[#allocation6 + $0x1b8] sm:$0xff]
    %v4674 = vld [vmem:[#allocation6 + $0x1c0] sm:$0xff]
    %v4675 = vld [vmem:[#allocation6 + $0x1c8] sm:$0xff]
    %v4676 = vld [vmem:[#allocation6 + $0x1d0] sm:$0xff]
    %v4677 = vld [vmem:[#allocation6 + $0x1d8] sm:$0xff]
    %v4678 = vld [vmem:[#allocation6 + $0x1e0] sm:$0xff]
    %v4679 = vld [vmem:[#allocation6 + $0x1e8] sm:$0xff]
    %v4680 = vld [vmem:[#allocation6 + $0x1f0] sm:$0xff]
    %v4681 = vld [vmem:[#allocation6 + $0x1f8] sm:$0xff]
    %v4714 = vunpack.c.l.b16 %v4650
    %v4715 = vunpack.c.h.b16 %v4650
    %v4716 = vunpack.c.l.b16 %v4651
    %v4717 = vunpack.c.h.b16 %v4651
    %v4718 = vunpack.c.l.b16 %v4652
    %v4719 = vunpack.c.h.b16 %v4652
    %v4720 = vunpack.c.l.b16 %v4653
    %v4721 = vunpack.c.h.b16 %v4653
    %v4722 = vunpack.c.l.b16 %v4654
    %v4723 = vunpack.c.h.b16 %v4654
    %v4724 = vunpack.c.l.b16 %v4655
    %v4725 = vunpack.c.h.b16 %v4655
    %v4726 = vunpack.c.l.b16 %v4656
    %v4727 = vunpack.c.h.b16 %v4656
    %v4728 = vunpack.c.l.b16 %v4657
    %v4729 = vunpack.c.h.b16 %v4657
    %v4730 = vunpack.c.l.b16 %v4658
    %v4731 = vunpack.c.h.b16 %v4658
    %v4732 = vunpack.c.l.b16 %v4659
    %v4733 = vunpack.c.h.b16 %v4659
    %v4734 = vunpack.c.l.b16 %v4660
    %v4735 = vunpack.c.h.b16 %v4660
    %v4736 = vunpack.c.l.b16 %v4661
    %v4737 = vunpack.c.h.b16 %v4661
    %v4738 = vunpack.c.l.b16 %v4662
    %v4739 = vunpack.c.h.b16 %v4662
    %v4740 = vunpack.c.l.b16 %v4663
    %v4741 = vunpack.c.h.b16 %v4663
    %v4742 = vunpack.c.l.b16 %v4664
    %v4743 = vunpack.c.h.b16 %v4664
    %v4744 = vunpack.c.l.b16 %v4665
    %v4745 = vunpack.c.h.b16 %v4665
    %v4746 = vunpack.c.l.b16 %v4666
    %v4747 = vunpack.c.h.b16 %v4666
    %v4748 = vunpack.c.l.b16 %v4667
    %v4749 = vunpack.c.h.b16 %v4667
    %v4750 = vunpack.c.l.b16 %v4668
    %v4751 = vunpack.c.h.b16 %v4668
    %v4752 = vunpack.c.l.b16 %v4669
    %v4753 = vunpack.c.h.b16 %v4669
    %v4754 = vunpack.c.l.b16 %v4670
    %v4755 = vunpack.c.h.b16 %v4670
    %v4756 = vunpack.c.l.b16 %v4671
    %v4757 = vunpack.c.h.b16 %v4671
    %v4758 = vunpack.c.l.b16 %v4672
    %v4759 = vunpack.c.h.b16 %v4672
    %v4760 = vunpack.c.l.b16 %v4673
    %v4761 = vunpack.c.h.b16 %v4673
    %v4762 = vunpack.c.l.b16 %v4674
    %v4763 = vunpack.c.h.b16 %v4674
    %v4764 = vunpack.c.l.b16 %v4675
    %v4765 = vunpack.c.h.b16 %v4675
    %v4766 = vunpack.c.l.b16 %v4676
    %v4767 = vunpack.c.h.b16 %v4676
    %v4768 = vunpack.c.l.b16 %v4677
    %v4769 = vunpack.c.h.b16 %v4677
    %v4770 = vunpack.c.l.b16 %v4678
    %v4771 = vunpack.c.h.b16 %v4678
    %v4772 = vunpack.c.l.b16 %v4679
    %v4773 = vunpack.c.h.b16 %v4679
    %v4774 = vunpack.c.l.b16 %v4680
    %v4775 = vunpack.c.h.b16 %v4680
    %v4776 = vunpack.c.l.b16 %v4681
    %v4777 = vunpack.c.h.b16 %v4681
    %v4778 = vpack.c.b16 %v4718, %v4714
    %v4779 = vpack.c.b16 %v4719, %v4715
    %v4780 = vpack.c.b16 %v4720, %v4716
    %v4781 = vpack.c.b16 %v4721, %v4717
    %v4782 = vpack.c.b16 %v4726, %v4722
    %v4783 = vpack.c.b16 %v4727, %v4723
    %v4784 = vpack.c.b16 %v4728, %v4724
    %v4785 = vpack.c.b16 %v4729, %v4725
    %v4786 = vpack.c.b16 %v4734, %v4730
    %v4787 = vpack.c.b16 %v4735, %v4731
    %v4788 = vpack.c.b16 %v4736, %v4732
    %v4789 = vpack.c.b16 %v4737, %v4733
    %v4790 = vpack.c.b16 %v4742, %v4738
    %v4791 = vpack.c.b16 %v4743, %v4739
    %v4792 = vpack.c.b16 %v4744, %v4740
    %v4793 = vpack.c.b16 %v4745, %v4741
    %v4794 = vpack.c.b16 %v4750, %v4746
    %v4795 = vpack.c.b16 %v4751, %v4747
    %v4796 = vpack.c.b16 %v4752, %v4748
    %v4797 = vpack.c.b16 %v4753, %v4749
    %v4798 = vpack.c.b16 %v4758, %v4754
    %v4799 = vpack.c.b16 %v4759, %v4755
    %v4800 = vpack.c.b16 %v4760, %v4756
    %v4801 = vpack.c.b16 %v4761, %v4757
    %v4802 = vpack.c.b16 %v4766, %v4762
    %v4803 = vpack.c.b16 %v4767, %v4763
    %v4804 = vpack.c.b16 %v4768, %v4764
    %v4805 = vpack.c.b16 %v4769, %v4765
    %v4806 = vpack.c.b16 %v4774, %v4770
    %v4807 = vpack.c.b16 %v4775, %v4771
    %v4808 = vpack.c.b16 %v4776, %v4772
    %v4809 = vpack.c.b16 %v4777, %v4773
    %4842 = vmatprep.subr.bf16.mxu0 %v4779
    %4843 = vmatpush1.bf16.msra.mxu0 %v4778
    %4844 = vmatprep.subr.bf16.mxu0 %v4783
    %4845 = vmatpush1.bf16.msra.mxu0 %v4782
    %4846 = vmatprep.subr.bf16.mxu0 %v4787
    %4847 = vmatpush1.bf16.msra.mxu0 %v4786
    %4848 = vmatprep.subr.bf16.mxu0 %v4791
    %4849 = vmatpush1.bf16.msra.mxu0 %v4790
    %4850 = vmatprep.subr.bf16.mxu0 %v4795
    %4851 = vmatpush1.bf16.msra.mxu0 %v4794
    %4852 = vmatprep.subr.bf16.mxu0 %v4799
    %4853 = vmatpush1.bf16.msra.mxu0 %v4798
    %4854 = vmatprep.subr.bf16.mxu0 %v4803
    %4855 = vmatpush1.bf16.msra.mxu0 %v4802
    %4856 = vmatprep.subr.bf16.mxu0 %v4807
    %4857 = vmatpush1.bf16.msra.mxu0 %v4806
    %4858 = vmatprep.subr.bf16.mxu0 0
    %4859 = vmatpush1.bf16.msra.mxu0 0
    %4860 = vmatprep.subr.bf16.mxu0 0
    %4861 = vmatpush1.bf16.msra.mxu0 0
    %4862 = vmatprep.subr.bf16.mxu0 0
    %4863 = vmatpush1.bf16.msra.mxu0 0
    %4864 = vmatprep.subr.bf16.mxu0 0
    %4865 = vmatpush1.bf16.msra.mxu0 0
    %4866 = vmatprep.subr.bf16.mxu0 0
    %4867 = vmatpush1.bf16.msra.mxu0 0
    %4868 = vmatprep.subr.bf16.mxu0 0
    %4869 = vmatpush1.bf16.msra.mxu0 0
    %4870 = vmatprep.subr.bf16.mxu0 0
    %4871 = vmatpush1.bf16.msra.mxu0 0
    %4872 = vmatprep.subr.bf16.mxu0 0
    %4873 = vmatpush1.bf16.msra.mxu0 0
    %4874 = vmatprep.mubr.bf16.mxu0 0
    %4875 = vmatmul.mubr.bf16.gmra.mrb[0].mxu0 %v4608
    %v4876 = vpop.f32.mrb[0].mxu0
    %v4877 = vadd.f32 0.0, %v4876
    %v4878 = vpop.f32.mrb[0].mxu0
    %v4879 = vadd.f32 0.0, %v4878
    %v4880 = vpop.f32.mrb[0].mxu0
    %v4881 = vpop.f32.mrb[0].mxu0
    %4882 = vdwg.mxu0
    %4883 = vmatprep.subr.bf16.mxu0 %v4781
    %4884 = vmatpush1.bf16.msra.mxu0 %v4780
    %4885 = vmatprep.subr.bf16.mxu0 %v4785
    %4886 = vmatpush1.bf16.msra.mxu0 %v4784
    %4887 = vmatprep.subr.bf16.mxu0 %v4789
    %4888 = vmatpush1.bf16.msra.mxu0 %v4788
    %4889 = vmatprep.subr.bf16.mxu0 %v4793
    %4890 = vmatpush1.bf16.msra.mxu0 %v4792
    %4891 = vmatprep.subr.bf16.mxu0 %v4797
    %4892 = vmatpush1.bf16.msra.mxu0 %v4796
    %4893 = vmatprep.subr.bf16.mxu0 %v4801
    %4894 = vmatpush1.bf16.msra.mxu0 %v4800
    %4895 = vmatprep.subr.bf16.mxu0 %v4805
    %4896 = vmatpush1.bf16.msra.mxu0 %v4804
    %4897 = vmatprep.subr.bf16.mxu0 %v4809
    %4898 = vmatpush1.bf16.msra.mxu0 %v4808
    %4899 = vmatprep.subr.bf16.mxu0 0
    %4900 = vmatpush1.bf16.msra.mxu0 0
    %4901 = vmatprep.subr.bf16.mxu0 0
    %4902 = vmatpush1.bf16.msra.mxu0 0
    %4903 = vmatprep.subr.bf16.mxu0 0
    %4904 = vmatpush1.bf16.msra.mxu0 0
    %4905 = vmatprep.subr.bf16.mxu0 0
    %4906 = vmatpush1.bf16.msra.mxu0 0
    %4907 = vmatprep.subr.bf16.mxu0 0
    %4908 = vmatpush1.bf16.msra.mxu0 0
    %4909 = vmatprep.subr.bf16.mxu0 0
    %4910 = vmatpush1.bf16.msra.mxu0 0
    %4911 = vmatprep.subr.bf16.mxu0 0
    %4912 = vmatpush1.bf16.msra.mxu0 0
    %4913 = vmatprep.subr.bf16.mxu0 0
    %4914 = vmatpush1.bf16.msra.mxu0 0
    %4915 = vmatprep.mubr.bf16.mxu0 0
    %4916 = vmatmul.mubr.bf16.gmra.mrb[0].mxu0 %v4608
    %v4917 = vpop.f32.mrb[0].mxu0
    %v4918 = vadd.f32 0.0, %v4917
    %v4919 = vpop.f32.mrb[0].mxu0
    %v4920 = vadd.f32 0.0, %v4919
    %v4921 = vpop.f32.mrb[0].mxu0
    %v4922 = vpop.f32.mrb[0].mxu0
    %4923 = vdwg.mxu0
    %v4925 = vshrl.u32 %v4617, 16
    %v4927 = vrot.slane %v4925, 3
    %v4961 = vunpack.c.l.b16 %v4618
    %v4962 = vunpack.c.h.b16 %v4618
    %v4963 = vunpack.c.l.b16 %v4619
    %v4964 = vunpack.c.h.b16 %v4619
    %v4965 = vunpack.c.l.b16 %v4620
    %v4966 = vunpack.c.h.b16 %v4620
    %v4967 = vunpack.c.l.b16 %v4621
    %v4968 = vunpack.c.h.b16 %v4621
    %v4969 = vunpack.c.l.b16 %v4622
    %v4970 = vunpack.c.h.b16 %v4622
    %v4971 = vunpack.c.l.b16 %v4623
    %v4972 = vunpack.c.h.b16 %v4623
    %v4973 = vunpack.c.l.b16 %v4624
    %v4974 = vunpack.c.h.b16 %v4624
    %v4975 = vunpack.c.l.b16 %v4625
    %v4976 = vunpack.c.h.b16 %v4625
    %v4977 = vunpack.c.l.b16 %v4626
    %v4978 = vunpack.c.h.b16 %v4626
    %v4979 = vunpack.c.l.b16 %v4627
    %v4980 = vunpack.c.h.b16 %v4627
    %v4981 = vunpack.c.l.b16 %v4628
    %v4982 = vunpack.c.h.b16 %v4628
    %v4983 = vunpack.c.l.b16 %v4629
    %v4984 = vunpack.c.h.b16 %v4629
    %v4985 = vunpack.c.l.b16 %v4630
    %v4986 = vunpack.c.h.b16 %v4630
    %v4987 = vunpack.c.l.b16 %v4631
    %v4988 = vunpack.c.h.b16 %v4631
    %v4989 = vunpack.c.l.b16 %v4632
    %v4990 = vunpack.c.h.b16 %v4632
    %v4991 = vunpack.c.l.b16 %v4633
    %v4992 = vunpack.c.h.b16 %v4633
    %v4993 = vunpack.c.l.b16 %v4634
    %v4994 = vunpack.c.h.b16 %v4634
    %v4995 = vunpack.c.l.b16 %v4635
    %v4996 = vunpack.c.h.b16 %v4635
    %v4997 = vunpack.c.l.b16 %v4636
    %v4998 = vunpack.c.h.b16 %v4636
    %v4999 = vunpack.c.l.b16 %v4637
    %v5000 = vunpack.c.h.b16 %v4637
    %v5001 = vunpack.c.l.b16 %v4638
    %v5002 = vunpack.c.h.b16 %v4638
    %v5003 = vunpack.c.l.b16 %v4639
    %v5004 = vunpack.c.h.b16 %v4639
    %v5005 = vunpack.c.l.b16 %v4640
    %v5006 = vunpack.c.h.b16 %v4640
    %v5007 = vunpack.c.l.b16 %v4641
    %v5008 = vunpack.c.h.b16 %v4641
    %v5009 = vunpack.c.l.b16 %v4642
    %v5010 = vunpack.c.h.b16 %v4642
    %v5011 = vunpack.c.l.b16 %v4643
    %v5012 = vunpack.c.h.b16 %v4643
    %v5013 = vunpack.c.l.b16 %v4644
    %v5014 = vunpack.c.h.b16 %v4644
    %v5015 = vunpack.c.l.b16 %v4645
    %v5016 = vunpack.c.h.b16 %v4645
    %v5017 = vunpack.c.l.b16 %v4646
    %v5018 = vunpack.c.h.b16 %v4646
    %v5019 = vunpack.c.l.b16 %v4647
    %v5020 = vunpack.c.h.b16 %v4647
    %v5021 = vunpack.c.l.b16 %v4648
    %v5022 = vunpack.c.h.b16 %v4648
    %v5023 = vunpack.c.l.b16 %v4649
    %v5024 = vunpack.c.h.b16 %v4649
    %v5025 = vpack.c.b16 %v4965, %v4961
    %v5026 = vpack.c.b16 %v4966, %v4962
    %v5027 = vpack.c.b16 %v4967, %v4963
    %v5028 = vpack.c.b16 %v4968, %v4964
    %v5029 = vpack.c.b16 %v4973, %v4969
    %v5030 = vpack.c.b16 %v4974, %v4970
    %v5031 = vpack.c.b16 %v4975, %v4971
    %v5032 = vpack.c.b16 %v4976, %v4972
    %v5033 = vpack.c.b16 %v4981, %v4977
    %v5034 = vpack.c.b16 %v4982, %v4978
    %v5035 = vpack.c.b16 %v4983, %v4979
    %v5036 = vpack.c.b16 %v4984, %v4980
    %v5037 = vpack.c.b16 %v4989, %v4985
    %v5038 = vpack.c.b16 %v4990, %v4986
    %v5039 = vpack.c.b16 %v4991, %v4987
    %v5040 = vpack.c.b16 %v4992, %v4988
    %v5041 = vpack.c.b16 %v4997, %v4993
    %v5042 = vpack.c.b16 %v4998, %v4994
    %v5043 = vpack.c.b16 %v4999, %v4995
    %v5044 = vpack.c.b16 %v5000, %v4996
    %v5045 = vpack.c.b16 %v5005, %v5001
    %v5046 = vpack.c.b16 %v5006, %v5002
    %v5047 = vpack.c.b16 %v5007, %v5003
    %v5048 = vpack.c.b16 %v5008, %v5004
    %v5049 = vpack.c.b16 %v5013, %v5009
    %v5050 = vpack.c.b16 %v5014, %v5010
    %v5051 = vpack.c.b16 %v5015, %v5011
    %v5052 = vpack.c.b16 %v5016, %v5012
    %v5053 = vpack.c.b16 %v5021, %v5017
    %v5054 = vpack.c.b16 %v5022, %v5018
    %v5055 = vpack.c.b16 %v5023, %v5019
    %v5056 = vpack.c.b16 %v5024, %v5020
    %5089 = vmatprep.subr.bf16.mxu0 %v5026
    %5090 = vmatpush1.bf16.msra.mxu0 %v5025
    %5091 = vmatprep.subr.bf16.mxu0 %v5030
    %5092 = vmatpush1.bf16.msra.mxu0 %v5029
    %5093 = vmatprep.subr.bf16.mxu0 %v5034
    %5094 = vmatpush1.bf16.msra.mxu0 %v5033
    %5095 = vmatprep.subr.bf16.mxu0 %v5038
    %5096 = vmatpush1.bf16.msra.mxu0 %v5037
    %5097 = vmatprep.subr.bf16.mxu0 %v5042
    %5098 = vmatpush1.bf16.msra.mxu0 %v5041
    %5099 = vmatprep.subr.bf16.mxu0 %v5046
    %5100 = vmatpush1.bf16.msra.mxu0 %v5045
    %5101 = vmatprep.subr.bf16.mxu0 %v5050
    %5102 = vmatpush1.bf16.msra.mxu0 %v5049
    %5103 = vmatprep.subr.bf16.mxu0 %v5054
    %5104 = vmatpush1.bf16.msra.mxu0 %v5053
    %5105 = vmatprep.subr.bf16.mxu0 0
    %5106 = vmatpush1.bf16.msra.mxu0 0
    %5107 = vmatprep.subr.bf16.mxu0 0
    %5108 = vmatpush1.bf16.msra.mxu0 0
    %5109 = vmatprep.subr.bf16.mxu0 0
    %5110 = vmatpush1.bf16.msra.mxu0 0
    %5111 = vmatprep.subr.bf16.mxu0 0
    %5112 = vmatpush1.bf16.msra.mxu0 0
    %5113 = vmatprep.subr.bf16.mxu0 0
    %5114 = vmatpush1.bf16.msra.mxu0 0
    %5115 = vmatprep.subr.bf16.mxu0 0
    %5116 = vmatpush1.bf16.msra.mxu0 0
    %5117 = vmatprep.subr.bf16.mxu0 0
    %5118 = vmatpush1.bf16.msra.mxu0 0
    %5119 = vmatprep.subr.bf16.mxu0 0
    %5120 = vmatpush1.bf16.msra.mxu0 0
    %5121 = vmatprep.mubr.bf16.mxu0 0
    %5122 = vmatmul.mubr.bf16.gmra.mrb[0].mxu0 %v4927
    %v5123 = vpop.f32.mrb[0].mxu0
    %v5124 = vadd.f32 %v4877, %v5123
    %v5125 = vpop.f32.mrb[0].mxu0
    %v5126 = vadd.f32 %v4879, %v5125
    %v5127 = vpop.f32.mrb[0].mxu0
    %v5128 = vpop.f32.mrb[0].mxu0
    %5129 = vdwg.mxu0
    %5130 = vmatprep.subr.bf16.mxu0 %v5028
    %5131 = vmatpush1.bf16.msra.mxu0 %v5027
    %5132 = vmatprep.subr.bf16.mxu0 %v5032
    %5133 = vmatpush1.bf16.msra.mxu0 %v5031
    %5134 = vmatprep.subr.bf16.mxu0 %v5036
    %5135 = vmatpush1.bf16.msra.mxu0 %v5035
    %5136 = vmatprep.subr.bf16.mxu0 %v5040
    %5137 = vmatpush1.bf16.msra.mxu0 %v5039
    %5138 = vmatprep.subr.bf16.mxu0 %v5044
    %5139 = vmatpush1.bf16.msra.mxu0 %v5043
    %5140 = vmatprep.subr.bf16.mxu0 %v5048
    %5141 = vmatpush1.bf16.msra.mxu0 %v5047
    %5142 = vmatprep.subr.bf16.mxu0 %v5052
    %5143 = vmatpush1.bf16.msra.mxu0 %v5051
    %5144 = vmatprep.subr.bf16.mxu0 %v5056
    %5145 = vmatpush1.bf16.msra.mxu0 %v5055
    %5146 = vmatprep.subr.bf16.mxu0 0
    %5147 = vmatpush1.bf16.msra.mxu0 0
    %5148 = vmatprep.subr.bf16.mxu0 0
    %5149 = vmatpush1.bf16.msra.mxu0 0
    %5150 = vmatprep.subr.bf16.mxu0 0
    %5151 = vmatpush1.bf16.msra.mxu0 0
    %5152 = vmatprep.subr.bf16.mxu0 0
    %5153 = vmatpush1.bf16.msra.mxu0 0
    %5154 = vmatprep.subr.bf16.mxu0 0
    %5155 = vmatpush1.bf16.msra.mxu0 0
    %5156 = vmatprep.subr.bf16.mxu0 0
    %5157 = vmatpush1.bf16.msra.mxu0 0
    %5158 = vmatprep.subr.bf16.mxu0 0
    %5159 = vmatpush1.bf16.msra.mxu0 0
    %5160 = vmatprep.subr.bf16.mxu0 0
    %5161 = vmatpush1.bf16.msra.mxu0 0
    %5162 = vmatprep.mubr.bf16.mxu0 0
    %5163 = vmatmul.mubr.bf16.gmra.mrb[0].mxu0 %v4927
    %v5164 = vpop.f32.mrb[0].mxu0
    %v5165 = vadd.f32 %v4918, %v5164
    %v5166 = vpop.f32.mrb[0].mxu0
    %v5167 = vadd.f32 %v4920, %v5166
    %v5168 = vpop.f32.mrb[0].mxu0
    %v5169 = vpop.f32.mrb[0].mxu0
    %5170 = vdwg.mxu0
    %v5171 = vld [vmem:[%s5] sm:$0xf]
    %v5173 = vlaneseq
    %v5174 = vshrl.u32 %v5173, 7
    %v5175 = vsub.s32 0, %v5174
    %v5176 = vrot.slane %v5171, %v5175
    %v5177 = vlaneseq
    %v5178 = vshrl.u32 %v5177, 7
    %v5179 = vsub.s32 1, %v5178
    %v5180 = vrot.slane %v5171, %v5179
    %v5181 = vlaneseq
    %v5182 = vshrl.u32 %v5181, 7
    %v5183 = vsub.s32 2, %v5182
    %v5184 = vrot.slane %v5171, %v5183
    %v5185 = vlaneseq
    %v5186 = vshrl.u32 %v5185, 7
    %v5187 = vsub.s32 3, %v5186
    %v5188 = vrot.slane %v5171, %v5187
    %v5193 = vadd.f32 %v5124, %v5176
    %v5194 = vadd.f32 %v5126, %v5180
    %v5195 = vadd.f32 %v5165, %v5184
    %v5196 = vadd.f32 %v5167, %v5188
    %v5197 = vxor.u32 %v5193, 2147483648
    %v5198 = vmul.f32 %v5197, 1.442695
    %v5199 = vpow.pop %v5198
    %v5200 = vadd.f32 %v5199, 1.0
    %v5201 = vrcp.pop %v5200
    %v5202 = vmul.f32 1.0, %v5201
    %v5203 = vxor.u32 %v5194, 2147483648
    %v5204 = vmul.f32 %v5203, 1.442695
    %v5205 = vpow.pop %v5204
    %v5206 = vadd.f32 %v5205, 1.0
    %v5207 = vrcp.pop %v5206
    %v5208 = vmul.f32 1.0, %v5207
    %v5209 = vxor.u32 %v5195, 2147483648
    %v5210 = vmul.f32 %v5209, 1.442695
    %v5211 = vpow.pop %v5210
    %v5212 = vadd.f32 %v5211, 1.0
    %v5213 = vrcp.pop %v5212
    %v5214 = vmul.f32 1.0, %v5213
    %v5215 = vtanh.pop %v5196
    %v5216 = vmul.f32 %v5202, %v5215
    %v5217 = vmul.f32 %v5214, %v4600
    %v5218 = vadd.f32 %v5216, %v5217
    %v5219 = vtanh.pop %v5218
    %v5220 = vmul.f32 %v5208, %v5219
    %5221 = vst [vmem:[#allocation9 + $0x7] sm:$0x1] %v5220
    %5222 = vst [vmem:[#allocation10 + $0x7] sm:$0x1] %v5218
    // Predicated region
    $region26: #{_tree_lstm_call.1} parent=1 // pred_check
      _
    $region27: #{_tree_lstm_call.1} parent=1 // pred_check_branch
      %5224 = sbr.rel (0) target = $region29
    $region28: #{_tree_lstm_call.1} parent=1 // pred_region
      %s5226 = ssub.s32 128, 128
      %5227 = vsyncadd [#allocation8], %s5226
      %s5229 = sshll.u32 [#allocation9], 4
      %s5230 = int_to_ptr.vmem [resolvable:$true] %s5229
      %5232 = dma.vmem_to_hbm [thread:$0]  %s5230, 128, %s8, [#allocation8]
    $region29: #{_tree_lstm_call.1} parent=1 // pred_fallthru
      _
    // Predicated region
    $region30: #{_tree_lstm_call.1} parent=1 // pred_check
      _
    $region31: #{_tree_lstm_call.1} parent=1 // pred_check_branch
      %5234 = sbr.rel (0) target = $region33
    $region32: #{_tree_lstm_call.1} parent=1 // pred_region
      %s5236 = ssub.s32 128, 128
      %5237 = vsyncadd [#allocation11], %s5236
      %s5239 = sshll.u32 [#allocation10], 4
      %s5240 = int_to_ptr.vmem [resolvable:$true] %s5239
      %5242 = dma.vmem_to_hbm [thread:$0]  %s5240, 128, %s9, [#allocation11]
    $region33: #{_tree_lstm_call.1} parent=1 // pred_fallthru
      _
    // Predicated region
    $region34: #{_tree_lstm_call.1} parent=1 // pred_check
      _
    $region35: #{_tree_lstm_call.1} parent=1 // pred_check_branch
      %5244 = sbr.rel (0) target = $region37
    $region36: #{_tree_lstm_call.1} parent=1 // pred_region
      %5245 = dma.done [#allocation8], 128
    $region37: #{_tree_lstm_call.1} parent=1 // pred_fallthru
      _
    // Predicated region
    $region38: #{_tree_lstm_call.1} parent=1 // pred_check
      _
    $region39: #{_tree_lstm_call.1} parent=1 // pred_check_branch
      %5247 = sbr.rel (0) target = $region41
    $region40: #{_tree_lstm_call.1} parent=1 // pred_region
      %5248 = dma.done [#allocation11], 128
    $region41: #{_tree_lstm_call.1} parent=1 // pred_fallthru
      _
    %5249 = vsyncpa [#allocation7], 1
    %5250 = vsyncpa [#allocation8], 1
    %5251 = vsyncpa [#allocation11], 1

</llo_original>
